<compile_context>
chip_gen: v7x
topology: tpu7x:2x2x1
jax: 0.10.0
libtpu: 0.0.40
codegen_flags: <defaults>
</compile_context>

<pallas_src>
import functools
import math

import jax
import jax.numpy as jnp
from jax.experimental import pallas as pl
from jax.experimental.pallas import tpu as pltpu

BN_EPS = 1e-5
_LANE = 128
_VMEM_LIMIT = 32 * 1024 * 1024  # scoped-VMEM budget; safe on v5e/v6e and v7x's 64 MiB


def _round_up(x, m):
    return (x + m - 1) // m * m


def _pick_tiling(batch, h_out, w_out, k_lanes, c_pad, pool):
    """Pick (bb, tile_h): fold bb batch elements and tile_h output rows into one grid
    step so the M tile lands in the measured 512-2048-row HBM-roofline sweet spot,
    while keeping >= 2 grid steps (pipelining / both v7x TensorCores busy) and staying
    well inside the scoped-VMEM budget."""
    step = 2 if pool else 1
    divs_h = [t for t in range(step, h_out + 1, step) if h_out % t == 0] or [h_out]
    divs_b = [d for d in range(1, batch + 1) if batch % d == 0]
    # rough per-output-row VMEM bytes: bf16 im2col row + f32 acc row + f32 out rows
    per_row = k_lanes * 2 + c_pad * 4 * 3
    row_cap = max(step * w_out, min(4096, (_VMEM_LIMIT // 2) // per_row))
    best, best_key = (1, divs_h[0]), None
    for bb in divs_b:
        for th in divs_h:
            rows = bb * th * w_out
            steps = (batch // bb) * (h_out // th)
            key = (
                rows <= row_cap,          # fit comfortably in VMEM
                steps >= 2,               # keep the software pipeline / megacore alive
                min(rows, 4096 - rows),   # prefer rows near the ~2048-row sweet spot
                steps % 2 == 0,           # balanced split across 2 TCs on v7x
            )
            if best_key is None or key > best_key:
                best_key, best = key, (bb, th)
    return best


# ---------------------------------------------------------------------------
# Shared conv helper: one MXU matmul per tile with the 3x3 taps folded into K
# ---------------------------------------------------------------------------
def _conv_tile(x_ref, w_ref, lhs_ref, hi, bb, tile_h, w_out, c_in, k_h, k_w):
    """Compute the conv for one (bb, tile_h, w_out) output tile.

    Assembles an im2col LHS of shape (bb*tile_h*w_out, k_h*k_w*c_in) in VMEM scratch
    from shifted windows of the padded NHWC image (static lane-offset stores), then
    contracts it against the resident (k_h*k_w*c_in, c_pad) weights in a single bf16
    matmul with f32 MXU accumulation.  Returns (rows, c_pad) f32.
    """
    row0 = pl.multiple_of(hi * tile_h, tile_h)
    for b in range(bb):
        for kh in range(k_h):
            for kw in range(k_w):
                off = (kh * k_w + kw) * c_in
                lhs_ref[b, :, :, pl.ds(off, c_in)] = x_ref[
                    b, pl.ds(row0 + kh, tile_h), pl.ds(kw, w_out), :
                ]
    rows = bb * tile_h * w_out
    lhs = lhs_ref[...].reshape(rows, k_h * k_w * c_in)
    return jnp.dot(lhs, w_ref[...], preferred_element_type=jnp.float32)


# ---------------------------------------------------------------------------
# Kernel 1: conv -> per-tile BN partial sums (stats only, no intermediate in HBM)
# ---------------------------------------------------------------------------
def _make_stats_kernel(bb, tile_h, w_out, c_in, c_pad, k_h, k_w):
    def kernel(x_ref, w_ref, psum_ref, psq_ref, lhs_ref):
        hi = pl.program_id(1)
        acc = _conv_tile(x_ref, w_ref, lhs_ref, hi, bb, tile_h, w_out, c_in, k_h, k_w)
        # NOTE: f32 sum / sum-of-squares partials; E[x^2]-E[x]^2 combine happens in the
        # tiny JAX reduction outside (acceptable here; use mean-centred partials if
        # exact PyTorch-BN parity at huge B*H*W is required).
        psum_ref[...] = jnp.sum(acc, axis=0, keepdims=True).reshape(1, 1, 1, c_pad)
        psq_ref[...] = jnp.sum(acc * acc, axis=0, keepdims=True).reshape(1, 1, 1, c_pad)

    return kernel


# ---------------------------------------------------------------------------
# Kernel 2: conv (recomputed) -> BN apply (scale/shift) -> ReLU -> fused 2x2 max-pool
# ---------------------------------------------------------------------------
def _make_apply_kernel(bb, tile_h, w_out, c_in, c_pad, k_h, k_w, pool):
    if pool:

        def kernel(x_ref, w_ref, scale_ref, shift_ref, o_ref, lhs_ref, hp_ref):
            hi = pl.program_id(1)
            acc = _conv_tile(x_ref, w_ref, lhs_ref, hi, bb, tile_h, w_out, c_in, k_h, k_w)
            a = jnp.maximum(acc * scale_ref[...] + shift_ref[...], 0.0)
            # H-direction pairs: split the major row axis (layout no-op) + VPU max.
            a = a.reshape(bb, tile_h // 2, 2, w_out, c_pad)
            hp_ref[...] = jnp.maximum(a[:, :, 0], a[:, :, 1])
            # W-direction pairs: sublane-strided reads of the half-size scratch.
            even = hp_ref[:, :, pl.ds(0, w_out // 2, 2), :]
            odd = hp_ref[:, :, pl.ds(1, w_out // 2, 2), :]
            o_ref[...] = jnp.maximum(even, odd)

    else:

        def kernel(x_ref, w_ref, scale_ref, shift_ref, o_ref, lhs_ref):
            hi = pl.program_id(1)
            acc = _conv_tile(x_ref, w_ref, lhs_ref, hi, bb, tile_h, w_out, c_in, k_h, k_w)
            a = jnp.maximum(acc * scale_ref[...] + shift_ref[...], 0.0)
            o_ref[...] = a.reshape(bb, tile_h, w_out, c_pad)

    return kernel


# ---------------------------------------------------------------------------
# ConvBlock forward
# ---------------------------------------------------------------------------
def conv_block_forward(params, x, *, pool=True, padding=1):
    """x: (B, Cin, H, W) float32 NCHW -> (B, Cout, H', W') float32 NCHW."""
    w = params["w"]
    gamma, beta = params["gamma"], params["beta"]
    # params["b"] (conv bias) is intentionally NOT used: training-mode BatchNorm shifts
    # the batch mean by exactly b, so the normalized output is bitwise-independent of it.

    batch, c_in, h_in, w_in = x.shape
    c_out, _, k_h, k_w = w.shape
    h_out = h_in + 2 * padding - (k_h - 1)
    w_out = w_in + 2 * padding - (k_w - 1)
    if pool:
        assert h_out % 2 == 0 and w_out % 2 == 0, "pooling path assumes even spatial dims"
        # TODO(synk): MaxPool2d floor-cropping for odd spatial dims is not implemented.

    c_pad = max(_LANE, _round_up(c_out, _LANE))
    k_lanes = k_h * k_w * c_in
    bb, tile_h = _pick_tiling(batch, h_out, w_out, k_lanes, c_pad, pool)
    n_b = batch // bb
    n_h = h_out // tile_h

    # ---- layout plumbing, once, at the module boundary: NCHW -> padded NHWC, bf16 ----
    x_nhwc = jnp.transpose(x, (0, 2, 3, 1))
    x_pad = jnp.pad(x_nhwc, ((0, 0), (padding, padding), (padding, padding), (0, 0)))
    x_pad = x_pad.astype(jnp.bfloat16)
    h_p = h_in + 2 * padding
    w_p = w_in + 2 * padding

    # Weights: (cout, cin, kh, kw) -> (kh*kw*cin, c_pad) bf16, K ordered (kh, kw, cin)
    # to match the im2col tap order; resident in VMEM across the whole grid.
    w_mat = jnp.transpose(w, (2, 3, 1, 0)).reshape(k_lanes, c_out)
    w_mat = jnp.pad(w_mat, ((0, 0), (0, c_pad - c_out))).astype(jnp.bfloat16)

    x_spec = pl.BlockSpec((bb, h_p, w_p, c_in), lambda bi, hi: (bi, 0, 0, 0))
    w_spec = pl.BlockSpec((k_lanes, c_pad), lambda bi, hi: (0, 0))
    stat_spec = pl.BlockSpec((1, 1, 1, c_pad), lambda bi, hi: (bi, hi, 0, 0))
    cparams = pltpu.CompilerParams(
        dimension_semantics=("parallel", "parallel"),
        vmem_limit_bytes=_VMEM_LIMIT,
    )

    # ---- pass 1: conv -> per-tile (sum, sum_sq); no conv intermediate written to HBM --
    psum, psq = pl.pallas_call(
        _make_stats_kernel(bb, tile_h, w_out, c_in, c_pad, k_h, k_w),
        out_shape=(
            jax.ShapeDtypeStruct((n_b, n_h, 1, c_pad), jnp.float32),
            jax.ShapeDtypeStruct((n_b, n_h, 1, c_pad), jnp.float32),
        ),
        grid=(n_b, n_h),
        in_specs=[x_spec, w_spec],
        out_specs=(stat_spec, stat_spec),
        scratch_shapes=[pltpu.VMEM((bb, tile_h, w_out, k_lanes), jnp.bfloat16)],
        compiler_params=cparams,
    )(x_pad, w_mat)

    # ---- tiny O(C) cross-tile reduction -> BN scale / shift (bias-free, see above) ----
    count = float(batch * h_out * w_out)
    total = jnp.sum(psum, axis=(0, 1, 2))                 # (c_pad,)
    total_sq = jnp.sum(psq, axis=(0, 1, 2))
    mean = total / count
    var = jnp.maximum(total_sq / count - mean * mean, 0.0)  # biased var (PyTorch BN norm)
    inv_std = jax.lax.rsqrt(var + BN_EPS)
    gamma_pad = jnp.pad(gamma, (0, c_pad - c_out))
    beta_pad = jnp.pad(beta, (0, c_pad - c_out))
    scale = (gamma_pad * inv_std).astype(jnp.float32).reshape(1, c_pad)
    shift = (beta_pad - mean * gamma_pad * inv_std).astype(jnp.float32).reshape(1, c_pad)

    h_fin = h_out // 2 if pool else h_out
    w_fin = w_out // 2 if pool else w_out
    tile_h_fin = tile_h // 2 if pool else tile_h

    scratch = [pltpu.VMEM((bb, tile_h, w_out, k_lanes), jnp.bfloat16)]
    if pool:
        scratch.append(pltpu.VMEM((bb, tile_h // 2, w_out, c_pad), jnp.float32))

    # ---- pass 2: conv recompute + BN apply + ReLU + 2x2 max-pool, lane-dense output ---
    out = pl.pallas_call(
        _make_apply_kernel(bb, tile_h, w_out, c_in, c_pad, k_h, k_w, pool),
        out_shape=jax.ShapeDtypeStruct((batch, h_fin, w_fin, c_pad), jnp.float32),
        grid=(n_b, n_h),
        in_specs=[
            x_spec,
            w_spec,
            pl.BlockSpec((1, c_pad), lambda bi, hi: (0, 0)),
            pl.BlockSpec((1, c_pad), lambda bi, hi: (0, 0)),
        ],
        out_specs=pl.BlockSpec(
            (bb, tile_h_fin, w_fin, c_pad), lambda bi, hi: (bi, hi, 0, 0)
        ),
        scratch_shapes=scratch,
        compiler_params=cparams,
    )(x_pad, w_mat, scale, shift)

    # ---- back to the PyTorch boundary layout: slice channel padding, NHWC -> NCHW -----
    # (When chaining ConvBlocks, keep NHWC between blocks and only do this at the ends.)
    return jnp.transpose(out[..., :c_out], (0, 3, 1, 2))


# ---------------------------------------------------------------------------
# Parameter init (matches ConvBlock's init_layer + PyTorch defaults)
# ---------------------------------------------------------------------------
def init_conv_block_params(key, indim, outdim):
    k_w, k_b = jax.random.split(key)
    n = 3 * 3 * outdim
    w = jax.random.normal(k_w, (outdim, indim, 3, 3), jnp.float32) * math.sqrt(2.0 / n)
    bound = 1.0 / math.sqrt(indim * 3 * 3)                 # Conv2d default bias init
    b = jax.random.uniform(k_b, (outdim,), jnp.float32, -bound, bound)
    gamma = jnp.ones((outdim,), jnp.float32)               # BN: weight=1
    beta = jnp.zeros((outdim,), jnp.float32)               # BN: bias=0
    return {"w": w, "b": b, "gamma": gamma, "beta": beta}


# ---------------------------------------------------------------------------
# Pure-JAX reference (bias included here; the kernel drops it since BN cancels it)
# ---------------------------------------------------------------------------
def conv_block_reference(params, x, pool=True, padding=1):
    w, b = params["w"], params["b"]
    gamma, beta = params["gamma"], params["beta"]
    y = jax.lax.conv_general_dilated(
        x, w, window_strides=(1, 1),
        padding=((padding, padding), (padding, padding)),
        dimension_numbers=("NCHW", "OIHW", "NCHW"),
        precision=jax.lax.Precision.HIGHEST)
    y = y + b.reshape(1, -1, 1, 1)
    mean = jnp.mean(y, axis=(0, 2, 3), keepdims=True)
    var = jnp.mean((y - mean) ** 2, axis=(0, 2, 3), keepdims=True)
    y = (y - mean) * jax.lax.rsqrt(var + BN_EPS)
    y = y * gamma.reshape(1, -1, 1, 1) + beta.reshape(1, -1, 1, 1)
    y = jnp.maximum(y, 0.0)
    if pool:
        bb, cc, hh, ww = y.shape
        y = y.reshape(bb, cc, hh // 2, 2, ww // 2, 2).max(axis=(3, 5))
    return y


if __name__ == "__main__":
    B, C_IN, H, W = 2, 4, 16, 16
    C_OUT = 32

    key = jax.random.PRNGKey(0)
    k_x, k_p = jax.random.split(key)
    x = jax.random.normal(k_x, (B, C_IN, H, W), jnp.float32)
    params = init_conv_block_params(k_p, C_IN, C_OUT)

    fwd = jax.jit(functools.partial(conv_block_forward, pool=True, padding=1))
    out = jax.block_until_ready(fwd(params, x))

    assert out.shape == (B, C_OUT, H // 2, W // 2), out.shape
    assert bool(jnp.all(jnp.isfinite(out)))

    ref = conv_block_reference(params, x, pool=True, padding=1)
    err = float(jnp.max(jnp.abs(out - ref)))
    assert err < 2e-1, f"max abs error vs reference too large: {err}"

    print("KERNEL_OK")
</pallas_src>

<mosaic_0001>
module attributes {stable_mosaic.version = 11 : i64} {
  func.func @kernel(%arg0: i32, %arg1: i32, %arg2: memref<1x18x18x4xbf16, #tpu.memory_space<vmem>>, %arg3: memref<36x128xbf16, #tpu.memory_space<vmem>>, %arg4: memref<1x1x1x128xf32, #tpu.memory_space<vmem>>, %arg5: memref<1x1x1x128xf32, #tpu.memory_space<vmem>>, %arg6: memref<1x16x16x36xbf16, #tpu.memory_space<vmem>>) attributes {dimension_semantics = [#tpu.dimension_semantics<parallel>, #tpu.dimension_semantics<parallel>], iteration_bounds = array<i64: 2, 1>, scalar_prefetch = 0 : i64, scratch_operands = 1 : i64, tpu.core_type = #tpu.core_type<tc>, window_params = [{transform_indices = @transform_0, window_bounds = array<i64: 1, 18, 18, 4>}, {pipeline_mode = #tpu.pipeline_mode<synchronous>, transform_indices = @transform_1, window_bounds = array<i64: 36, 128>}, {transform_indices = @transform_2, window_bounds = array<i64: 1, 1, 1, 128>}, {transform_indices = @transform_3, window_bounds = array<i64: 1, 1, 1, 128>}]} {
    %c16_i32 = arith.constant 16 : i32
    %0 = arith.muli %arg1, %c16_i32 : i32
    %1 = tpu.assume_multiple %0, 16 : i32
    %c0_i32 = arith.constant 0 : i32
    %2 = arith.addi %1, %c0_i32 : i32
    %c0 = arith.constant 0 : index
    %3 = arith.index_cast %2 : i32 to index
    %c0_0 = arith.constant 0 : index
    %c0_1 = arith.constant 0 : index
    %4 = vector.load %arg2[%c0, %3, %c0_0, %c0_1] : memref<1x18x18x4xbf16, #tpu.memory_space<vmem>>, vector<1x16x16x4xbf16>
    %5 = vector.shape_cast %4 : vector<1x16x16x4xbf16> to vector<16x16x4xbf16>
    %c0_2 = arith.constant 0 : index
    %c0_3 = arith.constant 0 : index
    %c0_4 = arith.constant 0 : index
    %c0_5 = arith.constant 0 : index
    %6 = vector.load %arg6[%c0_2, %c0_3, %c0_4, %c0_5] : memref<1x16x16x36xbf16, #tpu.memory_space<vmem>>, vector<1x16x16x4xbf16>
    %7 = vector.shape_cast %6 : vector<1x16x16x4xbf16> to vector<16x16x4xbf16>
    %8 = vector.shape_cast %5 : vector<16x16x4xbf16> to vector<1x16x16x4xbf16>
    tpu.vector_store %arg6[%c0_2, %c0_3, %c0_4, %c0_5], %8 {strides = array<i32>} : memref<1x16x16x36xbf16, #tpu.memory_space<vmem>>, vector<1x16x16x4xbf16>,
    %c0_i32_6 = arith.constant 0 : i32
    %9 = arith.addi %1, %c0_i32_6 : i32
    %c0_7 = arith.constant 0 : index
    %10 = arith.index_cast %9 : i32 to index
    %c1 = arith.constant 1 : index
    %c0_8 = arith.constant 0 : index
    %11 = vector.load %arg2[%c0_7, %10, %c1, %c0_8] : memref<1x18x18x4xbf16, #tpu.memory_space<vmem>>, vector<1x16x16x4xbf16>
    %12 = vector.shape_cast %11 : vector<1x16x16x4xbf16> to vector<16x16x4xbf16>
    %c0_9 = arith.constant 0 : index
    %c0_10 = arith.constant 0 : index
    %c0_11 = arith.constant 0 : index
    %c4 = arith.constant 4 : index
    %13 = vector.load %arg6[%c0_9, %c0_10, %c0_11, %c4] : memref<1x16x16x36xbf16, #tpu.memory_space<vmem>>, vector<1x16x16x4xbf16>
    %14 = vector.shape_cast %13 : vector<1x16x16x4xbf16> to vector<16x16x4xbf16>
    %15 = vector.shape_cast %12 : vector<16x16x4xbf16> to vector<1x16x16x4xbf16>
    tpu.vector_store %arg6[%c0_9, %c0_10, %c0_11, %c4], %15 {strides = array<i32>} : memref<1x16x16x36xbf16, #tpu.memory_space<vmem>>, vector<1x16x16x4xbf16>,
    %c0_i32_12 = arith.constant 0 : i32
    %16 = arith.addi %1, %c0_i32_12 : i32
    %c0_13 = arith.constant 0 : index
    %17 = arith.index_cast %16 : i32 to index
    %c2 = arith.constant 2 : index
    %c0_14 = arith.constant 0 : index
    %18 = vector.load %arg2[%c0_13, %17, %c2, %c0_14] : memref<1x18x18x4xbf16, #tpu.memory_space<vmem>>, vector<1x16x16x4xbf16>
    %19 = vector.shape_cast %18 : vector<1x16x16x4xbf16> to vector<16x16x4xbf16>
    %c0_15 = arith.constant 0 : index
    %c0_16 = arith.constant 0 : index
    %c0_17 = arith.constant 0 : index
    %c8 = arith.constant 8 : index
    %20 = vector.load %arg6[%c0_15, %c0_16, %c0_17, %c8] : memref<1x16x16x36xbf16, #tpu.memory_space<vmem>>, vector<1x16x16x4xbf16>
    %21 = vector.shape_cast %20 : vector<1x16x16x4xbf16> to vector<16x16x4xbf16>
    %22 = vector.shape_cast %19 : vector<16x16x4xbf16> to vector<1x16x16x4xbf16>
    tpu.vector_store %arg6[%c0_15, %c0_16, %c0_17, %c8], %22 {strides = array<i32>} : memref<1x16x16x36xbf16, #tpu.memory_space<vmem>>, vector<1x16x16x4xbf16>,
    %c1_i32 = arith.constant 1 : i32
    %23 = arith.addi %1, %c1_i32 : i32
    %c0_18 = arith.constant 0 : index
    %24 = arith.index_cast %23 : i32 to index
    %c0_19 = arith.constant 0 : index
    %c0_20 = arith.constant 0 : index
    %25 = vector.load %arg2[%c0_18, %24, %c0_19, %c0_20] : memref<1x18x18x4xbf16, #tpu.memory_space<vmem>>, vector<1x16x16x4xbf16>
    %26 = vector.shape_cast %25 : vector<1x16x16x4xbf16> to vector<16x16x4xbf16>
    %c0_21 = arith.constant 0 : index
    %c0_22 = arith.constant 0 : index
    %c0_23 = arith.constant 0 : index
    %c12 = arith.constant 12 : index
    %27 = vector.load %arg6[%c0_21, %c0_22, %c0_23, %c12] : memref<1x16x16x36xbf16, #tpu.memory_space<vmem>>, vector<1x16x16x4xbf16>
    %28 = vector.shape_cast %27 : vector<1x16x16x4xbf16> to vector<16x16x4xbf16>
    %29 = vector.shape_cast %26 : vector<16x16x4xbf16> to vector<1x16x16x4xbf16>
    tpu.vector_store %arg6[%c0_21, %c0_22, %c0_23, %c12], %29 {strides = array<i32>} : memref<1x16x16x36xbf16, #tpu.memory_space<vmem>>, vector<1x16x16x4xbf16>,
    %c1_i32_24 = arith.constant 1 : i32
    %30 = arith.addi %1, %c1_i32_24 : i32
    %c0_25 = arith.constant 0 : index
    %31 = arith.index_cast %30 : i32 to index
    %c1_26 = arith.constant 1 : index
    %c0_27 = arith.constant 0 : index
    %32 = vector.load %arg2[%c0_25, %31, %c1_26, %c0_27] : memref<1x18x18x4xbf16, #tpu.memory_space<vmem>>, vector<1x16x16x4xbf16>
    %33 = vector.shape_cast %32 : vector<1x16x16x4xbf16> to vector<16x16x4xbf16>
    %c0_28 = arith.constant 0 : index
    %c0_29 = arith.constant 0 : index
    %c0_30 = arith.constant 0 : index
    %c16 = arith.constant 16 : index
    %34 = vector.load %arg6[%c0_28, %c0_29, %c0_30, %c16] : memref<1x16x16x36xbf16, #tpu.memory_space<vmem>>, vector<1x16x16x4xbf16>
    %35 = vector.shape_cast %34 : vector<1x16x16x4xbf16> to vector<16x16x4xbf16>
    %36 = vector.shape_cast %33 : vector<16x16x4xbf16> to vector<1x16x16x4xbf16>
    tpu.vector_store %arg6[%c0_28, %c0_29, %c0_30, %c16], %36 {strides = array<i32>} : memref<1x16x16x36xbf16, #tpu.memory_space<vmem>>, vector<1x16x16x4xbf16>,
    %c1_i32_31 = arith.constant 1 : i32
    %37 = arith.addi %1, %c1_i32_31 : i32
    %c0_32 = arith.constant 0 : index
    %38 = arith.index_cast %37 : i32 to index
    %c2_33 = arith.constant 2 : index
    %c0_34 = arith.constant 0 : index
    %39 = vector.load %arg2[%c0_32, %38, %c2_33, %c0_34] : memref<1x18x18x4xbf16, #tpu.memory_space<vmem>>, vector<1x16x16x4xbf16>
    %40 = vector.shape_cast %39 : vector<1x16x16x4xbf16> to vector<16x16x4xbf16>
    %c0_35 = arith.constant 0 : index
    %c0_36 = arith.constant 0 : index
    %c0_37 = arith.constant 0 : index
    %c20 = arith.constant 20 : index
    %41 = vector.load %arg6[%c0_35, %c0_36, %c0_37, %c20] : memref<1x16x16x36xbf16, #tpu.memory_space<vmem>>, vector<1x16x16x4xbf16>
    %42 = vector.shape_cast %41 : vector<1x16x16x4xbf16> to vector<16x16x4xbf16>
    %43 = vector.shape_cast %40 : vector<16x16x4xbf16> to vector<1x16x16x4xbf16>
    tpu.vector_store %arg6[%c0_35, %c0_36, %c0_37, %c20], %43 {strides = array<i32>} : memref<1x16x16x36xbf16, #tpu.memory_space<vmem>>, vector<1x16x16x4xbf16>,
    %c2_i32 = arith.constant 2 : i32
    %44 = arith.addi %1, %c2_i32 : i32
    %c0_38 = arith.constant 0 : index
    %45 = arith.index_cast %44 : i32 to index
    %c0_39 = arith.constant 0 : index
    %c0_40 = arith.constant 0 : index
    %46 = vector.load %arg2[%c0_38, %45, %c0_39, %c0_40] : memref<1x18x18x4xbf16, #tpu.memory_space<vmem>>, vector<1x16x16x4xbf16>
    %47 = vector.shape_cast %46 : vector<1x16x16x4xbf16> to vector<16x16x4xbf16>
    %c0_41 = arith.constant 0 : index
    %c0_42 = arith.constant 0 : index
    %c0_43 = arith.constant 0 : index
    %c24 = arith.constant 24 : index
    %48 = vector.load %arg6[%c0_41, %c0_42, %c0_43, %c24] : memref<1x16x16x36xbf16, #tpu.memory_space<vmem>>, vector<1x16x16x4xbf16>
    %49 = vector.shape_cast %48 : vector<1x16x16x4xbf16> to vector<16x16x4xbf16>
    %50 = vector.shape_cast %47 : vector<16x16x4xbf16> to vector<1x16x16x4xbf16>
    tpu.vector_store %arg6[%c0_41, %c0_42, %c0_43, %c24], %50 {strides = array<i32>} : memref<1x16x16x36xbf16, #tpu.memory_space<vmem>>, vector<1x16x16x4xbf16>,
    %c2_i32_44 = arith.constant 2 : i32
    %51 = arith.addi %1, %c2_i32_44 : i32
    %c0_45 = arith.constant 0 : index
    %52 = arith.index_cast %51 : i32 to index
    %c1_46 = arith.constant 1 : index
    %c0_47 = arith.constant 0 : index
    %53 = vector.load %arg2[%c0_45, %52, %c1_46, %c0_47] : memref<1x18x18x4xbf16, #tpu.memory_space<vmem>>, vector<1x16x16x4xbf16>
    %54 = vector.shape_cast %53 : vector<1x16x16x4xbf16> to vector<16x16x4xbf16>
    %c0_48 = arith.constant 0 : index
    %c0_49 = arith.constant 0 : index
    %c0_50 = arith.constant 0 : index
    %c28 = arith.constant 28 : index
    %55 = vector.load %arg6[%c0_48, %c0_49, %c0_50, %c28] : memref<1x16x16x36xbf16, #tpu.memory_space<vmem>>, vector<1x16x16x4xbf16>
    %56 = vector.shape_cast %55 : vector<1x16x16x4xbf16> to vector<16x16x4xbf16>
    %57 = vector.shape_cast %54 : vector<16x16x4xbf16> to vector<1x16x16x4xbf16>
    tpu.vector_store %arg6[%c0_48, %c0_49, %c0_50, %c28], %57 {strides = array<i32>} : memref<1x16x16x36xbf16, #tpu.memory_space<vmem>>, vector<1x16x16x4xbf16>,
    %c2_i32_51 = arith.constant 2 : i32
    %58 = arith.addi %1, %c2_i32_51 : i32
    %c0_52 = arith.constant 0 : index
    %59 = arith.index_cast %58 : i32 to index
    %c2_53 = arith.constant 2 : index
    %c0_54 = arith.constant 0 : index
    %60 = vector.load %arg2[%c0_52, %59, %c2_53, %c0_54] : memref<1x18x18x4xbf16, #tpu.memory_space<vmem>>, vector<1x16x16x4xbf16>
    %61 = vector.shape_cast %60 : vector<1x16x16x4xbf16> to vector<16x16x4xbf16>
    %c0_55 = arith.constant 0 : index
    %c0_56 = arith.constant 0 : index
    %c0_57 = arith.constant 0 : index
    %c32 = arith.constant 32 : index
    %62 = vector.load %arg6[%c0_55, %c0_56, %c0_57, %c32] : memref<1x16x16x36xbf16, #tpu.memory_space<vmem>>, vector<1x16x16x4xbf16>
    %63 = vector.shape_cast %62 : vector<1x16x16x4xbf16> to vector<16x16x4xbf16>
    %64 = vector.shape_cast %61 : vector<16x16x4xbf16> to vector<1x16x16x4xbf16>
    tpu.vector_store %arg6[%c0_55, %c0_56, %c0_57, %c32], %64 {strides = array<i32>} : memref<1x16x16x36xbf16, #tpu.memory_space<vmem>>, vector<1x16x16x4xbf16>,
    %c0_58 = arith.constant 0 : index
    %c0_59 = arith.constant 0 : index
    %c0_60 = arith.constant 0 : index
    %c0_61 = arith.constant 0 : index
    %65 = vector.load %arg6[%c0_58, %c0_59, %c0_60, %c0_61] : memref<1x16x16x36xbf16, #tpu.memory_space<vmem>>, vector<1x16x16x36xbf16>
    %66 = vector.shape_cast %65 : vector<1x16x16x36xbf16> to vector<256x36xbf16>
    %c0_62 = arith.constant 0 : index
    %c0_63 = arith.constant 0 : index
    %67 = vector.load %arg3[%c0_62, %c0_63] : memref<36x128xbf16, #tpu.memory_space<vmem>>, vector<36x128xbf16>
    %cst = arith.constant dense<0.000000e+00> : vector<256x128xf32>
    %68 = tpu.matmul %66, %67, %cst {dimension_numbers = #tpu.dot_dimension_numbers<[1], [0], [0], [1], [0, 0, 1, 1], [], []>} : vector<256x36xbf16>, vector<36x128xbf16>, vector<256x128xf32> -> vector<256x128xf32>
    %cst_64 = arith.constant dense<0.000000e+00> : vector<128xf32>
    %69 = vector.multi_reduction <add>, %68, %cst_64 [0] : vector<256x128xf32> to vector<128xf32>
    %70 = vector.shape_cast %69 : vector<128xf32> to vector<1x128xf32>
    %71 = vector.shape_cast %70 : vector<1x128xf32> to vector<1x1x1x128xf32>
    %c0_65 = arith.constant 0 : index
    %c0_66 = arith.constant 0 : index
    %c0_67 = arith.constant 0 : index
    %c0_68 = arith.constant 0 : index
    %72 = vector.load %arg4[%c0_65, %c0_66, %c0_67, %c0_68] : memref<1x1x1x128xf32, #tpu.memory_space<vmem>>, vector<1x1x1x128xf32>
    tpu.vector_store %arg4[%c0_65, %c0_66, %c0_67, %c0_68], %71 {strides = array<i32>} : memref<1x1x1x128xf32, #tpu.memory_space<vmem>>, vector<1x1x1x128xf32>,
    %73 = arith.mulf %68, %68 : vector<256x128xf32>
    %cst_69 = arith.constant dense<0.000000e+00> : vector<128xf32>
    %74 = vector.multi_reduction <add>, %73, %cst_69 [0] : vector<256x128xf32> to vector<128xf32>
    %75 = vector.shape_cast %74 : vector<128xf32> to vector<1x128xf32>
    %76 = vector.shape_cast %75 : vector<1x128xf32> to vector<1x1x1x128xf32>
    %c0_70 = arith.constant 0 : index
    %c0_71 = arith.constant 0 : index
    %c0_72 = arith.constant 0 : index
    %c0_73 = arith.constant 0 : index
    %77 = vector.load %arg5[%c0_70, %c0_71, %c0_72, %c0_73] : memref<1x1x1x128xf32, #tpu.memory_space<vmem>>, vector<1x1x1x128xf32>
    tpu.vector_store %arg5[%c0_70, %c0_71, %c0_72, %c0_73], %76 {strides = array<i32>} : memref<1x1x1x128xf32, #tpu.memory_space<vmem>>, vector<1x1x1x128xf32>,
    return
  }
  func.func @transform_0(%arg0: i32, %arg1: i32) -> (i32, i32, i32, i32) {
    %c0_i32 = arith.constant 0 : i32
    %c0_i32_0 = arith.constant 0 : i32
    %c0_i32_1 = arith.constant 0 : i32
    %c0_i32_2 = arith.constant 0 : i32
    return %arg0, %c0_i32, %c0_i32_0, %c0_i32_1 : i32, i32, i32, i32
  }
  func.func @transform_1(%arg0: i32, %arg1: i32) -> (i32, i32) {
    %c0_i32 = arith.constant 0 : i32
    %c0_i32_0 = arith.constant 0 : i32
    %c0_i32_1 = arith.constant 0 : i32
    return %c0_i32, %c0_i32_0 : i32, i32
  }
  func.func @transform_2(%arg0: i32, %arg1: i32) -> (i32, i32, i32, i32) {
    %c0_i32 = arith.constant 0 : i32
    %c0_i32_0 = arith.constant 0 : i32
    %c0_i32_1 = arith.constant 0 : i32
    return %arg0, %arg1, %c0_i32, %c0_i32_0 : i32, i32, i32, i32
  }
  func.func @transform_3(%arg0: i32, %arg1: i32) -> (i32, i32, i32, i32) {
    %c0_i32 = arith.constant 0 : i32
    %c0_i32_0 = arith.constant 0 : i32
    %c0_i32_1 = arith.constant 0 : i32
    return %arg0, %arg1, %c0_i32, %c0_i32_0 : i32, i32, i32, i32
  }
}

module attributes {stable_mosaic.version = 11 : i64} {
  func.func @kernel(%arg0: i32, %arg1: i32, %arg2: memref<1x18x18x4xbf16, #tpu.memory_space<vmem>>, %arg3: memref<36x128xbf16, #tpu.memory_space<vmem>>, %arg4: memref<1x128xf32, #tpu.memory_space<vmem>>, %arg5: memref<1x128xf32, #tpu.memory_space<vmem>>, %arg6: memref<1x8x8x128xf32, #tpu.memory_space<vmem>>, %arg7: memref<1x16x16x36xbf16, #tpu.memory_space<vmem>>, %arg8: memref<1x8x16x128xf32, #tpu.memory_space<vmem>>) attributes {dimension_semantics = [#tpu.dimension_semantics<parallel>, #tpu.dimension_semantics<parallel>], iteration_bounds = array<i64: 2, 1>, scalar_prefetch = 0 : i64, scratch_operands = 2 : i64, tpu.core_type = #tpu.core_type<tc>, window_params = [{transform_indices = @transform_0, window_bounds = array<i64: 1, 18, 18, 4>}, {pipeline_mode = #tpu.pipeline_mode<synchronous>, transform_indices = @transform_1, window_bounds = array<i64: 36, 128>}, {pipeline_mode = #tpu.pipeline_mode<synchronous>, transform_indices = @transform_2, window_bounds = array<i64: 1, 128>}, {pipeline_mode = #tpu.pipeline_mode<synchronous>, transform_indices = @transform_3, window_bounds = array<i64: 1, 128>}, {transform_indices = @transform_4, window_bounds = array<i64: 1, 8, 8, 128>}]} {
    %c16_i32 = arith.constant 16 : i32
    %0 = arith.muli %arg1, %c16_i32 : i32
    %1 = tpu.assume_multiple %0, 16 : i32
    %c0_i32 = arith.constant 0 : i32
    %2 = arith.addi %1, %c0_i32 : i32
    %c0 = arith.constant 0 : index
    %3 = arith.index_cast %2 : i32 to index
    %c0_0 = arith.constant 0 : index
    %c0_1 = arith.constant 0 : index
    %4 = vector.load %arg2[%c0, %3, %c0_0, %c0_1] : memref<1x18x18x4xbf16, #tpu.memory_space<vmem>>, vector<1x16x16x4xbf16>
    %5 = vector.shape_cast %4 : vector<1x16x16x4xbf16> to vector<16x16x4xbf16>
    %c0_2 = arith.constant 0 : index
    %c0_3 = arith.constant 0 : index
    %c0_4 = arith.constant 0 : index
    %c0_5 = arith.constant 0 : index
    %6 = vector.load %arg7[%c0_2, %c0_3, %c0_4, %c0_5] : memref<1x16x16x36xbf16, #tpu.memory_space<vmem>>, vector<1x16x16x4xbf16>
    %7 = vector.shape_cast %6 : vector<1x16x16x4xbf16> to vector<16x16x4xbf16>
    %8 = vector.shape_cast %5 : vector<16x16x4xbf16> to vector<1x16x16x4xbf16>
    tpu.vector_store %arg7[%c0_2, %c0_3, %c0_4, %c0_5], %8 {strides = array<i32>} : memref<1x16x16x36xbf16, #tpu.memory_space<vmem>>, vector<1x16x16x4xbf16>,
    %c0_i32_6 = arith.constant 0 : i32
    %9 = arith.addi %1, %c0_i32_6 : i32
    %c0_7 = arith.constant 0 : index
    %10 = arith.index_cast %9 : i32 to index
    %c1 = arith.constant 1 : index
    %c0_8 = arith.constant 0 : index
    %11 = vector.load %arg2[%c0_7, %10, %c1, %c0_8] : memref<1x18x18x4xbf16, #tpu.memory_space<vmem>>, vector<1x16x16x4xbf16>
    %12 = vector.shape_cast %11 : vector<1x16x16x4xbf16> to vector<16x16x4xbf16>
    %c0_9 = arith.constant 0 : index
    %c0_10 = arith.constant 0 : index
    %c0_11 = arith.constant 0 : index
    %c4 = arith.constant 4 : index
    %13 = vector.load %arg7[%c0_9, %c0_10, %c0_11, %c4] : memref<1x16x16x36xbf16, #tpu.memory_space<vmem>>, vector<1x16x16x4xbf16>
    %14 = vector.shape_cast %13 : vector<1x16x16x4xbf16> to vector<16x16x4xbf16>
    %15 = vector.shape_cast %12 : vector<16x16x4xbf16> to vector<1x16x16x4xbf16>
    tpu.vector_store %arg7[%c0_9, %c0_10, %c0_11, %c4], %15 {strides = array<i32>} : memref<1x16x16x36xbf16, #tpu.memory_space<vmem>>, vector<1x16x16x4xbf16>,
    %c0_i32_12 = arith.constant 0 : i32
    %16 = arith.addi %1, %c0_i32_12 : i32
    %c0_13 = arith.constant 0 : index
    %17 = arith.index_cast %16 : i32 to index
    %c2 = arith.constant 2 : index
    %c0_14 = arith.constant 0 : index
    %18 = vector.load %arg2[%c0_13, %17, %c2, %c0_14] : memref<1x18x18x4xbf16, #tpu.memory_space<vmem>>, vector<1x16x16x4xbf16>
    %19 = vector.shape_cast %18 : vector<1x16x16x4xbf16> to vector<16x16x4xbf16>
    %c0_15 = arith.constant 0 : index
    %c0_16 = arith.constant 0 : index
    %c0_17 = arith.constant 0 : index
    %c8 = arith.constant 8 : index
    %20 = vector.load %arg7[%c0_15, %c0_16, %c0_17, %c8] : memref<1x16x16x36xbf16, #tpu.memory_space<vmem>>, vector<1x16x16x4xbf16>
    %21 = vector.shape_cast %20 : vector<1x16x16x4xbf16> to vector<16x16x4xbf16>
    %22 = vector.shape_cast %19 : vector<16x16x4xbf16> to vector<1x16x16x4xbf16>
    tpu.vector_store %arg7[%c0_15, %c0_16, %c0_17, %c8], %22 {strides = array<i32>} : memref<1x16x16x36xbf16, #tpu.memory_space<vmem>>, vector<1x16x16x4xbf16>,
    %c1_i32 = arith.constant 1 : i32
    %23 = arith.addi %1, %c1_i32 : i32
    %c0_18 = arith.constant 0 : index
    %24 = arith.index_cast %23 : i32 to index
    %c0_19 = arith.constant 0 : index
    %c0_20 = arith.constant 0 : index
    %25 = vector.load %arg2[%c0_18, %24, %c0_19, %c0_20] : memref<1x18x18x4xbf16, #tpu.memory_space<vmem>>, vector<1x16x16x4xbf16>
    %26 = vector.shape_cast %25 : vector<1x16x16x4xbf16> to vector<16x16x4xbf16>
    %c0_21 = arith.constant 0 : index
    %c0_22 = arith.constant 0 : index
    %c0_23 = arith.constant 0 : index
    %c12 = arith.constant 12 : index
    %27 = vector.load %arg7[%c0_21, %c0_22, %c0_23, %c12] : memref<1x16x16x36xbf16, #tpu.memory_space<vmem>>, vector<1x16x16x4xbf16>
    %28 = vector.shape_cast %27 : vector<1x16x16x4xbf16> to vector<16x16x4xbf16>
    %29 = vector.shape_cast %26 : vector<16x16x4xbf16> to vector<1x16x16x4xbf16>
    tpu.vector_store %arg7[%c0_21, %c0_22, %c0_23, %c12], %29 {strides = array<i32>} : memref<1x16x16x36xbf16, #tpu.memory_space<vmem>>, vector<1x16x16x4xbf16>,
    %c1_i32_24 = arith.constant 1 : i32
    %30 = arith.addi %1, %c1_i32_24 : i32
    %c0_25 = arith.constant 0 : index
    %31 = arith.index_cast %30 : i32 to index
    %c1_26 = arith.constant 1 : index
    %c0_27 = arith.constant 0 : index
    %32 = vector.load %arg2[%c0_25, %31, %c1_26, %c0_27] : memref<1x18x18x4xbf16, #tpu.memory_space<vmem>>, vector<1x16x16x4xbf16>
    %33 = vector.shape_cast %32 : vector<1x16x16x4xbf16> to vector<16x16x4xbf16>
    %c0_28 = arith.constant 0 : index
    %c0_29 = arith.constant 0 : index
    %c0_30 = arith.constant 0 : index
    %c16 = arith.constant 16 : index
    %34 = vector.load %arg7[%c0_28, %c0_29, %c0_30, %c16] : memref<1x16x16x36xbf16, #tpu.memory_space<vmem>>, vector<1x16x16x4xbf16>
    %35 = vector.shape_cast %34 : vector<1x16x16x4xbf16> to vector<16x16x4xbf16>
    %36 = vector.shape_cast %33 : vector<16x16x4xbf16> to vector<1x16x16x4xbf16>
    tpu.vector_store %arg7[%c0_28, %c0_29, %c0_30, %c16], %36 {strides = array<i32>} : memref<1x16x16x36xbf16, #tpu.memory_space<vmem>>, vector<1x16x16x4xbf16>,
    %c1_i32_31 = arith.constant 1 : i32
    %37 = arith.addi %1, %c1_i32_31 : i32
    %c0_32 = arith.constant 0 : index
    %38 = arith.index_cast %37 : i32 to index
    %c2_33 = arith.constant 2 : index
    %c0_34 = arith.constant 0 : index
    %39 = vector.load %arg2[%c0_32, %38, %c2_33, %c0_34] : memref<1x18x18x4xbf16, #tpu.memory_space<vmem>>, vector<1x16x16x4xbf16>
    %40 = vector.shape_cast %39 : vector<1x16x16x4xbf16> to vector<16x16x4xbf16>
    %c0_35 = arith.constant 0 : index
    %c0_36 = arith.constant 0 : index
    %c0_37 = arith.constant 0 : index
    %c20 = arith.constant 20 : index
    %41 = vector.load %arg7[%c0_35, %c0_36, %c0_37, %c20] : memref<1x16x16x36xbf16, #tpu.memory_space<vmem>>, vector<1x16x16x4xbf16>
    %42 = vector.shape_cast %41 : vector<1x16x16x4xbf16> to vector<16x16x4xbf16>
    %43 = vector.shape_cast %40 : vector<16x16x4xbf16> to vector<1x16x16x4xbf16>
    tpu.vector_store %arg7[%c0_35, %c0_36, %c0_37, %c20], %43 {strides = array<i32>} : memref<1x16x16x36xbf16, #tpu.memory_space<vmem>>, vector<1x16x16x4xbf16>,
    %c2_i32 = arith.constant 2 : i32
    %44 = arith.addi %1, %c2_i32 : i32
    %c0_38 = arith.constant 0 : index
    %45 = arith.index_cast %44 : i32 to index
    %c0_39 = arith.constant 0 : index
    %c0_40 = arith.constant 0 : index
    %46 = vector.load %arg2[%c0_38, %45, %c0_39, %c0_40] : memref<1x18x18x4xbf16, #tpu.memory_space<vmem>>, vector<1x16x16x4xbf16>
    %47 = vector.shape_cast %46 : vector<1x16x16x4xbf16> to vector<16x16x4xbf16>
    %c0_41 = arith.constant 0 : index
    %c0_42 = arith.constant 0 : index
    %c0_43 = arith.constant 0 : index
    %c24 = arith.constant 24 : index
    %48 = vector.load %arg7[%c0_41, %c0_42, %c0_43, %c24] : memref<1x16x16x36xbf16, #tpu.memory_space<vmem>>, vector<1x16x16x4xbf16>
    %49 = vector.shape_cast %48 : vector<1x16x16x4xbf16> to vector<16x16x4xbf16>
    %50 = vector.shape_cast %47 : vector<16x16x4xbf16> to vector<1x16x16x4xbf16>
    tpu.vector_store %arg7[%c0_41, %c0_42, %c0_43, %c24], %50 {strides = array<i32>} : memref<1x16x16x36xbf16, #tpu.memory_space<vmem>>, vector<1x16x16x4xbf16>,
    %c2_i32_44 = arith.constant 2 : i32
    %51 = arith.addi %1, %c2_i32_44 : i32
    %c0_45 = arith.constant 0 : index
    %52 = arith.index_cast %51 : i32 to index
    %c1_46 = arith.constant 1 : index
    %c0_47 = arith.constant 0 : index
    %53 = vector.load %arg2[%c0_45, %52, %c1_46, %c0_47] : memref<1x18x18x4xbf16, #tpu.memory_space<vmem>>, vector<1x16x16x4xbf16>
    %54 = vector.shape_cast %53 : vector<1x16x16x4xbf16> to vector<16x16x4xbf16>
    %c0_48 = arith.constant 0 : index
    %c0_49 = arith.constant 0 : index
    %c0_50 = arith.constant 0 : index
    %c28 = arith.constant 28 : index
    %55 = vector.load %arg7[%c0_48, %c0_49, %c0_50, %c28] : memref<1x16x16x36xbf16, #tpu.memory_space<vmem>>, vector<1x16x16x4xbf16>
    %56 = vector.shape_cast %55 : vector<1x16x16x4xbf16> to vector<16x16x4xbf16>
    %57 = vector.shape_cast %54 : vector<16x16x4xbf16> to vector<1x16x16x4xbf16>
    tpu.vector_store %arg7[%c0_48, %c0_49, %c0_50, %c28], %57 {strides = array<i32>} : memref<1x16x16x36xbf16, #tpu.memory_space<vmem>>, vector<1x16x16x4xbf16>,
    %c2_i32_51 = arith.constant 2 : i32
    %58 = arith.addi %1, %c2_i32_51 : i32
    %c0_52 = arith.constant 0 : index
    %59 = arith.index_cast %58 : i32 to index
    %c2_53 = arith.constant 2 : index
    %c0_54 = arith.constant 0 : index
    %60 = vector.load %arg2[%c0_52, %59, %c2_53, %c0_54] : memref<1x18x18x4xbf16, #tpu.memory_space<vmem>>, vector<1x16x16x4xbf16>
    %61 = vector.shape_cast %60 : vector<1x16x16x4xbf16> to vector<16x16x4xbf16>
    %c0_55 = arith.constant 0 : index
    %c0_56 = arith.constant 0 : index
    %c0_57 = arith.constant 0 : index
    %c32 = arith.constant 32 : index
    %62 = vector.load %arg7[%c0_55, %c0_56, %c0_57, %c32] : memref<1x16x16x36xbf16, #tpu.memory_space<vmem>>, vector<1x16x16x4xbf16>
    %63 = vector.shape_cast %62 : vector<1x16x16x4xbf16> to vector<16x16x4xbf16>
    %64 = vector.shape_cast %61 : vector<16x16x4xbf16> to vector<1x16x16x4xbf16>
    tpu.vector_store %arg7[%c0_55, %c0_56, %c0_57, %c32], %64 {strides = array<i32>} : memref<1x16x16x36xbf16, #tpu.memory_space<vmem>>, vector<1x16x16x4xbf16>,
    %c0_58 = arith.constant 0 : index
    %c0_59 = arith.constant 0 : index
    %c0_60 = arith.constant 0 : index
    %c0_61 = arith.constant 0 : index
    %65 = vector.load %arg7[%c0_58, %c0_59, %c0_60, %c0_61] : memref<1x16x16x36xbf16, #tpu.memory_space<vmem>>, vector<1x16x16x36xbf16>
    %66 = vector.shape_cast %65 : vector<1x16x16x36xbf16> to vector<256x36xbf16>
    %c0_62 = arith.constant 0 : index
    %c0_63 = arith.constant 0 : index
    %67 = vector.load %arg3[%c0_62, %c0_63] : memref<36x128xbf16, #tpu.memory_space<vmem>>, vector<36x128xbf16>
    %cst = arith.constant dense<0.000000e+00> : vector<256x128xf32>
    %68 = tpu.matmul %66, %67, %cst {dimension_numbers = #tpu.dot_dimension_numbers<[1], [0], [0], [1], [0, 0, 1, 1], [], []>} : vector<256x36xbf16>, vector<36x128xbf16>, vector<256x128xf32> -> vector<256x128xf32>
    %c0_64 = arith.constant 0 : index
    %c0_65 = arith.constant 0 : index
    %69 = vector.load %arg4[%c0_64, %c0_65] : memref<1x128xf32, #tpu.memory_space<vmem>>, vector<1x128xf32>
    %70 = vector.broadcast %69 : vector<1x128xf32> to vector<256x128xf32>
    %71 = arith.mulf %68, %70 : vector<256x128xf32>
    %c0_66 = arith.constant 0 : index
    %c0_67 = arith.constant 0 : index
    %72 = vector.load %arg5[%c0_66, %c0_67] : memref<1x128xf32, #tpu.memory_space<vmem>>, vector<1x128xf32>
    %73 = vector.broadcast %72 : vector<1x128xf32> to vector<256x128xf32>
    %74 = arith.addf %71, %73 : vector<256x128xf32>
    %cst_68 = arith.constant 0.000000e+00 : f32
    %75 = vector.broadcast %cst_68 : f32 to vector<256x128xf32>
    %76 = arith.maximumf %74, %75 : vector<256x128xf32>
    %77 = vector.shape_cast %76 : vector<256x128xf32> to vector<1x8x2x16x128xf32>
    %78 = vector.extract_strided_slice %77 {offsets = [0, 0, 0, 0, 0], sizes = [1, 8, 1, 16, 128], strides = [1, 1, 1, 1, 1]} : vector<1x8x2x16x128xf32> to vector<1x8x1x16x128xf32>
    %79 = vector.shape_cast %78 : vector<1x8x1x16x128xf32> to vector<1x8x16x128xf32>
    %80 = vector.extract_strided_slice %77 {offsets = [0, 0, 1, 0, 0], sizes = [1, 8, 1, 16, 128], strides = [1, 1, 1, 1, 1]} : vector<1x8x2x16x128xf32> to vector<1x8x1x16x128xf32>
    %81 = vector.shape_cast %80 : vector<1x8x1x16x128xf32> to vector<1x8x16x128xf32>
    %82 = arith.maximumf %79, %81 : vector<1x8x16x128xf32>
    %c0_69 = arith.constant 0 : index
    %c0_70 = arith.constant 0 : index
    %c0_71 = arith.constant 0 : index
    %c0_72 = arith.constant 0 : index
    %83 = vector.load %arg8[%c0_69, %c0_70, %c0_71, %c0_72] : memref<1x8x16x128xf32, #tpu.memory_space<vmem>>, vector<1x8x16x128xf32>
    tpu.vector_store %arg8[%c0_69, %c0_70, %c0_71, %c0_72], %82 {strides = array<i32>} : memref<1x8x16x128xf32, #tpu.memory_space<vmem>>, vector<1x8x16x128xf32>,
    %c0_73 = arith.constant 0 : index
    %c0_74 = arith.constant 0 : index
    %c0_75 = arith.constant 0 : index
    %c0_76 = arith.constant 0 : index
    %84 = tpu.strided_load %arg8[%c0_73, %c0_74, %c0_75, %c0_76] {strides = array<i32: 1, 1, 2, 1>} : memref<1x8x16x128xf32, #tpu.memory_space<vmem>>, vector<1x8x8x128xf32>
    %c0_77 = arith.constant 0 : index
    %c0_78 = arith.constant 0 : index
    %c1_79 = arith.constant 1 : index
    %c0_80 = arith.constant 0 : index
    %85 = tpu.strided_load %arg8[%c0_77, %c0_78, %c1_79, %c0_80] {strides = array<i32: 1, 1, 2, 1>} : memref<1x8x16x128xf32, #tpu.memory_space<vmem>>, vector<1x8x8x128xf32>
    %86 = arith.maximumf %84, %85 : vector<1x8x8x128xf32>
    %c0_81 = arith.constant 0 : index
    %c0_82 = arith.constant 0 : index
    %c0_83 = arith.constant 0 : index
    %c0_84 = arith.constant 0 : index
    %87 = vector.load %arg6[%c0_81, %c0_82, %c0_83, %c0_84] : memref<1x8x8x128xf32, #tpu.memory_space<vmem>>, vector<1x8x8x128xf32>
    tpu.vector_store %arg6[%c0_81, %c0_82, %c0_83, %c0_84], %86 {strides = array<i32>} : memref<1x8x8x128xf32, #tpu.memory_space<vmem>>, vector<1x8x8x128xf32>,
    return
  }
  func.func @transform_0(%arg0: i32, %arg1: i32) -> (i32, i32, i32, i32) {
    %c0_i32 = arith.constant 0 : i32
    %c0_i32_0 = arith.constant 0 : i32
    %c0_i32_1 = arith.constant 0 : i32
    %c0_i32_2 = arith.constant 0 : i32
    return %arg0, %c0_i32, %c0_i32_0, %c0_i32_1 : i32, i32, i32, i32
  }
  func.func @transform_1(%arg0: i32, %arg1: i32) -> (i32, i32) {
    %c0_i32 = arith.constant 0 : i32
    %c0_i32_0 = arith.constant 0 : i32
    %c0_i32_1 = arith.constant 0 : i32
    return %c0_i32, %c0_i32_0 : i32, i32
  }
  func.func @transform_2(%arg0: i32, %arg1: i32) -> (i32, i32) {
    %c0_i32 = arith.constant 0 : i32
    %c0_i32_0 = arith.constant 0 : i32
    %c0_i32_1 = arith.constant 0 : i32
    return %c0_i32, %c0_i32_0 : i32, i32
  }
  func.func @transform_3(%arg0: i32, %arg1: i32) -> (i32, i32) {
    %c0_i32 = arith.constant 0 : i32
    %c0_i32_0 = arith.constant 0 : i32
    %c0_i32_1 = arith.constant 0 : i32
    return %c0_i32, %c0_i32_0 : i32, i32
  }
  func.func @transform_4(%arg0: i32, %arg1: i32) -> (i32, i32, i32, i32) {
    %c0_i32 = arith.constant 0 : i32
    %c0_i32_0 = arith.constant 0 : i32
    %c0_i32_1 = arith.constant 0 : i32
    return %arg0, %arg1, %c0_i32, %c0_i32_0 : i32, i32, i32, i32
  }
}

</mosaic_0001>

<llo_original>
// kernel: conv_block_forward.2
$region0: #{conv_block_forward.2}
  #allocation0 [shape = 'u32[]', space=smem, size = 0x4, offset = 0x4, fixed_abs, tag = 'smem constant byte address 0x4 - core index']
  #allocation1 [shape = 'u32[144,128]{1,0:T(1,128)}', space=vmem, size = 0x12000, scoped, tag = 'internal scratch']
  #allocation2 [shape = 'bf16[1,16,16,36]{3,2,1,0:T(16,128)(2,1)}', space=vmem, size = 0x10000, scoped, tag = 'scratch operand']
  %s0 = inlined_call_operand.vmem [shape: bf16[2,18,18,4], index: 0, kind: input, shape index: {}]
  %s1 = inlined_call_operand.vmem [shape: bf16[36,128], index: 1, kind: input, shape index: {}]
  %s2 = inlined_call_operand.vmem [shape: f32[2,1,1,128], index: 2, kind: output, shape index: {0}]
  %s3 = inlined_call_operand.vmem [shape: f32[2,1,1,128], index: 3, kind: output, shape index: {1}]
  %4 = xla_tuple %s2, %s3
  %s5 = sld [smem:[#allocation0]]
  $region49: #{conv_block_forward.2} parent=0
    _
  %s7 = ssub.s32 1, %s5
  %s8 = scalar_select 0, %s7, %s5
  loop: start=0, step=1, limit=4
  $region2: #{conv_block_forward.2} parent=0 // loop_pre_header
    _
  $region3: #{conv_block_forward.2} parent=0 // loop_header
    %s10 = sphi 0, %s14
    %p11 = scmp.ge.s32.totalorder %s10, 4
    %s17 = sphi 0, %s29
    %s18 = sphi 0, %s25
    %s19 = sphi 0, %s17
    %s20 = sphi 0, %s18
    %s21 = sphi 0, %s19
    %s22 = sphi 0, %s20
    %s32 = sphi 0, %s34
    %s35 = sphi 0, %s32
    %s36 = sphi 0, %s35
    %s52 = sphi 0, %s36
    %s56 = sphi 0, %s56
    %s58 = sphi 0, %s56
    %s59 = sphi 0, %s58
    %s73 = sphi 0, %s59
    %s81 = sphi 0, %s83
    %s84 = sphi 0, %s81
    %s85 = sphi 0, %s84
    %s101 = sphi 0, %s85
    %s109 = sphi 0, %s111
    %s112 = sphi 0, %s109
    %s113 = sphi 0, %s112
    %s129 = sphi 0, %s113
  $region4: #{conv_block_forward.2} parent=0 // loop_header_branch
    %13 = sbr.rel (%p11) target = $region8
  $region5: #{conv_block_forward.2} parent=0 // loop_body
    %s15 = ssub.s32 %s10, 1
    %s16 = ssub.s32 %s10, 2
    %s23 = sadd.s32 1, %s18
    %p24 = scmp.ge.s32.totalorder %s23, 1
    %s25 = scalar_select %p24, 0, %s23
    %s26 = sadd.s32 1, %s17
    %s27 = scalar_select %p24, %s26, %s17
    %p28 = scmp.ge.s32.totalorder %s27, 2
    %s29 = scalar_select %p28, 0, %s27
    %s30 = ssub.s32 %s17, %s29
    %p31 = scmp.eq.s32.totalorder %s30, 0
    %s33 = sadd.s32 %s32, 1
    %s34 = scalar_select %p31, %s32, %s33
    %p37 = pneg %p31
    %p38 = scmp.eq.s32.totalorder %s10, 1
    %p39 = por %p37, %p38
    %p40 = scmp.ne.s32.totalorder %s32, %s35
    %p41 = scmp.eq.s32.totalorder %s10, 0
    %p42 = por %p40, %p41
    %p43 = scmp.ne.s32.totalorder %s32, %s35
    %p44 = scmp.eq.s32.totalorder %s15, 1
    %p45 = por %p43, %p44
    %p46 = scmp.ne.s32.totalorder %s35, %s36
    %p47 = scmp.eq.s32.totalorder %s15, 0
    %p48 = por %p46, %p47
    %p49 = scmp.ne.s32.totalorder %s35, %s36
    %p50 = scmp.eq.s32.totalorder %s16, 1
    %p51 = por %p49, %p50
    %p53 = scmp.ne.s32.totalorder %s36, %s52
    %p54 = scmp.eq.s32.totalorder %s16, 0
    %p55 = por %p53, %p54
    %s57 = sadd.s32 %s56, 1
    %p60 = scmp.eq.s32.totalorder %s10, 1
    %p61 = scmp.ne.s32.totalorder %s56, %s58
    %p62 = scmp.eq.s32.totalorder %s10, 0
    %p63 = por %p61, %p62
    %p64 = scmp.ne.s32.totalorder %s56, %s58
    %p65 = scmp.eq.s32.totalorder %s15, 1
    %p66 = por %p64, %p65
    %p67 = scmp.ne.s32.totalorder %s58, %s59
    %p68 = scmp.eq.s32.totalorder %s15, 0
    %p69 = por %p67, %p68
    %p70 = scmp.ne.s32.totalorder %s58, %s59
    %p71 = scmp.eq.s32.totalorder %s16, 1
    %p72 = por %p70, %p71
    %p74 = scmp.ne.s32.totalorder %s59, %s73
    %p75 = scmp.eq.s32.totalorder %s16, 0
    %p76 = por %p74, %p75
    %s77 = ssub.s32 %s17, %s29
    %s78 = ssub.s32 %s18, %s25
    %s79 = sor.u32 %s77, %s78
    %p80 = scmp.eq.s32.totalorder %s79, 0
    %s82 = sadd.s32 %s81, 1
    %s83 = scalar_select %p80, %s81, %s82
    %p86 = pneg %p80
    %p87 = scmp.eq.s32.totalorder %s10, 1
    %p88 = por %p86, %p87
    %p89 = scmp.ne.s32.totalorder %s81, %s84
    %p90 = scmp.eq.s32.totalorder %s10, 0
    %p91 = por %p89, %p90
    %p92 = scmp.ne.s32.totalorder %s81, %s84
    %p93 = scmp.eq.s32.totalorder %s15, 1
    %p94 = por %p92, %p93
    %p95 = scmp.ne.s32.totalorder %s84, %s85
    %p96 = scmp.eq.s32.totalorder %s15, 0
    %p97 = por %p95, %p96
    %p98 = scmp.ne.s32.totalorder %s84, %s85
    %p99 = scmp.eq.s32.totalorder %s16, 1
    %p100 = por %p98, %p99
    %p102 = scmp.ne.s32.totalorder %s85, %s101
    %p103 = scmp.eq.s32.totalorder %s16, 0
    %p104 = por %p102, %p103
    %s105 = ssub.s32 %s17, %s29
    %s106 = ssub.s32 %s18, %s25
    %s107 = sor.u32 %s105, %s106
    %p108 = scmp.eq.s32.totalorder %s107, 0
    %s110 = sadd.s32 %s109, 1
    %s111 = scalar_select %p108, %s109, %s110
    %p114 = pneg %p108
    %p115 = scmp.eq.s32.totalorder %s10, 1
    %p116 = por %p114, %p115
    %p117 = scmp.ne.s32.totalorder %s109, %s112
    %p118 = scmp.eq.s32.totalorder %s10, 0
    %p119 = por %p117, %p118
    %p120 = scmp.ne.s32.totalorder %s109, %s112
    %p121 = scmp.eq.s32.totalorder %s15, 1
    %p122 = por %p120, %p121
    %p123 = scmp.ne.s32.totalorder %s112, %s113
    %p124 = scmp.eq.s32.totalorder %s15, 0
    %p125 = por %p123, %p124
    %p126 = scmp.ne.s32.totalorder %s112, %s113
    %p127 = scmp.eq.s32.totalorder %s16, 1
    %p128 = por %p126, %p127
    %p130 = scmp.ne.s32.totalorder %s113, %s129
    %p131 = scmp.eq.s32.totalorder %s16, 0
    %p132 = por %p130, %p131
    %p133 = scmp.le.s32.totalorder 1, %s10
    %p134 = scmp.lt.s32.totalorder %s10, 3
    %p135 = pnand %p133, %p134
    %p136 = pneg %p135
    // Predicated region
    $region9: #{conv_block_forward.2} parent=5 // pred_check
      _
    $region10: #{conv_block_forward.2} parent=5 // pred_check_branch
      %138 = sbr.rel (%p135) target = $region12
    $region11: #{conv_block_forward.2} parent=5 // pred_region
      %s139 = ssub.s32 %s10, 1
      // Predicated region
      $region13: #{conv_block_forward.2} parent=11 // pred_check
        %p140 = pneg %p69
      $region14: #{conv_block_forward.2} parent=11 // pred_check_branch
        %142 = sbr.rel (%p140) target = $region16
      $region15: #{conv_block_forward.2} parent=11 // pred_region
        _
      $region16: #{conv_block_forward.2} parent=11 // pred_fallthru
        _
    $region12: #{conv_block_forward.2} parent=5 // pred_fallthru
      _
    %p143 = scmp.lt.s32.totalorder %s10, 2
    // Predicated region
    $region17: #{conv_block_forward.2} parent=5 // pred_check
      %p144 = pneg %p143
    $region18: #{conv_block_forward.2} parent=5 // pred_check_branch
      %146 = sbr.rel (%p144) target = $region20
    $region19: #{conv_block_forward.2} parent=5 // pred_region
      // Predicated region
      $region21: #{conv_block_forward.2} parent=19 // pred_check
        %p147 = pneg %p42
      $region22: #{conv_block_forward.2} parent=19 // pred_check_branch
        %149 = sbr.rel (%p147) target = $region24
      $region23: #{conv_block_forward.2} parent=19 // pred_region
        %p150 = scmp.lt.s32.totalorder %s17, 1
        %s151 = scalar_select %p150, %s17, 1
        %s152 = smul.addr %s151, 54
        %s153 = smul.addr %s152, 4
        %s154 = scalar_lea.vmem %s0, %s153
      $region24: #{conv_block_forward.2} parent=19 // pred_fallthru
        _
    $region20: #{conv_block_forward.2} parent=5 // pred_fallthru
      _
    %p155 = scmp.le.s32.totalorder 1, %s10
    %p156 = scmp.lt.s32.totalorder %s10, 3
    %p157 = pnand %p155, %p156
    %p158 = pneg %p157
    // Predicated region
    $region25: #{conv_block_forward.2} parent=5 // pred_check
      _
    $region26: #{conv_block_forward.2} parent=5 // pred_check_branch
      %160 = sbr.rel (%p157) target = $region28
    $region27: #{conv_block_forward.2} parent=5 // pred_region
      %s161 = ssub.s32 %s10, 1
      %p162 = scmp.lt.s32.totalorder %s19, 1
      %s163 = scalar_select %p162, %s19, 1
      %s164 = smul.addr %s163, 54
      %s165 = smul.addr %s164, 4
      %s166 = scalar_lea.vmem %s0, %s165
      %p167 = pneg %p48
      %p168 = pneg %p45
      %p169 = pneg %p69
      %p170 = pneg %p66
      %p171 = pneg %p97
      %p172 = pneg %p94
      %p173 = scmp.lt.s32.totalorder %s19, 1
      %s174 = scalar_select %p173, %s19, 1
      %p175 = scmp.lt.s32.totalorder %s20, 0
      %s176 = scalar_select %p175, %s20, 0
      %s177 = sadd.s32 %s176, %s174
      %s178 = scalar_lea.vmem %s2, %s177
      %p179 = pneg %p125
      %p180 = pneg %p122
      %p181 = scmp.lt.s32.totalorder %s19, 1
      %s182 = scalar_select %p181, %s19, 1
      %p183 = scmp.lt.s32.totalorder %s20, 0
      %s184 = scalar_select %p183, %s20, 0
      %s185 = sadd.s32 %s184, %s182
      %s186 = scalar_lea.vmem %s3, %s185
      %p187 = scmp.lt.s32.totalorder %s19, 1
      %s188 = scalar_select %p187, %s19, 1
      %s189 = smul.addr %s188, 54
      %s190 = smul.addr %s189, 4
      %s191 = scalar_lea.vmem %s0, %s190
      %p192 = scmp.lt.s32.totalorder %s19, 1
      %s193 = scalar_select %p192, %s19, 1
      %p194 = scmp.lt.s32.totalorder %s20, 0
      %s195 = scalar_select %p194, %s20, 0
      %s196 = sadd.s32 %s195, %s193
      %s197 = scalar_lea.vmem %s2, %s196
      %p198 = scmp.lt.s32.totalorder %s19, 1
      %s199 = scalar_select %p198, %s19, 1
      %p200 = scmp.lt.s32.totalorder %s20, 0
      %s201 = scalar_select %p200, %s20, 0
      %s202 = sadd.s32 %s201, %s199
      %s203 = scalar_lea.vmem %s3, %s202
      %s205 = smul.u32 %s20, 16
      %s206 = smul.u32 %s205, 3
      %s207 = smul.addr %s206, 4
      %s208 = scalar_lea.vmem %s191, %s207
      %v209 = vld [vmem:[%s208] sm:$0xf]
      %v210 = vld [vmem:[%s208 + $0x4] sm:$0xf]
      %v211 = vld [vmem:[%s208 + $0xc] sm:$0xf]
      %v212 = vld [vmem:[%s208 + $0x10] sm:$0xf]
      %v213 = vld [vmem:[%s208 + $0x18] sm:$0xf]
      %v214 = vld [vmem:[%s208 + $0x1c] sm:$0xf]
      %v215 = vld [vmem:[%s208 + $0x24] sm:$0xf]
      %v216 = vld [vmem:[%s208 + $0x28] sm:$0xf]
      %v217 = vld [vmem:[%s208 + $0x30] sm:$0xf]
      %v218 = vld [vmem:[%s208 + $0x34] sm:$0xf]
      %v219 = vld [vmem:[%s208 + $0x3c] sm:$0xf]
      %v220 = vld [vmem:[%s208 + $0x40] sm:$0xf]
      %v221 = vld [vmem:[%s208 + $0x48] sm:$0xf]
      %v222 = vld [vmem:[%s208 + $0x4c] sm:$0xf]
      %v223 = vld [vmem:[%s208 + $0x54] sm:$0xf]
      %v224 = vld [vmem:[%s208 + $0x58] sm:$0xf]
      %v225 = vld [vmem:[%s208 + $0x60] sm:$0xf]
      %v226 = vld [vmem:[%s208 + $0x64] sm:$0xf]
      %v227 = vld [vmem:[%s208 + $0x6c] sm:$0xf]
      %v228 = vld [vmem:[%s208 + $0x70] sm:$0xf]
      %v229 = vld [vmem:[%s208 + $0x78] sm:$0xf]
      %v230 = vld [vmem:[%s208 + $0x7c] sm:$0xf]
      %v231 = vld [vmem:[%s208 + $0x84] sm:$0xf]
      %v232 = vld [vmem:[%s208 + $0x88] sm:$0xf]
      %v233 = vld [vmem:[%s208 + $0x90] sm:$0xf]
      %v234 = vld [vmem:[%s208 + $0x94] sm:$0xf]
      %v235 = vld [vmem:[%s208 + $0x9c] sm:$0xf]
      %v236 = vld [vmem:[%s208 + $0xa0] sm:$0xf]
      %v237 = vld [vmem:[%s208 + $0xa8] sm:$0xf]
      %v238 = vld [vmem:[%s208 + $0xac] sm:$0xf]
      %v239 = vld [vmem:[%s208 + $0xb4] sm:$0xf]
      %v240 = vld [vmem:[%s208 + $0xb8] sm:$0xf]
      %v273 = vunpack.c.l.b16 %v209
      %v274 = vunpack.c.l.b16 %v210
      %v275 = vunpack.c.l.b16 %v211
      %v276 = vunpack.c.l.b16 %v212
      %v277 = vunpack.c.l.b16 %v213
      %v278 = vunpack.c.l.b16 %v214
      %v279 = vunpack.c.l.b16 %v215
      %v280 = vunpack.c.l.b16 %v216
      %v281 = vunpack.c.l.b16 %v217
      %v282 = vunpack.c.l.b16 %v218
      %v283 = vunpack.c.l.b16 %v219
      %v284 = vunpack.c.l.b16 %v220
      %v285 = vunpack.c.l.b16 %v221
      %v286 = vunpack.c.l.b16 %v222
      %v287 = vunpack.c.l.b16 %v223
      %v288 = vunpack.c.l.b16 %v224
      %v289 = vunpack.c.l.b16 %v225
      %v290 = vunpack.c.l.b16 %v226
      %v291 = vunpack.c.l.b16 %v227
      %v292 = vunpack.c.l.b16 %v228
      %v293 = vunpack.c.l.b16 %v229
      %v294 = vunpack.c.l.b16 %v230
      %v295 = vunpack.c.l.b16 %v231
      %v296 = vunpack.c.l.b16 %v232
      %v297 = vunpack.c.l.b16 %v233
      %v298 = vunpack.c.l.b16 %v234
      %v299 = vunpack.c.l.b16 %v235
      %v300 = vunpack.c.l.b16 %v236
      %v301 = vunpack.c.l.b16 %v237
      %v302 = vunpack.c.l.b16 %v238
      %v303 = vunpack.c.l.b16 %v239
      %v304 = vunpack.c.l.b16 %v240
      %v305 = vpack.c.b16 %v274, %v273
      %v306 = vpack.c.b16 %v276, %v275
      %v307 = vpack.c.b16 %v278, %v277
      %v308 = vpack.c.b16 %v280, %v279
      %v309 = vpack.c.b16 %v282, %v281
      %v310 = vpack.c.b16 %v284, %v283
      %v311 = vpack.c.b16 %v286, %v285
      %v312 = vpack.c.b16 %v288, %v287
      %v313 = vpack.c.b16 %v290, %v289
      %v314 = vpack.c.b16 %v292, %v291
      %v315 = vpack.c.b16 %v294, %v293
      %v316 = vpack.c.b16 %v296, %v295
      %v317 = vpack.c.b16 %v298, %v297
      %v318 = vpack.c.b16 %v300, %v299
      %v319 = vpack.c.b16 %v302, %v301
      %v320 = vpack.c.b16 %v304, %v303
      %vm337 = vcmask 31744
      %338 = vst.msk [vmem:[#allocation2] sm:$0xff] %vm337, %v305
      %339 = vst.msk [vmem:[#allocation2 + $0x8] sm:$0xff] %vm337, %v306
      %340 = vst.msk [vmem:[#allocation2 + $0x10] sm:$0xff] %vm337, %v307
      %341 = vst.msk [vmem:[#allocation2 + $0x18] sm:$0xff] %vm337, %v308
      %342 = vst.msk [vmem:[#allocation2 + $0x20] sm:$0xff] %vm337, %v309
      %343 = vst.msk [vmem:[#allocation2 + $0x28] sm:$0xff] %vm337, %v310
      %344 = vst.msk [vmem:[#allocation2 + $0x30] sm:$0xff] %vm337, %v311
      %345 = vst.msk [vmem:[#allocation2 + $0x38] sm:$0xff] %vm337, %v312
      %346 = vst.msk [vmem:[#allocation2 + $0x40] sm:$0xff] %vm337, %v313
      %347 = vst.msk [vmem:[#allocation2 + $0x48] sm:$0xff] %vm337, %v314
      %348 = vst.msk [vmem:[#allocation2 + $0x50] sm:$0xff] %vm337, %v315
      %349 = vst.msk [vmem:[#allocation2 + $0x58] sm:$0xff] %vm337, %v316
      %350 = vst.msk [vmem:[#allocation2 + $0x60] sm:$0xff] %vm337, %v317
      %351 = vst.msk [vmem:[#allocation2 + $0x68] sm:$0xff] %vm337, %v318
      %352 = vst.msk [vmem:[#allocation2 + $0x70] sm:$0xff] %vm337, %v319
      %353 = vst.msk [vmem:[#allocation2 + $0x78] sm:$0xff] %vm337, %v320
      %v354 = vld [vmem:[%s208] sm:$0xf]
      %v355 = vld [vmem:[%s208 + $0x4] sm:$0xf]
      %v356 = vld [vmem:[%s208 + $0x8] sm:$0x1]
      %v357 = vld [vmem:[%s208 + $0xc] sm:$0xf]
      %v358 = vld [vmem:[%s208 + $0x10] sm:$0xf]
      %v359 = vld [vmem:[%s208 + $0x14] sm:$0x1]
      %v360 = vld [vmem:[%s208 + $0x18] sm:$0xf]
      %v361 = vld [vmem:[%s208 + $0x1c] sm:$0xf]
      %v362 = vld [vmem:[%s208 + $0x20] sm:$0x1]
      %v363 = vld [vmem:[%s208 + $0x24] sm:$0xf]
      %v364 = vld [vmem:[%s208 + $0x28] sm:$0xf]
      %v365 = vld [vmem:[%s208 + $0x2c] sm:$0x1]
      %v366 = vld [vmem:[%s208 + $0x30] sm:$0xf]
      %v367 = vld [vmem:[%s208 + $0x34] sm:$0xf]
      %v368 = vld [vmem:[%s208 + $0x38] sm:$0x1]
      %v369 = vld [vmem:[%s208 + $0x3c] sm:$0xf]
      %v370 = vld [vmem:[%s208 + $0x40] sm:$0xf]
      %v371 = vld [vmem:[%s208 + $0x44] sm:$0x1]
      %v372 = vld [vmem:[%s208 + $0x48] sm:$0xf]
      %v373 = vld [vmem:[%s208 + $0x4c] sm:$0xf]
      %v374 = vld [vmem:[%s208 + $0x50] sm:$0x1]
      %v375 = vld [vmem:[%s208 + $0x54] sm:$0xf]
      %v376 = vld [vmem:[%s208 + $0x58] sm:$0xf]
      %v377 = vld [vmem:[%s208 + $0x5c] sm:$0x1]
      %v378 = vld [vmem:[%s208 + $0x60] sm:$0xf]
      %v379 = vld [vmem:[%s208 + $0x64] sm:$0xf]
      %v380 = vld [vmem:[%s208 + $0x68] sm:$0x1]
      %v381 = vld [vmem:[%s208 + $0x6c] sm:$0xf]
      %v382 = vld [vmem:[%s208 + $0x70] sm:$0xf]
      %v383 = vld [vmem:[%s208 + $0x74] sm:$0x1]
      %v384 = vld [vmem:[%s208 + $0x78] sm:$0xf]
      %v385 = vld [vmem:[%s208 + $0x7c] sm:$0xf]
      %v386 = vld [vmem:[%s208 + $0x80] sm:$0x1]
      %v387 = vld [vmem:[%s208 + $0x84] sm:$0xf]
      %v388 = vld [vmem:[%s208 + $0x88] sm:$0xf]
      %v389 = vld [vmem:[%s208 + $0x8c] sm:$0x1]
      %v390 = vld [vmem:[%s208 + $0x90] sm:$0xf]
      %v391 = vld [vmem:[%s208 + $0x94] sm:$0xf]
      %v392 = vld [vmem:[%s208 + $0x98] sm:$0x1]
      %v393 = vld [vmem:[%s208 + $0x9c] sm:$0xf]
      %v394 = vld [vmem:[%s208 + $0xa0] sm:$0xf]
      %v395 = vld [vmem:[%s208 + $0xa4] sm:$0x1]
      %v396 = vld [vmem:[%s208 + $0xa8] sm:$0xf]
      %v397 = vld [vmem:[%s208 + $0xac] sm:$0xf]
      %v398 = vld [vmem:[%s208 + $0xb0] sm:$0x1]
      %v399 = vld [vmem:[%s208 + $0xb4] sm:$0xf]
      %v400 = vld [vmem:[%s208 + $0xb8] sm:$0xf]
      %v401 = vld [vmem:[%s208 + $0xbc] sm:$0x1]
      %v450 = vunpack.c.l.b16 %v354
      %v451 = vunpack.c.l.b16 %v355
      %v452 = vunpack.c.l.b16 %v356
      %v453 = vunpack.c.l.b16 %v357
      %v454 = vunpack.c.l.b16 %v358
      %v455 = vunpack.c.l.b16 %v359
      %v456 = vunpack.c.l.b16 %v360
      %v457 = vunpack.c.l.b16 %v361
      %v458 = vunpack.c.l.b16 %v362
      %v459 = vunpack.c.l.b16 %v363
      %v460 = vunpack.c.l.b16 %v364
      %v461 = vunpack.c.l.b16 %v365
      %v462 = vunpack.c.l.b16 %v366
      %v463 = vunpack.c.l.b16 %v367
      %v464 = vunpack.c.l.b16 %v368
      %v465 = vunpack.c.l.b16 %v369
      %v466 = vunpack.c.l.b16 %v370
      %v467 = vunpack.c.l.b16 %v371
      %v468 = vunpack.c.l.b16 %v372
      %v469 = vunpack.c.l.b16 %v373
      %v470 = vunpack.c.l.b16 %v374
      %v471 = vunpack.c.l.b16 %v375
      %v472 = vunpack.c.l.b16 %v376
      %v473 = vunpack.c.l.b16 %v377
      %v474 = vunpack.c.l.b16 %v378
      %v475 = vunpack.c.l.b16 %v379
      %v476 = vunpack.c.l.b16 %v380
      %v477 = vunpack.c.l.b16 %v381
      %v478 = vunpack.c.l.b16 %v382
      %v479 = vunpack.c.l.b16 %v383
      %v480 = vunpack.c.l.b16 %v384
      %v481 = vunpack.c.l.b16 %v385
      %v482 = vunpack.c.l.b16 %v386
      %v483 = vunpack.c.l.b16 %v387
      %v484 = vunpack.c.l.b16 %v388
      %v485 = vunpack.c.l.b16 %v389
      %v486 = vunpack.c.l.b16 %v390
      %v487 = vunpack.c.l.b16 %v391
      %v488 = vunpack.c.l.b16 %v392
      %v489 = vunpack.c.l.b16 %v393
      %v490 = vunpack.c.l.b16 %v394
      %v491 = vunpack.c.l.b16 %v395
      %v492 = vunpack.c.l.b16 %v396
      %v493 = vunpack.c.l.b16 %v397
      %v494 = vunpack.c.l.b16 %v398
      %v495 = vunpack.c.l.b16 %v399
      %v496 = vunpack.c.l.b16 %v400
      %v497 = vunpack.c.l.b16 %v401
      %v498 = vpack.c.b16 %v451, %v450
      %v499 = vpack.c.b16 %v452, %v452
      %v500 = vpack.c.b16 %v454, %v453
      %v501 = vpack.c.b16 %v455, %v455
      %v502 = vpack.c.b16 %v457, %v456
      %v503 = vpack.c.b16 %v458, %v458
      %v504 = vpack.c.b16 %v460, %v459
      %v505 = vpack.c.b16 %v461, %v461
      %v506 = vpack.c.b16 %v463, %v462
      %v507 = vpack.c.b16 %v464, %v464
      %v508 = vpack.c.b16 %v466, %v465
      %v509 = vpack.c.b16 %v467, %v467
      %v510 = vpack.c.b16 %v469, %v468
      %v511 = vpack.c.b16 %v470, %v470
      %v512 = vpack.c.b16 %v472, %v471
      %v513 = vpack.c.b16 %v473, %v473
      %v514 = vpack.c.b16 %v475, %v474
      %v515 = vpack.c.b16 %v476, %v476
      %v516 = vpack.c.b16 %v478, %v477
      %v517 = vpack.c.b16 %v479, %v479
      %v518 = vpack.c.b16 %v481, %v480
      %v519 = vpack.c.b16 %v482, %v482
      %v520 = vpack.c.b16 %v484, %v483
      %v521 = vpack.c.b16 %v485, %v485
      %v522 = vpack.c.b16 %v487, %v486
      %v523 = vpack.c.b16 %v488, %v488
      %v524 = vpack.c.b16 %v490, %v489
      %v525 = vpack.c.b16 %v491, %v491
      %v526 = vpack.c.b16 %v493, %v492
      %v527 = vpack.c.b16 %v494, %v494
      %v528 = vpack.c.b16 %v496, %v495
      %v529 = vpack.c.b16 %v497, %v497
      %vm530 = vsmask.f32 7424
      %v532 = vshrl.u32 %v498, 16
      %v534 = vshll.u32 %v498, 16
      %v536 = vrot.slane %v534, 1
      %v537 = vor.u32 %v532, %v536
      %v539 = vshll.u32 %v499, 16
      %v541 = vrot.slane %v539, 1
      %v542 = vsel %vm530, %v537, %v541
      %v544 = vshrl.u32 %v500, 16
      %v546 = vshll.u32 %v500, 16
      %v548 = vrot.slane %v546, 1
      %v549 = vor.u32 %v544, %v548
      %v551 = vshll.u32 %v501, 16
      %v553 = vrot.slane %v551, 1
      %v554 = vsel %vm530, %v549, %v553
      %v556 = vshrl.u32 %v502, 16
      %v558 = vshll.u32 %v502, 16
      %v560 = vrot.slane %v558, 1
      %v561 = vor.u32 %v556, %v560
      %v563 = vshll.u32 %v503, 16
      %v565 = vrot.slane %v563, 1
      %v566 = vsel %vm530, %v561, %v565
      %v568 = vshrl.u32 %v504, 16
      %v570 = vshll.u32 %v504, 16
      %v572 = vrot.slane %v570, 1
      %v573 = vor.u32 %v568, %v572
      %v575 = vshll.u32 %v505, 16
      %v577 = vrot.slane %v575, 1
      %v578 = vsel %vm530, %v573, %v577
      %v580 = vshrl.u32 %v506, 16
      %v582 = vshll.u32 %v506, 16
      %v584 = vrot.slane %v582, 1
      %v585 = vor.u32 %v580, %v584
      %v587 = vshll.u32 %v507, 16
      %v589 = vrot.slane %v587, 1
      %v590 = vsel %vm530, %v585, %v589
      %v592 = vshrl.u32 %v508, 16
      %v594 = vshll.u32 %v508, 16
      %v596 = vrot.slane %v594, 1
      %v597 = vor.u32 %v592, %v596
      %v599 = vshll.u32 %v509, 16
      %v601 = vrot.slane %v599, 1
      %v602 = vsel %vm530, %v597, %v601
      %v604 = vshrl.u32 %v510, 16
      %v606 = vshll.u32 %v510, 16
      %v608 = vrot.slane %v606, 1
      %v609 = vor.u32 %v604, %v608
      %v611 = vshll.u32 %v511, 16
      %v613 = vrot.slane %v611, 1
      %v614 = vsel %vm530, %v609, %v613
      %v616 = vshrl.u32 %v512, 16
      %v618 = vshll.u32 %v512, 16
      %v620 = vrot.slane %v618, 1
      %v621 = vor.u32 %v616, %v620
      %v623 = vshll.u32 %v513, 16
      %v625 = vrot.slane %v623, 1
      %v626 = vsel %vm530, %v621, %v625
      %v628 = vshrl.u32 %v514, 16
      %v630 = vshll.u32 %v514, 16
      %v632 = vrot.slane %v630, 1
      %v633 = vor.u32 %v628, %v632
      %v635 = vshll.u32 %v515, 16
      %v637 = vrot.slane %v635, 1
      %v638 = vsel %vm530, %v633, %v637
      %v640 = vshrl.u32 %v516, 16
      %v642 = vshll.u32 %v516, 16
      %v644 = vrot.slane %v642, 1
      %v645 = vor.u32 %v640, %v644
      %v647 = vshll.u32 %v517, 16
      %v649 = vrot.slane %v647, 1
      %v650 = vsel %vm530, %v645, %v649
      %v652 = vshrl.u32 %v518, 16
      %v654 = vshll.u32 %v518, 16
      %v656 = vrot.slane %v654, 1
      %v657 = vor.u32 %v652, %v656
      %v659 = vshll.u32 %v519, 16
      %v661 = vrot.slane %v659, 1
      %v662 = vsel %vm530, %v657, %v661
      %v664 = vshrl.u32 %v520, 16
      %v666 = vshll.u32 %v520, 16
      %v668 = vrot.slane %v666, 1
      %v669 = vor.u32 %v664, %v668
      %v671 = vshll.u32 %v521, 16
      %v673 = vrot.slane %v671, 1
      %v674 = vsel %vm530, %v669, %v673
      %v676 = vshrl.u32 %v522, 16
      %v678 = vshll.u32 %v522, 16
      %v680 = vrot.slane %v678, 1
      %v681 = vor.u32 %v676, %v680
      %v683 = vshll.u32 %v523, 16
      %v685 = vrot.slane %v683, 1
      %v686 = vsel %vm530, %v681, %v685
      %v688 = vshrl.u32 %v524, 16
      %v690 = vshll.u32 %v524, 16
      %v692 = vrot.slane %v690, 1
      %v693 = vor.u32 %v688, %v692
      %v695 = vshll.u32 %v525, 16
      %v697 = vrot.slane %v695, 1
      %v698 = vsel %vm530, %v693, %v697
      %v700 = vshrl.u32 %v526, 16
      %v702 = vshll.u32 %v526, 16
      %v704 = vrot.slane %v702, 1
      %v705 = vor.u32 %v700, %v704
      %v707 = vshll.u32 %v527, 16
      %v709 = vrot.slane %v707, 1
      %v710 = vsel %vm530, %v705, %v709
      %v712 = vshrl.u32 %v528, 16
      %v714 = vshll.u32 %v528, 16
      %v716 = vrot.slane %v714, 1
      %v717 = vor.u32 %v712, %v716
      %v719 = vshll.u32 %v529, 16
      %v721 = vrot.slane %v719, 1
      %v722 = vsel %vm530, %v717, %v721
      %723 = vrot.lane.b32.xlu0 %v542, 4
      %v724 = vpop.permute.xlu0 %723
      %725 = vrot.lane.b32.xlu0 %v554, 4
      %v726 = vpop.permute.xlu0 %725
      %727 = vrot.lane.b32.xlu0 %v566, 4
      %v728 = vpop.permute.xlu0 %727
      %729 = vrot.lane.b32.xlu0 %v578, 4
      %v730 = vpop.permute.xlu0 %729
      %731 = vrot.lane.b32.xlu0 %v590, 4
      %v732 = vpop.permute.xlu0 %731
      %733 = vrot.lane.b32.xlu0 %v602, 4
      %v734 = vpop.permute.xlu0 %733
      %735 = vrot.lane.b32.xlu0 %v614, 4
      %v736 = vpop.permute.xlu0 %735
      %737 = vrot.lane.b32.xlu0 %v626, 4
      %v738 = vpop.permute.xlu0 %737
      %739 = vrot.lane.b32.xlu0 %v638, 4
      %v740 = vpop.permute.xlu0 %739
      %741 = vrot.lane.b32.xlu0 %v650, 4
      %v742 = vpop.permute.xlu0 %741
      %743 = vrot.lane.b32.xlu0 %v662, 4
      %v744 = vpop.permute.xlu0 %743
      %745 = vrot.lane.b32.xlu0 %v674, 4
      %v746 = vpop.permute.xlu0 %745
      %747 = vrot.lane.b32.xlu0 %v686, 4
      %v748 = vpop.permute.xlu0 %747
      %749 = vrot.lane.b32.xlu0 %v698, 4
      %v750 = vpop.permute.xlu0 %749
      %751 = vrot.lane.b32.xlu0 %v710, 4
      %v752 = vpop.permute.xlu0 %751
      %753 = vrot.lane.b32.xlu0 %v722, 4
      %v754 = vpop.permute.xlu0 %753
      %vm771 = vcmask 64544
      %772 = vst.msk [vmem:[#allocation2] sm:$0xff] %vm771, %v724
      %773 = vst.msk [vmem:[#allocation2 + $0x8] sm:$0xff] %vm771, %v726
      %774 = vst.msk [vmem:[#allocation2 + $0x10] sm:$0xff] %vm771, %v728
      %775 = vst.msk [vmem:[#allocation2 + $0x18] sm:$0xff] %vm771, %v730
      %776 = vst.msk [vmem:[#allocation2 + $0x20] sm:$0xff] %vm771, %v732
      %777 = vst.msk [vmem:[#allocation2 + $0x28] sm:$0xff] %vm771, %v734
      %778 = vst.msk [vmem:[#allocation2 + $0x30] sm:$0xff] %vm771, %v736
      %779 = vst.msk [vmem:[#allocation2 + $0x38] sm:$0xff] %vm771, %v738
      %780 = vst.msk [vmem:[#allocation2 + $0x40] sm:$0xff] %vm771, %v740
      %781 = vst.msk [vmem:[#allocation2 + $0x48] sm:$0xff] %vm771, %v742
      %782 = vst.msk [vmem:[#allocation2 + $0x50] sm:$0xff] %vm771, %v744
      %783 = vst.msk [vmem:[#allocation2 + $0x58] sm:$0xff] %vm771, %v746
      %784 = vst.msk [vmem:[#allocation2 + $0x60] sm:$0xff] %vm771, %v748
      %785 = vst.msk [vmem:[#allocation2 + $0x68] sm:$0xff] %vm771, %v750
      %786 = vst.msk [vmem:[#allocation2 + $0x70] sm:$0xff] %vm771, %v752
      %787 = vst.msk [vmem:[#allocation2 + $0x78] sm:$0xff] %vm771, %v754
      %v788 = vld [vmem:[%s208] sm:$0xe]
      %v789 = vld [vmem:[%s208 + $0x4] sm:$0xf]
      %v790 = vld [vmem:[%s208 + $0x8] sm:$0x1]
      %v791 = vld [vmem:[%s208 + $0xc] sm:$0xe]
      %v792 = vld [vmem:[%s208 + $0x10] sm:$0xf]
      %v793 = vld [vmem:[%s208 + $0x14] sm:$0x1]
      %v794 = vld [vmem:[%s208 + $0x18] sm:$0xe]
      %v795 = vld [vmem:[%s208 + $0x1c] sm:$0xf]
      %v796 = vld [vmem:[%s208 + $0x20] sm:$0x1]
      %v797 = vld [vmem:[%s208 + $0x24] sm:$0xe]
      %v798 = vld [vmem:[%s208 + $0x28] sm:$0xf]
      %v799 = vld [vmem:[%s208 + $0x2c] sm:$0x1]
      %v800 = vld [vmem:[%s208 + $0x30] sm:$0xe]
      %v801 = vld [vmem:[%s208 + $0x34] sm:$0xf]
      %v802 = vld [vmem:[%s208 + $0x38] sm:$0x1]
      %v803 = vld [vmem:[%s208 + $0x3c] sm:$0xe]
      %v804 = vld [vmem:[%s208 + $0x40] sm:$0xf]
      %v805 = vld [vmem:[%s208 + $0x44] sm:$0x1]
      %v806 = vld [vmem:[%s208 + $0x48] sm:$0xe]
      %v807 = vld [vmem:[%s208 + $0x4c] sm:$0xf]
      %v808 = vld [vmem:[%s208 + $0x50] sm:$0x1]
      %v809 = vld [vmem:[%s208 + $0x54] sm:$0xe]
      %v810 = vld [vmem:[%s208 + $0x58] sm:$0xf]
      %v811 = vld [vmem:[%s208 + $0x5c] sm:$0x1]
      %v812 = vld [vmem:[%s208 + $0x60] sm:$0xe]
      %v813 = vld [vmem:[%s208 + $0x64] sm:$0xf]
      %v814 = vld [vmem:[%s208 + $0x68] sm:$0x1]
      %v815 = vld [vmem:[%s208 + $0x6c] sm:$0xe]
      %v816 = vld [vmem:[%s208 + $0x70] sm:$0xf]
      %v817 = vld [vmem:[%s208 + $0x74] sm:$0x1]
      %v818 = vld [vmem:[%s208 + $0x78] sm:$0xe]
      %v819 = vld [vmem:[%s208 + $0x7c] sm:$0xf]
      %v820 = vld [vmem:[%s208 + $0x80] sm:$0x1]
      %v821 = vld [vmem:[%s208 + $0x84] sm:$0xe]
      %v822 = vld [vmem:[%s208 + $0x88] sm:$0xf]
      %v823 = vld [vmem:[%s208 + $0x8c] sm:$0x1]
      %v824 = vld [vmem:[%s208 + $0x90] sm:$0xe]
      %v825 = vld [vmem:[%s208 + $0x94] sm:$0xf]
      %v826 = vld [vmem:[%s208 + $0x98] sm:$0x1]
      %v827 = vld [vmem:[%s208 + $0x9c] sm:$0xe]
      %v828 = vld [vmem:[%s208 + $0xa0] sm:$0xf]
      %v829 = vld [vmem:[%s208 + $0xa4] sm:$0x1]
      %v830 = vld [vmem:[%s208 + $0xa8] sm:$0xe]
      %v831 = vld [vmem:[%s208 + $0xac] sm:$0xf]
      %v832 = vld [vmem:[%s208 + $0xb0] sm:$0x1]
      %v833 = vld [vmem:[%s208 + $0xb4] sm:$0xe]
      %v834 = vld [vmem:[%s208 + $0xb8] sm:$0xf]
      %v835 = vld [vmem:[%s208 + $0xbc] sm:$0x1]
      %v884 = vunpack.c.l.b16 %v788
      %v885 = vunpack.c.l.b16 %v789
      %v886 = vunpack.c.l.b16 %v790
      %v887 = vunpack.c.l.b16 %v791
      %v888 = vunpack.c.l.b16 %v792
      %v889 = vunpack.c.l.b16 %v793
      %v890 = vunpack.c.l.b16 %v794
      %v891 = vunpack.c.l.b16 %v795
      %v892 = vunpack.c.l.b16 %v796
      %v893 = vunpack.c.l.b16 %v797
      %v894 = vunpack.c.l.b16 %v798
      %v895 = vunpack.c.l.b16 %v799
      %v896 = vunpack.c.l.b16 %v800
      %v897 = vunpack.c.l.b16 %v801
      %v898 = vunpack.c.l.b16 %v802
      %v899 = vunpack.c.l.b16 %v803
      %v900 = vunpack.c.l.b16 %v804
      %v901 = vunpack.c.l.b16 %v805
      %v902 = vunpack.c.l.b16 %v806
      %v903 = vunpack.c.l.b16 %v807
      %v904 = vunpack.c.l.b16 %v808
      %v905 = vunpack.c.l.b16 %v809
      %v906 = vunpack.c.l.b16 %v810
      %v907 = vunpack.c.l.b16 %v811
      %v908 = vunpack.c.l.b16 %v812
      %v909 = vunpack.c.l.b16 %v813
      %v910 = vunpack.c.l.b16 %v814
      %v911 = vunpack.c.l.b16 %v815
      %v912 = vunpack.c.l.b16 %v816
      %v913 = vunpack.c.l.b16 %v817
      %v914 = vunpack.c.l.b16 %v818
      %v915 = vunpack.c.l.b16 %v819
      %v916 = vunpack.c.l.b16 %v820
      %v917 = vunpack.c.l.b16 %v821
      %v918 = vunpack.c.l.b16 %v822
      %v919 = vunpack.c.l.b16 %v823
      %v920 = vunpack.c.l.b16 %v824
      %v921 = vunpack.c.l.b16 %v825
      %v922 = vunpack.c.l.b16 %v826
      %v923 = vunpack.c.l.b16 %v827
      %v924 = vunpack.c.l.b16 %v828
      %v925 = vunpack.c.l.b16 %v829
      %v926 = vunpack.c.l.b16 %v830
      %v927 = vunpack.c.l.b16 %v831
      %v928 = vunpack.c.l.b16 %v832
      %v929 = vunpack.c.l.b16 %v833
      %v930 = vunpack.c.l.b16 %v834
      %v931 = vunpack.c.l.b16 %v835
      %v932 = vpack.c.b16 %v885, %v884
      %v933 = vpack.c.b16 %v886, %v886
      %v934 = vpack.c.b16 %v888, %v887
      %v935 = vpack.c.b16 %v889, %v889
      %v936 = vpack.c.b16 %v891, %v890
      %v937 = vpack.c.b16 %v892, %v892
      %v938 = vpack.c.b16 %v894, %v893
      %v939 = vpack.c.b16 %v895, %v895
      %v940 = vpack.c.b16 %v897, %v896
      %v941 = vpack.c.b16 %v898, %v898
      %v942 = vpack.c.b16 %v900, %v899
      %v943 = vpack.c.b16 %v901, %v901
      %v944 = vpack.c.b16 %v903, %v902
      %v945 = vpack.c.b16 %v904, %v904
      %v946 = vpack.c.b16 %v906, %v905
      %v947 = vpack.c.b16 %v907, %v907
      %v948 = vpack.c.b16 %v909, %v908
      %v949 = vpack.c.b16 %v910, %v910
      %v950 = vpack.c.b16 %v912, %v911
      %v951 = vpack.c.b16 %v913, %v913
      %v952 = vpack.c.b16 %v915, %v914
      %v953 = vpack.c.b16 %v916, %v916
      %v954 = vpack.c.b16 %v918, %v917
      %v955 = vpack.c.b16 %v919, %v919
      %v956 = vpack.c.b16 %v921, %v920
      %v957 = vpack.c.b16 %v922, %v922
      %v958 = vpack.c.b16 %v924, %v923
      %v959 = vpack.c.b16 %v925, %v925
      %v960 = vpack.c.b16 %v927, %v926
      %v961 = vpack.c.b16 %v928, %v928
      %v962 = vpack.c.b16 %v930, %v929
      %v963 = vpack.c.b16 %v931, %v931
      %vm964 = vcmask 1046528
      %v965 = vrot.slane %v932, 1
      %v966 = vrot.slane %v933, 1
      %v967 = vsel %vm964, %v965, %v966
      %v968 = vrot.slane %v934, 1
      %v969 = vrot.slane %v935, 1
      %v970 = vsel %vm964, %v968, %v969
      %v971 = vrot.slane %v936, 1
      %v972 = vrot.slane %v937, 1
      %v973 = vsel %vm964, %v971, %v972
      %v974 = vrot.slane %v938, 1
      %v975 = vrot.slane %v939, 1
      %v976 = vsel %vm964, %v974, %v975
      %v977 = vrot.slane %v940, 1
      %v978 = vrot.slane %v941, 1
      %v979 = vsel %vm964, %v977, %v978
      %v980 = vrot.slane %v942, 1
      %v981 = vrot.slane %v943, 1
      %v982 = vsel %vm964, %v980, %v981
      %v983 = vrot.slane %v944, 1
      %v984 = vrot.slane %v945, 1
      %v985 = vsel %vm964, %v983, %v984
      %v986 = vrot.slane %v946, 1
      %v987 = vrot.slane %v947, 1
      %v988 = vsel %vm964, %v986, %v987
      %v989 = vrot.slane %v948, 1
      %v990 = vrot.slane %v949, 1
      %v991 = vsel %vm964, %v989, %v990
      %v992 = vrot.slane %v950, 1
      %v993 = vrot.slane %v951, 1
      %v994 = vsel %vm964, %v992, %v993
      %v995 = vrot.slane %v952, 1
      %v996 = vrot.slane %v953, 1
      %v997 = vsel %vm964, %v995, %v996
      %v998 = vrot.slane %v954, 1
      %v999 = vrot.slane %v955, 1
      %v1000 = vsel %vm964, %v998, %v999
      %v1001 = vrot.slane %v956, 1
      %v1002 = vrot.slane %v957, 1
      %v1003 = vsel %vm964, %v1001, %v1002
      %v1004 = vrot.slane %v958, 1
      %v1005 = vrot.slane %v959, 1
      %v1006 = vsel %vm964, %v1004, %v1005
      %v1007 = vrot.slane %v960, 1
      %v1008 = vrot.slane %v961, 1
      %v1009 = vsel %vm964, %v1007, %v1008
      %v1010 = vrot.slane %v962, 1
      %v1011 = vrot.slane %v963, 1
      %v1012 = vsel %vm964, %v1010, %v1011
      %1013 = vrot.lane.b32.xlu0 %v967, 8
      %v1014 = vpop.permute.xlu0 %1013
      %1015 = vrot.lane.b32.xlu0 %v970, 8
      %v1016 = vpop.permute.xlu0 %1015
      %1017 = vrot.lane.b32.xlu0 %v973, 8
      %v1018 = vpop.permute.xlu0 %1017
      %1019 = vrot.lane.b32.xlu0 %v976, 8
      %v1020 = vpop.permute.xlu0 %1019
      %1021 = vrot.lane.b32.xlu0 %v979, 8
      %v1022 = vpop.permute.xlu0 %1021
      %1023 = vrot.lane.b32.xlu0 %v982, 8
      %v1024 = vpop.permute.xlu0 %1023
      %1025 = vrot.lane.b32.xlu0 %v985, 8
      %v1026 = vpop.permute.xlu0 %1025
      %1027 = vrot.lane.b32.xlu0 %v988, 8
      %v1028 = vpop.permute.xlu0 %1027
      %1029 = vrot.lane.b32.xlu0 %v991, 8
      %v1030 = vpop.permute.xlu0 %1029
      %1031 = vrot.lane.b32.xlu0 %v994, 8
      %v1032 = vpop.permute.xlu0 %1031
      %1033 = vrot.lane.b32.xlu0 %v997, 8
      %v1034 = vpop.permute.xlu0 %1033
      %1035 = vrot.lane.b32.xlu0 %v1000, 8
      %v1036 = vpop.permute.xlu0 %1035
      %1037 = vrot.lane.b32.xlu0 %v1003, 8
      %v1038 = vpop.permute.xlu0 %1037
      %1039 = vrot.lane.b32.xlu0 %v1006, 8
      %v1040 = vpop.permute.xlu0 %1039
      %1041 = vrot.lane.b32.xlu0 %v1009, 8
      %v1042 = vpop.permute.xlu0 %1041
      %1043 = vrot.lane.b32.xlu0 %v1012, 8
      %v1044 = vpop.permute.xlu0 %1043
      %vm1061 = vcmask 97344
      %1062 = vst.msk [vmem:[#allocation2] sm:$0xff] %vm1061, %v1014
      %1063 = vst.msk [vmem:[#allocation2 + $0x8] sm:$0xff] %vm1061, %v1016
      %1064 = vst.msk [vmem:[#allocation2 + $0x10] sm:$0xff] %vm1061, %v1018
      %1065 = vst.msk [vmem:[#allocation2 + $0x18] sm:$0xff] %vm1061, %v1020
      %1066 = vst.msk [vmem:[#allocation2 + $0x20] sm:$0xff] %vm1061, %v1022
      %1067 = vst.msk [vmem:[#allocation2 + $0x28] sm:$0xff] %vm1061, %v1024
      %1068 = vst.msk [vmem:[#allocation2 + $0x30] sm:$0xff] %vm1061, %v1026
      %1069 = vst.msk [vmem:[#allocation2 + $0x38] sm:$0xff] %vm1061, %v1028
      %1070 = vst.msk [vmem:[#allocation2 + $0x40] sm:$0xff] %vm1061, %v1030
      %1071 = vst.msk [vmem:[#allocation2 + $0x48] sm:$0xff] %vm1061, %v1032
      %1072 = vst.msk [vmem:[#allocation2 + $0x50] sm:$0xff] %vm1061, %v1034
      %1073 = vst.msk [vmem:[#allocation2 + $0x58] sm:$0xff] %vm1061, %v1036
      %1074 = vst.msk [vmem:[#allocation2 + $0x60] sm:$0xff] %vm1061, %v1038
      %1075 = vst.msk [vmem:[#allocation2 + $0x68] sm:$0xff] %vm1061, %v1040
      %1076 = vst.msk [vmem:[#allocation2 + $0x70] sm:$0xff] %vm1061, %v1042
      %1077 = vst.msk [vmem:[#allocation2 + $0x78] sm:$0xff] %vm1061, %v1044
      %s1078 = sadd.s32 %s205, 1
      %s1079 = smul.u32 %s1078, 3
      %s1080 = smul.addr %s1079, 4
      %s1081 = scalar_lea.vmem %s191, %s1080
      %v1082 = vld [vmem:[%s1081] sm:$0xf]
      %v1083 = vld [vmem:[%s1081 + $0x4] sm:$0xf]
      %v1084 = vld [vmem:[%s1081 + $0xc] sm:$0xf]
      %v1085 = vld [vmem:[%s1081 + $0x10] sm:$0xf]
      %v1086 = vld [vmem:[%s1081 + $0x18] sm:$0xf]
      %v1087 = vld [vmem:[%s1081 + $0x1c] sm:$0xf]
      %v1088 = vld [vmem:[%s1081 + $0x24] sm:$0xf]
      %v1089 = vld [vmem:[%s1081 + $0x28] sm:$0xf]
      %v1090 = vld [vmem:[%s1081 + $0x30] sm:$0xf]
      %v1091 = vld [vmem:[%s1081 + $0x34] sm:$0xf]
      %v1092 = vld [vmem:[%s1081 + $0x3c] sm:$0xf]
      %v1093 = vld [vmem:[%s1081 + $0x40] sm:$0xf]
      %v1094 = vld [vmem:[%s1081 + $0x48] sm:$0xf]
      %v1095 = vld [vmem:[%s1081 + $0x4c] sm:$0xf]
      %v1096 = vld [vmem:[%s1081 + $0x54] sm:$0xf]
      %v1097 = vld [vmem:[%s1081 + $0x58] sm:$0xf]
      %v1098 = vld [vmem:[%s1081 + $0x60] sm:$0xf]
      %v1099 = vld [vmem:[%s1081 + $0x64] sm:$0xf]
      %v1100 = vld [vmem:[%s1081 + $0x6c] sm:$0xf]
      %v1101 = vld [vmem:[%s1081 + $0x70] sm:$0xf]
      %v1102 = vld [vmem:[%s1081 + $0x78] sm:$0xf]
      %v1103 = vld [vmem:[%s1081 + $0x7c] sm:$0xf]
      %v1104 = vld [vmem:[%s1081 + $0x84] sm:$0xf]
      %v1105 = vld [vmem:[%s1081 + $0x88] sm:$0xf]
      %v1106 = vld [vmem:[%s1081 + $0x90] sm:$0xf]
      %v1107 = vld [vmem:[%s1081 + $0x94] sm:$0xf]
      %v1108 = vld [vmem:[%s1081 + $0x9c] sm:$0xf]
      %v1109 = vld [vmem:[%s1081 + $0xa0] sm:$0xf]
      %v1110 = vld [vmem:[%s1081 + $0xa8] sm:$0xf]
      %v1111 = vld [vmem:[%s1081 + $0xac] sm:$0xf]
      %v1112 = vld [vmem:[%s1081 + $0xb4] sm:$0xf]
      %v1113 = vld [vmem:[%s1081 + $0xb8] sm:$0xf]
      %v1146 = vunpack.c.l.b16 %v1082
      %v1147 = vunpack.c.l.b16 %v1083
      %v1148 = vunpack.c.l.b16 %v1084
      %v1149 = vunpack.c.l.b16 %v1085
      %v1150 = vunpack.c.l.b16 %v1086
      %v1151 = vunpack.c.l.b16 %v1087
      %v1152 = vunpack.c.l.b16 %v1088
      %v1153 = vunpack.c.l.b16 %v1089
      %v1154 = vunpack.c.l.b16 %v1090
      %v1155 = vunpack.c.l.b16 %v1091
      %v1156 = vunpack.c.l.b16 %v1092
      %v1157 = vunpack.c.l.b16 %v1093
      %v1158 = vunpack.c.l.b16 %v1094
      %v1159 = vunpack.c.l.b16 %v1095
      %v1160 = vunpack.c.l.b16 %v1096
      %v1161 = vunpack.c.l.b16 %v1097
      %v1162 = vunpack.c.l.b16 %v1098
      %v1163 = vunpack.c.l.b16 %v1099
      %v1164 = vunpack.c.l.b16 %v1100
      %v1165 = vunpack.c.l.b16 %v1101
      %v1166 = vunpack.c.l.b16 %v1102
      %v1167 = vunpack.c.l.b16 %v1103
      %v1168 = vunpack.c.l.b16 %v1104
      %v1169 = vunpack.c.l.b16 %v1105
      %v1170 = vunpack.c.l.b16 %v1106
      %v1171 = vunpack.c.l.b16 %v1107
      %v1172 = vunpack.c.l.b16 %v1108
      %v1173 = vunpack.c.l.b16 %v1109
      %v1174 = vunpack.c.l.b16 %v1110
      %v1175 = vunpack.c.l.b16 %v1111
      %v1176 = vunpack.c.l.b16 %v1112
      %v1177 = vunpack.c.l.b16 %v1113
      %v1178 = vpack.c.b16 %v1147, %v1146
      %v1179 = vpack.c.b16 %v1149, %v1148
      %v1180 = vpack.c.b16 %v1151, %v1150
      %v1181 = vpack.c.b16 %v1153, %v1152
      %v1182 = vpack.c.b16 %v1155, %v1154
      %v1183 = vpack.c.b16 %v1157, %v1156
      %v1184 = vpack.c.b16 %v1159, %v1158
      %v1185 = vpack.c.b16 %v1161, %v1160
      %v1186 = vpack.c.b16 %v1163, %v1162
      %v1187 = vpack.c.b16 %v1165, %v1164
      %v1188 = vpack.c.b16 %v1167, %v1166
      %v1189 = vpack.c.b16 %v1169, %v1168
      %v1190 = vpack.c.b16 %v1171, %v1170
      %v1191 = vpack.c.b16 %v1173, %v1172
      %v1192 = vpack.c.b16 %v1175, %v1174
      %v1193 = vpack.c.b16 %v1177, %v1176
      %1194 = vrot.lane.b32.xlu0 %v1178, 12
      %v1195 = vpop.permute.xlu0 %1194
      %1196 = vrot.lane.b32.xlu0 %v1179, 12
      %v1197 = vpop.permute.xlu0 %1196
      %1198 = vrot.lane.b32.xlu0 %v1180, 12
      %v1199 = vpop.permute.xlu0 %1198
      %1200 = vrot.lane.b32.xlu0 %v1181, 12
      %v1201 = vpop.permute.xlu0 %1200
      %1202 = vrot.lane.b32.xlu0 %v1182, 12
      %v1203 = vpop.permute.xlu0 %1202
      %1204 = vrot.lane.b32.xlu0 %v1183, 12
      %v1205 = vpop.permute.xlu0 %1204
      %1206 = vrot.lane.b32.xlu0 %v1184, 12
      %v1207 = vpop.permute.xlu0 %1206
      %1208 = vrot.lane.b32.xlu0 %v1185, 12
      %v1209 = vpop.permute.xlu0 %1208
      %1210 = vrot.lane.b32.xlu0 %v1186, 12
      %v1211 = vpop.permute.xlu0 %1210
      %1212 = vrot.lane.b32.xlu0 %v1187, 12
      %v1213 = vpop.permute.xlu0 %1212
      %1214 = vrot.lane.b32.xlu0 %v1188, 12
      %v1215 = vpop.permute.xlu0 %1214
      %1216 = vrot.lane.b32.xlu0 %v1189, 12
      %v1217 = vpop.permute.xlu0 %1216
      %1218 = vrot.lane.b32.xlu0 %v1190, 12
      %v1219 = vpop.permute.xlu0 %1218
      %1220 = vrot.lane.b32.xlu0 %v1191, 12
      %v1221 = vpop.permute.xlu0 %1220
      %1222 = vrot.lane.b32.xlu0 %v1192, 12
      %v1223 = vpop.permute.xlu0 %1222
      %1224 = vrot.lane.b32.xlu0 %v1193, 12
      %v1225 = vpop.permute.xlu0 %1224
      %vm1242 = vcmask 130144
      %1243 = vst.msk [vmem:[#allocation2] sm:$0xff] %vm1242, %v1195
      %1244 = vst.msk [vmem:[#allocation2 + $0x8] sm:$0xff] %vm1242, %v1197
      %1245 = vst.msk [vmem:[#allocation2 + $0x10] sm:$0xff] %vm1242, %v1199
      %1246 = vst.msk [vmem:[#allocation2 + $0x18] sm:$0xff] %vm1242, %v1201
      %1247 = vst.msk [vmem:[#allocation2 + $0x20] sm:$0xff] %vm1242, %v1203
      %1248 = vst.msk [vmem:[#allocation2 + $0x28] sm:$0xff] %vm1242, %v1205
      %1249 = vst.msk [vmem:[#allocation2 + $0x30] sm:$0xff] %vm1242, %v1207
      %1250 = vst.msk [vmem:[#allocation2 + $0x38] sm:$0xff] %vm1242, %v1209
      %1251 = vst.msk [vmem:[#allocation2 + $0x40] sm:$0xff] %vm1242, %v1211
      %1252 = vst.msk [vmem:[#allocation2 + $0x48] sm:$0xff] %vm1242, %v1213
      %1253 = vst.msk [vmem:[#allocation2 + $0x50] sm:$0xff] %vm1242, %v1215
      %1254 = vst.msk [vmem:[#allocation2 + $0x58] sm:$0xff] %vm1242, %v1217
      %1255 = vst.msk [vmem:[#allocation2 + $0x60] sm:$0xff] %vm1242, %v1219
      %1256 = vst.msk [vmem:[#allocation2 + $0x68] sm:$0xff] %vm1242, %v1221
      %1257 = vst.msk [vmem:[#allocation2 + $0x70] sm:$0xff] %vm1242, %v1223
      %1258 = vst.msk [vmem:[#allocation2 + $0x78] sm:$0xff] %vm1242, %v1225
      %v1259 = vld [vmem:[%s1081] sm:$0xf]
      %v1260 = vld [vmem:[%s1081 + $0x4] sm:$0xf]
      %v1261 = vld [vmem:[%s1081 + $0x8] sm:$0x1]
      %v1262 = vld [vmem:[%s1081 + $0xc] sm:$0xf]
      %v1263 = vld [vmem:[%s1081 + $0x10] sm:$0xf]
      %v1264 = vld [vmem:[%s1081 + $0x14] sm:$0x1]
      %v1265 = vld [vmem:[%s1081 + $0x18] sm:$0xf]
      %v1266 = vld [vmem:[%s1081 + $0x1c] sm:$0xf]
      %v1267 = vld [vmem:[%s1081 + $0x20] sm:$0x1]
      %v1268 = vld [vmem:[%s1081 + $0x24] sm:$0xf]
      %v1269 = vld [vmem:[%s1081 + $0x28] sm:$0xf]
      %v1270 = vld [vmem:[%s1081 + $0x2c] sm:$0x1]
      %v1271 = vld [vmem:[%s1081 + $0x30] sm:$0xf]
      %v1272 = vld [vmem:[%s1081 + $0x34] sm:$0xf]
      %v1273 = vld [vmem:[%s1081 + $0x38] sm:$0x1]
      %v1274 = vld [vmem:[%s1081 + $0x3c] sm:$0xf]
      %v1275 = vld [vmem:[%s1081 + $0x40] sm:$0xf]
      %v1276 = vld [vmem:[%s1081 + $0x44] sm:$0x1]
      %v1277 = vld [vmem:[%s1081 + $0x48] sm:$0xf]
      %v1278 = vld [vmem:[%s1081 + $0x4c] sm:$0xf]
      %v1279 = vld [vmem:[%s1081 + $0x50] sm:$0x1]
      %v1280 = vld [vmem:[%s1081 + $0x54] sm:$0xf]
      %v1281 = vld [vmem:[%s1081 + $0x58] sm:$0xf]
      %v1282 = vld [vmem:[%s1081 + $0x5c] sm:$0x1]
      %v1283 = vld [vmem:[%s1081 + $0x60] sm:$0xf]
      %v1284 = vld [vmem:[%s1081 + $0x64] sm:$0xf]
      %v1285 = vld [vmem:[%s1081 + $0x68] sm:$0x1]
      %v1286 = vld [vmem:[%s1081 + $0x6c] sm:$0xf]
      %v1287 = vld [vmem:[%s1081 + $0x70] sm:$0xf]
      %v1288 = vld [vmem:[%s1081 + $0x74] sm:$0x1]
      %v1289 = vld [vmem:[%s1081 + $0x78] sm:$0xf]
      %v1290 = vld [vmem:[%s1081 + $0x7c] sm:$0xf]
      %v1291 = vld [vmem:[%s1081 + $0x80] sm:$0x1]
      %v1292 = vld [vmem:[%s1081 + $0x84] sm:$0xf]
      %v1293 = vld [vmem:[%s1081 + $0x88] sm:$0xf]
      %v1294 = vld [vmem:[%s1081 + $0x8c] sm:$0x1]
      %v1295 = vld [vmem:[%s1081 + $0x90] sm:$0xf]
      %v1296 = vld [vmem:[%s1081 + $0x94] sm:$0xf]
      %v1297 = vld [vmem:[%s1081 + $0x98] sm:$0x1]
      %v1298 = vld [vmem:[%s1081 + $0x9c] sm:$0xf]
      %v1299 = vld [vmem:[%s1081 + $0xa0] sm:$0xf]
      %v1300 = vld [vmem:[%s1081 + $0xa4] sm:$0x1]
      %v1301 = vld [vmem:[%s1081 + $0xa8] sm:$0xf]
      %v1302 = vld [vmem:[%s1081 + $0xac] sm:$0xf]
      %v1303 = vld [vmem:[%s1081 + $0xb0] sm:$0x1]
      %v1304 = vld [vmem:[%s1081 + $0xb4] sm:$0xf]
      %v1305 = vld [vmem:[%s1081 + $0xb8] sm:$0xf]
      %v1306 = vld [vmem:[%s1081 + $0xbc] sm:$0x1]
      %v1355 = vunpack.c.l.b16 %v1259
      %v1356 = vunpack.c.l.b16 %v1260
      %v1357 = vunpack.c.l.b16 %v1261
      %v1358 = vunpack.c.l.b16 %v1262
      %v1359 = vunpack.c.l.b16 %v1263
      %v1360 = vunpack.c.l.b16 %v1264
      %v1361 = vunpack.c.l.b16 %v1265
      %v1362 = vunpack.c.l.b16 %v1266
      %v1363 = vunpack.c.l.b16 %v1267
      %v1364 = vunpack.c.l.b16 %v1268
      %v1365 = vunpack.c.l.b16 %v1269
      %v1366 = vunpack.c.l.b16 %v1270
      %v1367 = vunpack.c.l.b16 %v1271
      %v1368 = vunpack.c.l.b16 %v1272
      %v1369 = vunpack.c.l.b16 %v1273
      %v1370 = vunpack.c.l.b16 %v1274
      %v1371 = vunpack.c.l.b16 %v1275
      %v1372 = vunpack.c.l.b16 %v1276
      %v1373 = vunpack.c.l.b16 %v1277
      %v1374 = vunpack.c.l.b16 %v1278
      %v1375 = vunpack.c.l.b16 %v1279
      %v1376 = vunpack.c.l.b16 %v1280
      %v1377 = vunpack.c.l.b16 %v1281
      %v1378 = vunpack.c.l.b16 %v1282
      %v1379 = vunpack.c.l.b16 %v1283
      %v1380 = vunpack.c.l.b16 %v1284
      %v1381 = vunpack.c.l.b16 %v1285
      %v1382 = vunpack.c.l.b16 %v1286
      %v1383 = vunpack.c.l.b16 %v1287
      %v1384 = vunpack.c.l.b16 %v1288
      %v1385 = vunpack.c.l.b16 %v1289
      %v1386 = vunpack.c.l.b16 %v1290
      %v1387 = vunpack.c.l.b16 %v1291
      %v1388 = vunpack.c.l.b16 %v1292
      %v1389 = vunpack.c.l.b16 %v1293
      %v1390 = vunpack.c.l.b16 %v1294
      %v1391 = vunpack.c.l.b16 %v1295
      %v1392 = vunpack.c.l.b16 %v1296
      %v1393 = vunpack.c.l.b16 %v1297
      %v1394 = vunpack.c.l.b16 %v1298
      %v1395 = vunpack.c.l.b16 %v1299
      %v1396 = vunpack.c.l.b16 %v1300
      %v1397 = vunpack.c.l.b16 %v1301
      %v1398 = vunpack.c.l.b16 %v1302
      %v1399 = vunpack.c.l.b16 %v1303
      %v1400 = vunpack.c.l.b16 %v1304
      %v1401 = vunpack.c.l.b16 %v1305
      %v1402 = vunpack.c.l.b16 %v1306
      %v1403 = vpack.c.b16 %v1356, %v1355
      %v1404 = vpack.c.b16 %v1357, %v1357
      %v1405 = vpack.c.b16 %v1359, %v1358
      %v1406 = vpack.c.b16 %v1360, %v1360
      %v1407 = vpack.c.b16 %v1362, %v1361
      %v1408 = vpack.c.b16 %v1363, %v1363
      %v1409 = vpack.c.b16 %v1365, %v1364
      %v1410 = vpack.c.b16 %v1366, %v1366
      %v1411 = vpack.c.b16 %v1368, %v1367
      %v1412 = vpack.c.b16 %v1369, %v1369
      %v1413 = vpack.c.b16 %v1371, %v1370
      %v1414 = vpack.c.b16 %v1372, %v1372
      %v1415 = vpack.c.b16 %v1374, %v1373
      %v1416 = vpack.c.b16 %v1375, %v1375
      %v1417 = vpack.c.b16 %v1377, %v1376
      %v1418 = vpack.c.b16 %v1378, %v1378
      %v1419 = vpack.c.b16 %v1380, %v1379
      %v1420 = vpack.c.b16 %v1381, %v1381
      %v1421 = vpack.c.b16 %v1383, %v1382
      %v1422 = vpack.c.b16 %v1384, %v1384
      %v1423 = vpack.c.b16 %v1386, %v1385
      %v1424 = vpack.c.b16 %v1387, %v1387
      %v1425 = vpack.c.b16 %v1389, %v1388
      %v1426 = vpack.c.b16 %v1390, %v1390
      %v1427 = vpack.c.b16 %v1392, %v1391
      %v1428 = vpack.c.b16 %v1393, %v1393
      %v1429 = vpack.c.b16 %v1395, %v1394
      %v1430 = vpack.c.b16 %v1396, %v1396
      %v1431 = vpack.c.b16 %v1398, %v1397
      %v1432 = vpack.c.b16 %v1399, %v1399
      %v1433 = vpack.c.b16 %v1401, %v1400
      %v1434 = vpack.c.b16 %v1402, %v1402
      %v1436 = vshrl.u32 %v1403, 16
      %v1438 = vshll.u32 %v1403, 16
      %v1440 = vrot.slane %v1438, 1
      %v1441 = vor.u32 %v1436, %v1440
      %v1443 = vshll.u32 %v1404, 16
      %v1445 = vrot.slane %v1443, 1
      %v1446 = vsel %vm530, %v1441, %v1445
      %v1448 = vshrl.u32 %v1405, 16
      %v1450 = vshll.u32 %v1405, 16
      %v1452 = vrot.slane %v1450, 1
      %v1453 = vor.u32 %v1448, %v1452
      %v1455 = vshll.u32 %v1406, 16
      %v1457 = vrot.slane %v1455, 1
      %v1458 = vsel %vm530, %v1453, %v1457
      %v1460 = vshrl.u32 %v1407, 16
      %v1462 = vshll.u32 %v1407, 16
      %v1464 = vrot.slane %v1462, 1
      %v1465 = vor.u32 %v1460, %v1464
      %v1467 = vshll.u32 %v1408, 16
      %v1469 = vrot.slane %v1467, 1
      %v1470 = vsel %vm530, %v1465, %v1469
      %v1472 = vshrl.u32 %v1409, 16
      %v1474 = vshll.u32 %v1409, 16
      %v1476 = vrot.slane %v1474, 1
      %v1477 = vor.u32 %v1472, %v1476
      %v1479 = vshll.u32 %v1410, 16
      %v1481 = vrot.slane %v1479, 1
      %v1482 = vsel %vm530, %v1477, %v1481
      %v1484 = vshrl.u32 %v1411, 16
      %v1486 = vshll.u32 %v1411, 16
      %v1488 = vrot.slane %v1486, 1
      %v1489 = vor.u32 %v1484, %v1488
      %v1491 = vshll.u32 %v1412, 16
      %v1493 = vrot.slane %v1491, 1
      %v1494 = vsel %vm530, %v1489, %v1493
      %v1496 = vshrl.u32 %v1413, 16
      %v1498 = vshll.u32 %v1413, 16
      %v1500 = vrot.slane %v1498, 1
      %v1501 = vor.u32 %v1496, %v1500
      %v1503 = vshll.u32 %v1414, 16
      %v1505 = vrot.slane %v1503, 1
      %v1506 = vsel %vm530, %v1501, %v1505
      %v1508 = vshrl.u32 %v1415, 16
      %v1510 = vshll.u32 %v1415, 16
      %v1512 = vrot.slane %v1510, 1
      %v1513 = vor.u32 %v1508, %v1512
      %v1515 = vshll.u32 %v1416, 16
      %v1517 = vrot.slane %v1515, 1
      %v1518 = vsel %vm530, %v1513, %v1517
      %v1520 = vshrl.u32 %v1417, 16
      %v1522 = vshll.u32 %v1417, 16
      %v1524 = vrot.slane %v1522, 1
      %v1525 = vor.u32 %v1520, %v1524
      %v1527 = vshll.u32 %v1418, 16
      %v1529 = vrot.slane %v1527, 1
      %v1530 = vsel %vm530, %v1525, %v1529
      %v1532 = vshrl.u32 %v1419, 16
      %v1534 = vshll.u32 %v1419, 16
      %v1536 = vrot.slane %v1534, 1
      %v1537 = vor.u32 %v1532, %v1536
      %v1539 = vshll.u32 %v1420, 16
      %v1541 = vrot.slane %v1539, 1
      %v1542 = vsel %vm530, %v1537, %v1541
      %v1544 = vshrl.u32 %v1421, 16
      %v1546 = vshll.u32 %v1421, 16
      %v1548 = vrot.slane %v1546, 1
      %v1549 = vor.u32 %v1544, %v1548
      %v1551 = vshll.u32 %v1422, 16
      %v1553 = vrot.slane %v1551, 1
      %v1554 = vsel %vm530, %v1549, %v1553
      %v1556 = vshrl.u32 %v1423, 16
      %v1558 = vshll.u32 %v1423, 16
      %v1560 = vrot.slane %v1558, 1
      %v1561 = vor.u32 %v1556, %v1560
      %v1563 = vshll.u32 %v1424, 16
      %v1565 = vrot.slane %v1563, 1
      %v1566 = vsel %vm530, %v1561, %v1565
      %v1568 = vshrl.u32 %v1425, 16
      %v1570 = vshll.u32 %v1425, 16
      %v1572 = vrot.slane %v1570, 1
      %v1573 = vor.u32 %v1568, %v1572
      %v1575 = vshll.u32 %v1426, 16
      %v1577 = vrot.slane %v1575, 1
      %v1578 = vsel %vm530, %v1573, %v1577
      %v1580 = vshrl.u32 %v1427, 16
      %v1582 = vshll.u32 %v1427, 16
      %v1584 = vrot.slane %v1582, 1
      %v1585 = vor.u32 %v1580, %v1584
      %v1587 = vshll.u32 %v1428, 16
      %v1589 = vrot.slane %v1587, 1
      %v1590 = vsel %vm530, %v1585, %v1589
      %v1592 = vshrl.u32 %v1429, 16
      %v1594 = vshll.u32 %v1429, 16
      %v1596 = vrot.slane %v1594, 1
      %v1597 = vor.u32 %v1592, %v1596
      %v1599 = vshll.u32 %v1430, 16
      %v1601 = vrot.slane %v1599, 1
      %v1602 = vsel %vm530, %v1597, %v1601
      %v1604 = vshrl.u32 %v1431, 16
      %v1606 = vshll.u32 %v1431, 16
      %v1608 = vrot.slane %v1606, 1
      %v1609 = vor.u32 %v1604, %v1608
      %v1611 = vshll.u32 %v1432, 16
      %v1613 = vrot.slane %v1611, 1
      %v1614 = vsel %vm530, %v1609, %v1613
      %v1616 = vshrl.u32 %v1433, 16
      %v1618 = vshll.u32 %v1433, 16
      %v1620 = vrot.slane %v1618, 1
      %v1621 = vor.u32 %v1616, %v1620
      %v1623 = vshll.u32 %v1434, 16
      %v1625 = vrot.slane %v1623, 1
      %v1626 = vsel %vm530, %v1621, %v1625
      %1627 = vrot.lane.b32.xlu0 %v1446, 16
      %v1628 = vpop.permute.xlu0 %1627
      %1629 = vrot.lane.b32.xlu0 %v1458, 16
      %v1630 = vpop.permute.xlu0 %1629
      %1631 = vrot.lane.b32.xlu0 %v1470, 16
      %v1632 = vpop.permute.xlu0 %1631
      %1633 = vrot.lane.b32.xlu0 %v1482, 16
      %v1634 = vpop.permute.xlu0 %1633
      %1635 = vrot.lane.b32.xlu0 %v1494, 16
      %v1636 = vpop.permute.xlu0 %1635
      %1637 = vrot.lane.b32.xlu0 %v1506, 16
      %v1638 = vpop.permute.xlu0 %1637
      %1639 = vrot.lane.b32.xlu0 %v1518, 16
      %v1640 = vpop.permute.xlu0 %1639
      %1641 = vrot.lane.b32.xlu0 %v1530, 16
      %v1642 = vpop.permute.xlu0 %1641
      %1643 = vrot.lane.b32.xlu0 %v1542, 16
      %v1644 = vpop.permute.xlu0 %1643
      %1645 = vrot.lane.b32.xlu0 %v1554, 16
      %v1646 = vpop.permute.xlu0 %1645
      %1647 = vrot.lane.b32.xlu0 %v1566, 16
      %v1648 = vpop.permute.xlu0 %1647
      %1649 = vrot.lane.b32.xlu0 %v1578, 16
      %v1650 = vpop.permute.xlu0 %1649
      %1651 = vrot.lane.b32.xlu0 %v1590, 16
      %v1652 = vpop.permute.xlu0 %1651
      %1653 = vrot.lane.b32.xlu0 %v1602, 16
      %v1654 = vpop.permute.xlu0 %1653
      %1655 = vrot.lane.b32.xlu0 %v1614, 16
      %v1656 = vpop.permute.xlu0 %1655
      %1657 = vrot.lane.b32.xlu0 %v1626, 16
      %v1658 = vpop.permute.xlu0 %1657
      %vm1675 = vcmask 162944
      %1676 = vst.msk [vmem:[#allocation2] sm:$0xff] %vm1675, %v1628
      %1677 = vst.msk [vmem:[#allocation2 + $0x8] sm:$0xff] %vm1675, %v1630
      %1678 = vst.msk [vmem:[#allocation2 + $0x10] sm:$0xff] %vm1675, %v1632
      %1679 = vst.msk [vmem:[#allocation2 + $0x18] sm:$0xff] %vm1675, %v1634
      %1680 = vst.msk [vmem:[#allocation2 + $0x20] sm:$0xff] %vm1675, %v1636
      %1681 = vst.msk [vmem:[#allocation2 + $0x28] sm:$0xff] %vm1675, %v1638
      %1682 = vst.msk [vmem:[#allocation2 + $0x30] sm:$0xff] %vm1675, %v1640
      %1683 = vst.msk [vmem:[#allocation2 + $0x38] sm:$0xff] %vm1675, %v1642
      %1684 = vst.msk [vmem:[#allocation2 + $0x40] sm:$0xff] %vm1675, %v1644
      %1685 = vst.msk [vmem:[#allocation2 + $0x48] sm:$0xff] %vm1675, %v1646
      %1686 = vst.msk [vmem:[#allocation2 + $0x50] sm:$0xff] %vm1675, %v1648
      %1687 = vst.msk [vmem:[#allocation2 + $0x58] sm:$0xff] %vm1675, %v1650
      %1688 = vst.msk [vmem:[#allocation2 + $0x60] sm:$0xff] %vm1675, %v1652
      %1689 = vst.msk [vmem:[#allocation2 + $0x68] sm:$0xff] %vm1675, %v1654
      %1690 = vst.msk [vmem:[#allocation2 + $0x70] sm:$0xff] %vm1675, %v1656
      %1691 = vst.msk [vmem:[#allocation2 + $0x78] sm:$0xff] %vm1675, %v1658
      %v1692 = vld [vmem:[%s1081] sm:$0xe]
      %v1693 = vld [vmem:[%s1081 + $0x4] sm:$0xf]
      %v1694 = vld [vmem:[%s1081 + $0x8] sm:$0x1]
      %v1695 = vld [vmem:[%s1081 + $0xc] sm:$0xe]
      %v1696 = vld [vmem:[%s1081 + $0x10] sm:$0xf]
      %v1697 = vld [vmem:[%s1081 + $0x14] sm:$0x1]
      %v1698 = vld [vmem:[%s1081 + $0x18] sm:$0xe]
      %v1699 = vld [vmem:[%s1081 + $0x1c] sm:$0xf]
      %v1700 = vld [vmem:[%s1081 + $0x20] sm:$0x1]
      %v1701 = vld [vmem:[%s1081 + $0x24] sm:$0xe]
      %v1702 = vld [vmem:[%s1081 + $0x28] sm:$0xf]
      %v1703 = vld [vmem:[%s1081 + $0x2c] sm:$0x1]
      %v1704 = vld [vmem:[%s1081 + $0x30] sm:$0xe]
      %v1705 = vld [vmem:[%s1081 + $0x34] sm:$0xf]
      %v1706 = vld [vmem:[%s1081 + $0x38] sm:$0x1]
      %v1707 = vld [vmem:[%s1081 + $0x3c] sm:$0xe]
      %v1708 = vld [vmem:[%s1081 + $0x40] sm:$0xf]
      %v1709 = vld [vmem:[%s1081 + $0x44] sm:$0x1]
      %v1710 = vld [vmem:[%s1081 + $0x48] sm:$0xe]
      %v1711 = vld [vmem:[%s1081 + $0x4c] sm:$0xf]
      %v1712 = vld [vmem:[%s1081 + $0x50] sm:$0x1]
      %v1713 = vld [vmem:[%s1081 + $0x54] sm:$0xe]
      %v1714 = vld [vmem:[%s1081 + $0x58] sm:$0xf]
      %v1715 = vld [vmem:[%s1081 + $0x5c] sm:$0x1]
      %v1716 = vld [vmem:[%s1081 + $0x60] sm:$0xe]
      %v1717 = vld [vmem:[%s1081 + $0x64] sm:$0xf]
      %v1718 = vld [vmem:[%s1081 + $0x68] sm:$0x1]
      %v1719 = vld [vmem:[%s1081 + $0x6c] sm:$0xe]
      %v1720 = vld [vmem:[%s1081 + $0x70] sm:$0xf]
      %v1721 = vld [vmem:[%s1081 + $0x74] sm:$0x1]
      %v1722 = vld [vmem:[%s1081 + $0x78] sm:$0xe]
      %v1723 = vld [vmem:[%s1081 + $0x7c] sm:$0xf]
      %v1724 = vld [vmem:[%s1081 + $0x80] sm:$0x1]
      %v1725 = vld [vmem:[%s1081 + $0x84] sm:$0xe]
      %v1726 = vld [vmem:[%s1081 + $0x88] sm:$0xf]
      %v1727 = vld [vmem:[%s1081 + $0x8c] sm:$0x1]
      %v1728 = vld [vmem:[%s1081 + $0x90] sm:$0xe]
      %v1729 = vld [vmem:[%s1081 + $0x94] sm:$0xf]
      %v1730 = vld [vmem:[%s1081 + $0x98] sm:$0x1]
      %v1731 = vld [vmem:[%s1081 + $0x9c] sm:$0xe]
      %v1732 = vld [vmem:[%s1081 + $0xa0] sm:$0xf]
      %v1733 = vld [vmem:[%s1081 + $0xa4] sm:$0x1]
      %v1734 = vld [vmem:[%s1081 + $0xa8] sm:$0xe]
      %v1735 = vld [vmem:[%s1081 + $0xac] sm:$0xf]
      %v1736 = vld [vmem:[%s1081 + $0xb0] sm:$0x1]
      %v1737 = vld [vmem:[%s1081 + $0xb4] sm:$0xe]
      %v1738 = vld [vmem:[%s1081 + $0xb8] sm:$0xf]
      %v1739 = vld [vmem:[%s1081 + $0xbc] sm:$0x1]
      %v1788 = vunpack.c.l.b16 %v1692
      %v1789 = vunpack.c.l.b16 %v1693
      %v1790 = vunpack.c.l.b16 %v1694
      %v1791 = vunpack.c.l.b16 %v1695
      %v1792 = vunpack.c.l.b16 %v1696
      %v1793 = vunpack.c.l.b16 %v1697
      %v1794 = vunpack.c.l.b16 %v1698
      %v1795 = vunpack.c.l.b16 %v1699
      %v1796 = vunpack.c.l.b16 %v1700
      %v1797 = vunpack.c.l.b16 %v1701
      %v1798 = vunpack.c.l.b16 %v1702
      %v1799 = vunpack.c.l.b16 %v1703
      %v1800 = vunpack.c.l.b16 %v1704
      %v1801 = vunpack.c.l.b16 %v1705
      %v1802 = vunpack.c.l.b16 %v1706
      %v1803 = vunpack.c.l.b16 %v1707
      %v1804 = vunpack.c.l.b16 %v1708
      %v1805 = vunpack.c.l.b16 %v1709
      %v1806 = vunpack.c.l.b16 %v1710
      %v1807 = vunpack.c.l.b16 %v1711
      %v1808 = vunpack.c.l.b16 %v1712
      %v1809 = vunpack.c.l.b16 %v1713
      %v1810 = vunpack.c.l.b16 %v1714
      %v1811 = vunpack.c.l.b16 %v1715
      %v1812 = vunpack.c.l.b16 %v1716
      %v1813 = vunpack.c.l.b16 %v1717
      %v1814 = vunpack.c.l.b16 %v1718
      %v1815 = vunpack.c.l.b16 %v1719
      %v1816 = vunpack.c.l.b16 %v1720
      %v1817 = vunpack.c.l.b16 %v1721
      %v1818 = vunpack.c.l.b16 %v1722
      %v1819 = vunpack.c.l.b16 %v1723
      %v1820 = vunpack.c.l.b16 %v1724
      %v1821 = vunpack.c.l.b16 %v1725
      %v1822 = vunpack.c.l.b16 %v1726
      %v1823 = vunpack.c.l.b16 %v1727
      %v1824 = vunpack.c.l.b16 %v1728
      %v1825 = vunpack.c.l.b16 %v1729
      %v1826 = vunpack.c.l.b16 %v1730
      %v1827 = vunpack.c.l.b16 %v1731
      %v1828 = vunpack.c.l.b16 %v1732
      %v1829 = vunpack.c.l.b16 %v1733
      %v1830 = vunpack.c.l.b16 %v1734
      %v1831 = vunpack.c.l.b16 %v1735
      %v1832 = vunpack.c.l.b16 %v1736
      %v1833 = vunpack.c.l.b16 %v1737
      %v1834 = vunpack.c.l.b16 %v1738
      %v1835 = vunpack.c.l.b16 %v1739
      %v1836 = vpack.c.b16 %v1789, %v1788
      %v1837 = vpack.c.b16 %v1790, %v1790
      %v1838 = vpack.c.b16 %v1792, %v1791
      %v1839 = vpack.c.b16 %v1793, %v1793
      %v1840 = vpack.c.b16 %v1795, %v1794
      %v1841 = vpack.c.b16 %v1796, %v1796
      %v1842 = vpack.c.b16 %v1798, %v1797
      %v1843 = vpack.c.b16 %v1799, %v1799
      %v1844 = vpack.c.b16 %v1801, %v1800
      %v1845 = vpack.c.b16 %v1802, %v1802
      %v1846 = vpack.c.b16 %v1804, %v1803
      %v1847 = vpack.c.b16 %v1805, %v1805
      %v1848 = vpack.c.b16 %v1807, %v1806
      %v1849 = vpack.c.b16 %v1808, %v1808
      %v1850 = vpack.c.b16 %v1810, %v1809
      %v1851 = vpack.c.b16 %v1811, %v1811
      %v1852 = vpack.c.b16 %v1813, %v1812
      %v1853 = vpack.c.b16 %v1814, %v1814
      %v1854 = vpack.c.b16 %v1816, %v1815
      %v1855 = vpack.c.b16 %v1817, %v1817
      %v1856 = vpack.c.b16 %v1819, %v1818
      %v1857 = vpack.c.b16 %v1820, %v1820
      %v1858 = vpack.c.b16 %v1822, %v1821
      %v1859 = vpack.c.b16 %v1823, %v1823
      %v1860 = vpack.c.b16 %v1825, %v1824
      %v1861 = vpack.c.b16 %v1826, %v1826
      %v1862 = vpack.c.b16 %v1828, %v1827
      %v1863 = vpack.c.b16 %v1829, %v1829
      %v1864 = vpack.c.b16 %v1831, %v1830
      %v1865 = vpack.c.b16 %v1832, %v1832
      %v1866 = vpack.c.b16 %v1834, %v1833
      %v1867 = vpack.c.b16 %v1835, %v1835
      %v1868 = vrot.slane %v1836, 1
      %v1869 = vrot.slane %v1837, 1
      %v1870 = vsel %vm964, %v1868, %v1869
      %v1871 = vrot.slane %v1838, 1
      %v1872 = vrot.slane %v1839, 1
      %v1873 = vsel %vm964, %v1871, %v1872
      %v1874 = vrot.slane %v1840, 1
      %v1875 = vrot.slane %v1841, 1
      %v1876 = vsel %vm964, %v1874, %v1875
      %v1877 = vrot.slane %v1842, 1
      %v1878 = vrot.slane %v1843, 1
      %v1879 = vsel %vm964, %v1877, %v1878
      %v1880 = vrot.slane %v1844, 1
      %v1881 = vrot.slane %v1845, 1
      %v1882 = vsel %vm964, %v1880, %v1881
      %v1883 = vrot.slane %v1846, 1
      %v1884 = vrot.slane %v1847, 1
      %v1885 = vsel %vm964, %v1883, %v1884
      %v1886 = vrot.slane %v1848, 1
      %v1887 = vrot.slane %v1849, 1
      %v1888 = vsel %vm964, %v1886, %v1887
      %v1889 = vrot.slane %v1850, 1
      %v1890 = vrot.slane %v1851, 1
      %v1891 = vsel %vm964, %v1889, %v1890
      %v1892 = vrot.slane %v1852, 1
      %v1893 = vrot.slane %v1853, 1
      %v1894 = vsel %vm964, %v1892, %v1893
      %v1895 = vrot.slane %v1854, 1
      %v1896 = vrot.slane %v1855, 1
      %v1897 = vsel %vm964, %v1895, %v1896
      %v1898 = vrot.slane %v1856, 1
      %v1899 = vrot.slane %v1857, 1
      %v1900 = vsel %vm964, %v1898, %v1899
      %v1901 = vrot.slane %v1858, 1
      %v1902 = vrot.slane %v1859, 1
      %v1903 = vsel %vm964, %v1901, %v1902
      %v1904 = vrot.slane %v1860, 1
      %v1905 = vrot.slane %v1861, 1
      %v1906 = vsel %vm964, %v1904, %v1905
      %v1907 = vrot.slane %v1862, 1
      %v1908 = vrot.slane %v1863, 1
      %v1909 = vsel %vm964, %v1907, %v1908
      %v1910 = vrot.slane %v1864, 1
      %v1911 = vrot.slane %v1865, 1
      %v1912 = vsel %vm964, %v1910, %v1911
      %v1913 = vrot.slane %v1866, 1
      %v1914 = vrot.slane %v1867, 1
      %v1915 = vsel %vm964, %v1913, %v1914
      %1916 = vrot.lane.b32.xlu0 %v1870, 20
      %v1917 = vpop.permute.xlu0 %1916
      %1918 = vrot.lane.b32.xlu0 %v1873, 20
      %v1919 = vpop.permute.xlu0 %1918
      %1920 = vrot.lane.b32.xlu0 %v1876, 20
      %v1921 = vpop.permute.xlu0 %1920
      %1922 = vrot.lane.b32.xlu0 %v1879, 20
      %v1923 = vpop.permute.xlu0 %1922
      %1924 = vrot.lane.b32.xlu0 %v1882, 20
      %v1925 = vpop.permute.xlu0 %1924
      %1926 = vrot.lane.b32.xlu0 %v1885, 20
      %v1927 = vpop.permute.xlu0 %1926
      %1928 = vrot.lane.b32.xlu0 %v1888, 20
      %v1929 = vpop.permute.xlu0 %1928
      %1930 = vrot.lane.b32.xlu0 %v1891, 20
      %v1931 = vpop.permute.xlu0 %1930
      %1932 = vrot.lane.b32.xlu0 %v1894, 20
      %v1933 = vpop.permute.xlu0 %1932
      %1934 = vrot.lane.b32.xlu0 %v1897, 20
      %v1935 = vpop.permute.xlu0 %1934
      %1936 = vrot.lane.b32.xlu0 %v1900, 20
      %v1937 = vpop.permute.xlu0 %1936
      %1938 = vrot.lane.b32.xlu0 %v1903, 20
      %v1939 = vpop.permute.xlu0 %1938
      %1940 = vrot.lane.b32.xlu0 %v1906, 20
      %v1941 = vpop.permute.xlu0 %1940
      %1942 = vrot.lane.b32.xlu0 %v1909, 20
      %v1943 = vpop.permute.xlu0 %1942
      %1944 = vrot.lane.b32.xlu0 %v1912, 20
      %v1945 = vpop.permute.xlu0 %1944
      %1946 = vrot.lane.b32.xlu0 %v1915, 20
      %v1947 = vpop.permute.xlu0 %1946
      %vm1964 = vcmask 195744
      %1965 = vst.msk [vmem:[#allocation2] sm:$0xff] %vm1964, %v1917
      %1966 = vst.msk [vmem:[#allocation2 + $0x8] sm:$0xff] %vm1964, %v1919
      %1967 = vst.msk [vmem:[#allocation2 + $0x10] sm:$0xff] %vm1964, %v1921
      %1968 = vst.msk [vmem:[#allocation2 + $0x18] sm:$0xff] %vm1964, %v1923
      %1969 = vst.msk [vmem:[#allocation2 + $0x20] sm:$0xff] %vm1964, %v1925
      %1970 = vst.msk [vmem:[#allocation2 + $0x28] sm:$0xff] %vm1964, %v1927
      %1971 = vst.msk [vmem:[#allocation2 + $0x30] sm:$0xff] %vm1964, %v1929
      %1972 = vst.msk [vmem:[#allocation2 + $0x38] sm:$0xff] %vm1964, %v1931
      %1973 = vst.msk [vmem:[#allocation2 + $0x40] sm:$0xff] %vm1964, %v1933
      %1974 = vst.msk [vmem:[#allocation2 + $0x48] sm:$0xff] %vm1964, %v1935
      %1975 = vst.msk [vmem:[#allocation2 + $0x50] sm:$0xff] %vm1964, %v1937
      %1976 = vst.msk [vmem:[#allocation2 + $0x58] sm:$0xff] %vm1964, %v1939
      %1977 = vst.msk [vmem:[#allocation2 + $0x60] sm:$0xff] %vm1964, %v1941
      %1978 = vst.msk [vmem:[#allocation2 + $0x68] sm:$0xff] %vm1964, %v1943
      %1979 = vst.msk [vmem:[#allocation2 + $0x70] sm:$0xff] %vm1964, %v1945
      %1980 = vst.msk [vmem:[#allocation2 + $0x78] sm:$0xff] %vm1964, %v1947
      %s1981 = sadd.s32 %s205, 2
      %s1982 = smul.u32 %s1981, 3
      %s1983 = smul.addr %s1982, 4
      %s1984 = scalar_lea.vmem %s191, %s1983
      %v1985 = vld [vmem:[%s1984] sm:$0xf]
      %v1986 = vld [vmem:[%s1984 + $0x4] sm:$0xf]
      %v1987 = vld [vmem:[%s1984 + $0xc] sm:$0xf]
      %v1988 = vld [vmem:[%s1984 + $0x10] sm:$0xf]
      %v1989 = vld [vmem:[%s1984 + $0x18] sm:$0xf]
      %v1990 = vld [vmem:[%s1984 + $0x1c] sm:$0xf]
      %v1991 = vld [vmem:[%s1984 + $0x24] sm:$0xf]
      %v1992 = vld [vmem:[%s1984 + $0x28] sm:$0xf]
      %v1993 = vld [vmem:[%s1984 + $0x30] sm:$0xf]
      %v1994 = vld [vmem:[%s1984 + $0x34] sm:$0xf]
      %v1995 = vld [vmem:[%s1984 + $0x3c] sm:$0xf]
      %v1996 = vld [vmem:[%s1984 + $0x40] sm:$0xf]
      %v1997 = vld [vmem:[%s1984 + $0x48] sm:$0xf]
      %v1998 = vld [vmem:[%s1984 + $0x4c] sm:$0xf]
      %v1999 = vld [vmem:[%s1984 + $0x54] sm:$0xf]
      %v2000 = vld [vmem:[%s1984 + $0x58] sm:$0xf]
      %v2001 = vld [vmem:[%s1984 + $0x60] sm:$0xf]
      %v2002 = vld [vmem:[%s1984 + $0x64] sm:$0xf]
      %v2003 = vld [vmem:[%s1984 + $0x6c] sm:$0xf]
      %v2004 = vld [vmem:[%s1984 + $0x70] sm:$0xf]
      %v2005 = vld [vmem:[%s1984 + $0x78] sm:$0xf]
      %v2006 = vld [vmem:[%s1984 + $0x7c] sm:$0xf]
      %v2007 = vld [vmem:[%s1984 + $0x84] sm:$0xf]
      %v2008 = vld [vmem:[%s1984 + $0x88] sm:$0xf]
      %v2009 = vld [vmem:[%s1984 + $0x90] sm:$0xf]
      %v2010 = vld [vmem:[%s1984 + $0x94] sm:$0xf]
      %v2011 = vld [vmem:[%s1984 + $0x9c] sm:$0xf]
      %v2012 = vld [vmem:[%s1984 + $0xa0] sm:$0xf]
      %v2013 = vld [vmem:[%s1984 + $0xa8] sm:$0xf]
      %v2014 = vld [vmem:[%s1984 + $0xac] sm:$0xf]
      %v2015 = vld [vmem:[%s1984 + $0xb4] sm:$0xf]
      %v2016 = vld [vmem:[%s1984 + $0xb8] sm:$0xf]
      %v2049 = vunpack.c.l.b16 %v1985
      %v2050 = vunpack.c.l.b16 %v1986
      %v2051 = vunpack.c.l.b16 %v1987
      %v2052 = vunpack.c.l.b16 %v1988
      %v2053 = vunpack.c.l.b16 %v1989
      %v2054 = vunpack.c.l.b16 %v1990
      %v2055 = vunpack.c.l.b16 %v1991
      %v2056 = vunpack.c.l.b16 %v1992
      %v2057 = vunpack.c.l.b16 %v1993
      %v2058 = vunpack.c.l.b16 %v1994
      %v2059 = vunpack.c.l.b16 %v1995
      %v2060 = vunpack.c.l.b16 %v1996
      %v2061 = vunpack.c.l.b16 %v1997
      %v2062 = vunpack.c.l.b16 %v1998
      %v2063 = vunpack.c.l.b16 %v1999
      %v2064 = vunpack.c.l.b16 %v2000
      %v2065 = vunpack.c.l.b16 %v2001
      %v2066 = vunpack.c.l.b16 %v2002
      %v2067 = vunpack.c.l.b16 %v2003
      %v2068 = vunpack.c.l.b16 %v2004
      %v2069 = vunpack.c.l.b16 %v2005
      %v2070 = vunpack.c.l.b16 %v2006
      %v2071 = vunpack.c.l.b16 %v2007
      %v2072 = vunpack.c.l.b16 %v2008
      %v2073 = vunpack.c.l.b16 %v2009
      %v2074 = vunpack.c.l.b16 %v2010
      %v2075 = vunpack.c.l.b16 %v2011
      %v2076 = vunpack.c.l.b16 %v2012
      %v2077 = vunpack.c.l.b16 %v2013
      %v2078 = vunpack.c.l.b16 %v2014
      %v2079 = vunpack.c.l.b16 %v2015
      %v2080 = vunpack.c.l.b16 %v2016
      %v2081 = vpack.c.b16 %v2050, %v2049
      %v2082 = vpack.c.b16 %v2052, %v2051
      %v2083 = vpack.c.b16 %v2054, %v2053
      %v2084 = vpack.c.b16 %v2056, %v2055
      %v2085 = vpack.c.b16 %v2058, %v2057
      %v2086 = vpack.c.b16 %v2060, %v2059
      %v2087 = vpack.c.b16 %v2062, %v2061
      %v2088 = vpack.c.b16 %v2064, %v2063
      %v2089 = vpack.c.b16 %v2066, %v2065
      %v2090 = vpack.c.b16 %v2068, %v2067
      %v2091 = vpack.c.b16 %v2070, %v2069
      %v2092 = vpack.c.b16 %v2072, %v2071
      %v2093 = vpack.c.b16 %v2074, %v2073
      %v2094 = vpack.c.b16 %v2076, %v2075
      %v2095 = vpack.c.b16 %v2078, %v2077
      %v2096 = vpack.c.b16 %v2080, %v2079
      %2097 = vrot.lane.b32.xlu0 %v2081, 24
      %v2098 = vpop.permute.xlu0 %2097
      %2099 = vrot.lane.b32.xlu0 %v2082, 24
      %v2100 = vpop.permute.xlu0 %2099
      %2101 = vrot.lane.b32.xlu0 %v2083, 24
      %v2102 = vpop.permute.xlu0 %2101
      %2103 = vrot.lane.b32.xlu0 %v2084, 24
      %v2104 = vpop.permute.xlu0 %2103
      %2105 = vrot.lane.b32.xlu0 %v2085, 24
      %v2106 = vpop.permute.xlu0 %2105
      %2107 = vrot.lane.b32.xlu0 %v2086, 24
      %v2108 = vpop.permute.xlu0 %2107
      %2109 = vrot.lane.b32.xlu0 %v2087, 24
      %v2110 = vpop.permute.xlu0 %2109
      %2111 = vrot.lane.b32.xlu0 %v2088, 24
      %v2112 = vpop.permute.xlu0 %2111
      %2113 = vrot.lane.b32.xlu0 %v2089, 24
      %v2114 = vpop.permute.xlu0 %2113
      %2115 = vrot.lane.b32.xlu0 %v2090, 24
      %v2116 = vpop.permute.xlu0 %2115
      %2117 = vrot.lane.b32.xlu0 %v2091, 24
      %v2118 = vpop.permute.xlu0 %2117
      %2119 = vrot.lane.b32.xlu0 %v2092, 24
      %v2120 = vpop.permute.xlu0 %2119
      %2121 = vrot.lane.b32.xlu0 %v2093, 24
      %v2122 = vpop.permute.xlu0 %2121
      %2123 = vrot.lane.b32.xlu0 %v2094, 24
      %v2124 = vpop.permute.xlu0 %2123
      %2125 = vrot.lane.b32.xlu0 %v2095, 24
      %v2126 = vpop.permute.xlu0 %2125
      %2127 = vrot.lane.b32.xlu0 %v2096, 24
      %v2128 = vpop.permute.xlu0 %2127
      %vm2145 = vcmask 228544
      %2146 = vst.msk [vmem:[#allocation2] sm:$0xff] %vm2145, %v2098
      %2147 = vst.msk [vmem:[#allocation2 + $0x8] sm:$0xff] %vm2145, %v2100
      %2148 = vst.msk [vmem:[#allocation2 + $0x10] sm:$0xff] %vm2145, %v2102
      %2149 = vst.msk [vmem:[#allocation2 + $0x18] sm:$0xff] %vm2145, %v2104
      %2150 = vst.msk [vmem:[#allocation2 + $0x20] sm:$0xff] %vm2145, %v2106
      %2151 = vst.msk [vmem:[#allocation2 + $0x28] sm:$0xff] %vm2145, %v2108
      %2152 = vst.msk [vmem:[#allocation2 + $0x30] sm:$0xff] %vm2145, %v2110
      %2153 = vst.msk [vmem:[#allocation2 + $0x38] sm:$0xff] %vm2145, %v2112
      %2154 = vst.msk [vmem:[#allocation2 + $0x40] sm:$0xff] %vm2145, %v2114
      %2155 = vst.msk [vmem:[#allocation2 + $0x48] sm:$0xff] %vm2145, %v2116
      %2156 = vst.msk [vmem:[#allocation2 + $0x50] sm:$0xff] %vm2145, %v2118
      %2157 = vst.msk [vmem:[#allocation2 + $0x58] sm:$0xff] %vm2145, %v2120
      %2158 = vst.msk [vmem:[#allocation2 + $0x60] sm:$0xff] %vm2145, %v2122
      %2159 = vst.msk [vmem:[#allocation2 + $0x68] sm:$0xff] %vm2145, %v2124
      %2160 = vst.msk [vmem:[#allocation2 + $0x70] sm:$0xff] %vm2145, %v2126
      %2161 = vst.msk [vmem:[#allocation2 + $0x78] sm:$0xff] %vm2145, %v2128
      %v2162 = vld [vmem:[%s1984] sm:$0xf]
      %v2163 = vld [vmem:[%s1984 + $0x4] sm:$0xf]
      %v2164 = vld [vmem:[%s1984 + $0x8] sm:$0x1]
      %v2165 = vld [vmem:[%s1984 + $0xc] sm:$0xf]
      %v2166 = vld [vmem:[%s1984 + $0x10] sm:$0xf]
      %v2167 = vld [vmem:[%s1984 + $0x14] sm:$0x1]
      %v2168 = vld [vmem:[%s1984 + $0x18] sm:$0xf]
      %v2169 = vld [vmem:[%s1984 + $0x1c] sm:$0xf]
      %v2170 = vld [vmem:[%s1984 + $0x20] sm:$0x1]
      %v2171 = vld [vmem:[%s1984 + $0x24] sm:$0xf]
      %v2172 = vld [vmem:[%s1984 + $0x28] sm:$0xf]
      %v2173 = vld [vmem:[%s1984 + $0x2c] sm:$0x1]
      %v2174 = vld [vmem:[%s1984 + $0x30] sm:$0xf]
      %v2175 = vld [vmem:[%s1984 + $0x34] sm:$0xf]
      %v2176 = vld [vmem:[%s1984 + $0x38] sm:$0x1]
      %v2177 = vld [vmem:[%s1984 + $0x3c] sm:$0xf]
      %v2178 = vld [vmem:[%s1984 + $0x40] sm:$0xf]
      %v2179 = vld [vmem:[%s1984 + $0x44] sm:$0x1]
      %v2180 = vld [vmem:[%s1984 + $0x48] sm:$0xf]
      %v2181 = vld [vmem:[%s1984 + $0x4c] sm:$0xf]
      %v2182 = vld [vmem:[%s1984 + $0x50] sm:$0x1]
      %v2183 = vld [vmem:[%s1984 + $0x54] sm:$0xf]
      %v2184 = vld [vmem:[%s1984 + $0x58] sm:$0xf]
      %v2185 = vld [vmem:[%s1984 + $0x5c] sm:$0x1]
      %v2186 = vld [vmem:[%s1984 + $0x60] sm:$0xf]
      %v2187 = vld [vmem:[%s1984 + $0x64] sm:$0xf]
      %v2188 = vld [vmem:[%s1984 + $0x68] sm:$0x1]
      %v2189 = vld [vmem:[%s1984 + $0x6c] sm:$0xf]
      %v2190 = vld [vmem:[%s1984 + $0x70] sm:$0xf]
      %v2191 = vld [vmem:[%s1984 + $0x74] sm:$0x1]
      %v2192 = vld [vmem:[%s1984 + $0x78] sm:$0xf]
      %v2193 = vld [vmem:[%s1984 + $0x7c] sm:$0xf]
      %v2194 = vld [vmem:[%s1984 + $0x80] sm:$0x1]
      %v2195 = vld [vmem:[%s1984 + $0x84] sm:$0xf]
      %v2196 = vld [vmem:[%s1984 + $0x88] sm:$0xf]
      %v2197 = vld [vmem:[%s1984 + $0x8c] sm:$0x1]
      %v2198 = vld [vmem:[%s1984 + $0x90] sm:$0xf]
      %v2199 = vld [vmem:[%s1984 + $0x94] sm:$0xf]
      %v2200 = vld [vmem:[%s1984 + $0x98] sm:$0x1]
      %v2201 = vld [vmem:[%s1984 + $0x9c] sm:$0xf]
      %v2202 = vld [vmem:[%s1984 + $0xa0] sm:$0xf]
      %v2203 = vld [vmem:[%s1984 + $0xa4] sm:$0x1]
      %v2204 = vld [vmem:[%s1984 + $0xa8] sm:$0xf]
      %v2205 = vld [vmem:[%s1984 + $0xac] sm:$0xf]
      %v2206 = vld [vmem:[%s1984 + $0xb0] sm:$0x1]
      %v2207 = vld [vmem:[%s1984 + $0xb4] sm:$0xf]
      %v2208 = vld [vmem:[%s1984 + $0xb8] sm:$0xf]
      %v2209 = vld [vmem:[%s1984 + $0xbc] sm:$0x1]
      %v2258 = vunpack.c.l.b16 %v2162
      %v2259 = vunpack.c.l.b16 %v2163
      %v2260 = vunpack.c.l.b16 %v2164
      %v2261 = vunpack.c.l.b16 %v2165
      %v2262 = vunpack.c.l.b16 %v2166
      %v2263 = vunpack.c.l.b16 %v2167
      %v2264 = vunpack.c.l.b16 %v2168
      %v2265 = vunpack.c.l.b16 %v2169
      %v2266 = vunpack.c.l.b16 %v2170
      %v2267 = vunpack.c.l.b16 %v2171
      %v2268 = vunpack.c.l.b16 %v2172
      %v2269 = vunpack.c.l.b16 %v2173
      %v2270 = vunpack.c.l.b16 %v2174
      %v2271 = vunpack.c.l.b16 %v2175
      %v2272 = vunpack.c.l.b16 %v2176
      %v2273 = vunpack.c.l.b16 %v2177
      %v2274 = vunpack.c.l.b16 %v2178
      %v2275 = vunpack.c.l.b16 %v2179
      %v2276 = vunpack.c.l.b16 %v2180
      %v2277 = vunpack.c.l.b16 %v2181
      %v2278 = vunpack.c.l.b16 %v2182
      %v2279 = vunpack.c.l.b16 %v2183
      %v2280 = vunpack.c.l.b16 %v2184
      %v2281 = vunpack.c.l.b16 %v2185
      %v2282 = vunpack.c.l.b16 %v2186
      %v2283 = vunpack.c.l.b16 %v2187
      %v2284 = vunpack.c.l.b16 %v2188
      %v2285 = vunpack.c.l.b16 %v2189
      %v2286 = vunpack.c.l.b16 %v2190
      %v2287 = vunpack.c.l.b16 %v2191
      %v2288 = vunpack.c.l.b16 %v2192
      %v2289 = vunpack.c.l.b16 %v2193
      %v2290 = vunpack.c.l.b16 %v2194
      %v2291 = vunpack.c.l.b16 %v2195
      %v2292 = vunpack.c.l.b16 %v2196
      %v2293 = vunpack.c.l.b16 %v2197
      %v2294 = vunpack.c.l.b16 %v2198
      %v2295 = vunpack.c.l.b16 %v2199
      %v2296 = vunpack.c.l.b16 %v2200
      %v2297 = vunpack.c.l.b16 %v2201
      %v2298 = vunpack.c.l.b16 %v2202
      %v2299 = vunpack.c.l.b16 %v2203
      %v2300 = vunpack.c.l.b16 %v2204
      %v2301 = vunpack.c.l.b16 %v2205
      %v2302 = vunpack.c.l.b16 %v2206
      %v2303 = vunpack.c.l.b16 %v2207
      %v2304 = vunpack.c.l.b16 %v2208
      %v2305 = vunpack.c.l.b16 %v2209
      %v2306 = vpack.c.b16 %v2259, %v2258
      %v2307 = vpack.c.b16 %v2260, %v2260
      %v2308 = vpack.c.b16 %v2262, %v2261
      %v2309 = vpack.c.b16 %v2263, %v2263
      %v2310 = vpack.c.b16 %v2265, %v2264
      %v2311 = vpack.c.b16 %v2266, %v2266
      %v2312 = vpack.c.b16 %v2268, %v2267
      %v2313 = vpack.c.b16 %v2269, %v2269
      %v2314 = vpack.c.b16 %v2271, %v2270
      %v2315 = vpack.c.b16 %v2272, %v2272
      %v2316 = vpack.c.b16 %v2274, %v2273
      %v2317 = vpack.c.b16 %v2275, %v2275
      %v2318 = vpack.c.b16 %v2277, %v2276
      %v2319 = vpack.c.b16 %v2278, %v2278
      %v2320 = vpack.c.b16 %v2280, %v2279
      %v2321 = vpack.c.b16 %v2281, %v2281
      %v2322 = vpack.c.b16 %v2283, %v2282
      %v2323 = vpack.c.b16 %v2284, %v2284
      %v2324 = vpack.c.b16 %v2286, %v2285
      %v2325 = vpack.c.b16 %v2287, %v2287
      %v2326 = vpack.c.b16 %v2289, %v2288
      %v2327 = vpack.c.b16 %v2290, %v2290
      %v2328 = vpack.c.b16 %v2292, %v2291
      %v2329 = vpack.c.b16 %v2293, %v2293
      %v2330 = vpack.c.b16 %v2295, %v2294
      %v2331 = vpack.c.b16 %v2296, %v2296
      %v2332 = vpack.c.b16 %v2298, %v2297
      %v2333 = vpack.c.b16 %v2299, %v2299
      %v2334 = vpack.c.b16 %v2301, %v2300
      %v2335 = vpack.c.b16 %v2302, %v2302
      %v2336 = vpack.c.b16 %v2304, %v2303
      %v2337 = vpack.c.b16 %v2305, %v2305
      %v2339 = vshrl.u32 %v2306, 16
      %v2341 = vshll.u32 %v2306, 16
      %v2343 = vrot.slane %v2341, 1
      %v2344 = vor.u32 %v2339, %v2343
      %v2346 = vshll.u32 %v2307, 16
      %v2348 = vrot.slane %v2346, 1
      %v2349 = vsel %vm530, %v2344, %v2348
      %v2351 = vshrl.u32 %v2308, 16
      %v2353 = vshll.u32 %v2308, 16
      %v2355 = vrot.slane %v2353, 1
      %v2356 = vor.u32 %v2351, %v2355
      %v2358 = vshll.u32 %v2309, 16
      %v2360 = vrot.slane %v2358, 1
      %v2361 = vsel %vm530, %v2356, %v2360
      %v2363 = vshrl.u32 %v2310, 16
      %v2365 = vshll.u32 %v2310, 16
      %v2367 = vrot.slane %v2365, 1
      %v2368 = vor.u32 %v2363, %v2367
      %v2370 = vshll.u32 %v2311, 16
      %v2372 = vrot.slane %v2370, 1
      %v2373 = vsel %vm530, %v2368, %v2372
      %v2375 = vshrl.u32 %v2312, 16
      %v2377 = vshll.u32 %v2312, 16
      %v2379 = vrot.slane %v2377, 1
      %v2380 = vor.u32 %v2375, %v2379
      %v2382 = vshll.u32 %v2313, 16
      %v2384 = vrot.slane %v2382, 1
      %v2385 = vsel %vm530, %v2380, %v2384
      %v2387 = vshrl.u32 %v2314, 16
      %v2389 = vshll.u32 %v2314, 16
      %v2391 = vrot.slane %v2389, 1
      %v2392 = vor.u32 %v2387, %v2391
      %v2394 = vshll.u32 %v2315, 16
      %v2396 = vrot.slane %v2394, 1
      %v2397 = vsel %vm530, %v2392, %v2396
      %v2399 = vshrl.u32 %v2316, 16
      %v2401 = vshll.u32 %v2316, 16
      %v2403 = vrot.slane %v2401, 1
      %v2404 = vor.u32 %v2399, %v2403
      %v2406 = vshll.u32 %v2317, 16
      %v2408 = vrot.slane %v2406, 1
      %v2409 = vsel %vm530, %v2404, %v2408
      %v2411 = vshrl.u32 %v2318, 16
      %v2413 = vshll.u32 %v2318, 16
      %v2415 = vrot.slane %v2413, 1
      %v2416 = vor.u32 %v2411, %v2415
      %v2418 = vshll.u32 %v2319, 16
      %v2420 = vrot.slane %v2418, 1
      %v2421 = vsel %vm530, %v2416, %v2420
      %v2423 = vshrl.u32 %v2320, 16
      %v2425 = vshll.u32 %v2320, 16
      %v2427 = vrot.slane %v2425, 1
      %v2428 = vor.u32 %v2423, %v2427
      %v2430 = vshll.u32 %v2321, 16
      %v2432 = vrot.slane %v2430, 1
      %v2433 = vsel %vm530, %v2428, %v2432
      %v2435 = vshrl.u32 %v2322, 16
      %v2437 = vshll.u32 %v2322, 16
      %v2439 = vrot.slane %v2437, 1
      %v2440 = vor.u32 %v2435, %v2439
      %v2442 = vshll.u32 %v2323, 16
      %v2444 = vrot.slane %v2442, 1
      %v2445 = vsel %vm530, %v2440, %v2444
      %v2447 = vshrl.u32 %v2324, 16
      %v2449 = vshll.u32 %v2324, 16
      %v2451 = vrot.slane %v2449, 1
      %v2452 = vor.u32 %v2447, %v2451
      %v2454 = vshll.u32 %v2325, 16
      %v2456 = vrot.slane %v2454, 1
      %v2457 = vsel %vm530, %v2452, %v2456
      %v2459 = vshrl.u32 %v2326, 16
      %v2461 = vshll.u32 %v2326, 16
      %v2463 = vrot.slane %v2461, 1
      %v2464 = vor.u32 %v2459, %v2463
      %v2466 = vshll.u32 %v2327, 16
      %v2468 = vrot.slane %v2466, 1
      %v2469 = vsel %vm530, %v2464, %v2468
      %v2471 = vshrl.u32 %v2328, 16
      %v2473 = vshll.u32 %v2328, 16
      %v2475 = vrot.slane %v2473, 1
      %v2476 = vor.u32 %v2471, %v2475
      %v2478 = vshll.u32 %v2329, 16
      %v2480 = vrot.slane %v2478, 1
      %v2481 = vsel %vm530, %v2476, %v2480
      %v2483 = vshrl.u32 %v2330, 16
      %v2485 = vshll.u32 %v2330, 16
      %v2487 = vrot.slane %v2485, 1
      %v2488 = vor.u32 %v2483, %v2487
      %v2490 = vshll.u32 %v2331, 16
      %v2492 = vrot.slane %v2490, 1
      %v2493 = vsel %vm530, %v2488, %v2492
      %v2495 = vshrl.u32 %v2332, 16
      %v2497 = vshll.u32 %v2332, 16
      %v2499 = vrot.slane %v2497, 1
      %v2500 = vor.u32 %v2495, %v2499
      %v2502 = vshll.u32 %v2333, 16
      %v2504 = vrot.slane %v2502, 1
      %v2505 = vsel %vm530, %v2500, %v2504
      %v2507 = vshrl.u32 %v2334, 16
      %v2509 = vshll.u32 %v2334, 16
      %v2511 = vrot.slane %v2509, 1
      %v2512 = vor.u32 %v2507, %v2511
      %v2514 = vshll.u32 %v2335, 16
      %v2516 = vrot.slane %v2514, 1
      %v2517 = vsel %vm530, %v2512, %v2516
      %v2519 = vshrl.u32 %v2336, 16
      %v2521 = vshll.u32 %v2336, 16
      %v2523 = vrot.slane %v2521, 1
      %v2524 = vor.u32 %v2519, %v2523
      %v2526 = vshll.u32 %v2337, 16
      %v2528 = vrot.slane %v2526, 1
      %v2529 = vsel %vm530, %v2524, %v2528
      %2530 = vrot.lane.b32.xlu0 %v2349, 28
      %v2531 = vpop.permute.xlu0 %2530
      %2532 = vrot.lane.b32.xlu0 %v2361, 28
      %v2533 = vpop.permute.xlu0 %2532
      %2534 = vrot.lane.b32.xlu0 %v2373, 28
      %v2535 = vpop.permute.xlu0 %2534
      %2536 = vrot.lane.b32.xlu0 %v2385, 28
      %v2537 = vpop.permute.xlu0 %2536
      %2538 = vrot.lane.b32.xlu0 %v2397, 28
      %v2539 = vpop.permute.xlu0 %2538
      %2540 = vrot.lane.b32.xlu0 %v2409, 28
      %v2541 = vpop.permute.xlu0 %2540
      %2542 = vrot.lane.b32.xlu0 %v2421, 28
      %v2543 = vpop.permute.xlu0 %2542
      %2544 = vrot.lane.b32.xlu0 %v2433, 28
      %v2545 = vpop.permute.xlu0 %2544
      %2546 = vrot.lane.b32.xlu0 %v2445, 28
      %v2547 = vpop.permute.xlu0 %2546
      %2548 = vrot.lane.b32.xlu0 %v2457, 28
      %v2549 = vpop.permute.xlu0 %2548
      %2550 = vrot.lane.b32.xlu0 %v2469, 28
      %v2551 = vpop.permute.xlu0 %2550
      %2552 = vrot.lane.b32.xlu0 %v2481, 28
      %v2553 = vpop.permute.xlu0 %2552
      %2554 = vrot.lane.b32.xlu0 %v2493, 28
      %v2555 = vpop.permute.xlu0 %2554
      %2556 = vrot.lane.b32.xlu0 %v2505, 28
      %v2557 = vpop.permute.xlu0 %2556
      %2558 = vrot.lane.b32.xlu0 %v2517, 28
      %v2559 = vpop.permute.xlu0 %2558
      %2560 = vrot.lane.b32.xlu0 %v2529, 28
      %v2561 = vpop.permute.xlu0 %2560
      %vm2578 = vcmask 261344
      %2579 = vst.msk [vmem:[#allocation2] sm:$0xff] %vm2578, %v2531
      %2580 = vst.msk [vmem:[#allocation2 + $0x8] sm:$0xff] %vm2578, %v2533
      %2581 = vst.msk [vmem:[#allocation2 + $0x10] sm:$0xff] %vm2578, %v2535
      %2582 = vst.msk [vmem:[#allocation2 + $0x18] sm:$0xff] %vm2578, %v2537
      %2583 = vst.msk [vmem:[#allocation2 + $0x20] sm:$0xff] %vm2578, %v2539
      %2584 = vst.msk [vmem:[#allocation2 + $0x28] sm:$0xff] %vm2578, %v2541
      %2585 = vst.msk [vmem:[#allocation2 + $0x30] sm:$0xff] %vm2578, %v2543
      %2586 = vst.msk [vmem:[#allocation2 + $0x38] sm:$0xff] %vm2578, %v2545
      %2587 = vst.msk [vmem:[#allocation2 + $0x40] sm:$0xff] %vm2578, %v2547
      %2588 = vst.msk [vmem:[#allocation2 + $0x48] sm:$0xff] %vm2578, %v2549
      %2589 = vst.msk [vmem:[#allocation2 + $0x50] sm:$0xff] %vm2578, %v2551
      %2590 = vst.msk [vmem:[#allocation2 + $0x58] sm:$0xff] %vm2578, %v2553
      %2591 = vst.msk [vmem:[#allocation2 + $0x60] sm:$0xff] %vm2578, %v2555
      %2592 = vst.msk [vmem:[#allocation2 + $0x68] sm:$0xff] %vm2578, %v2557
      %2593 = vst.msk [vmem:[#allocation2 + $0x70] sm:$0xff] %vm2578, %v2559
      %2594 = vst.msk [vmem:[#allocation2 + $0x78] sm:$0xff] %vm2578, %v2561
      %v2595 = vld [vmem:[%s1984] sm:$0xe]
      %v2596 = vld [vmem:[%s1984 + $0x4] sm:$0xf]
      %v2597 = vld [vmem:[%s1984 + $0x8] sm:$0x1]
      %v2598 = vld [vmem:[%s1984 + $0xc] sm:$0xe]
      %v2599 = vld [vmem:[%s1984 + $0x10] sm:$0xf]
      %v2600 = vld [vmem:[%s1984 + $0x14] sm:$0x1]
      %v2601 = vld [vmem:[%s1984 + $0x18] sm:$0xe]
      %v2602 = vld [vmem:[%s1984 + $0x1c] sm:$0xf]
      %v2603 = vld [vmem:[%s1984 + $0x20] sm:$0x1]
      %v2604 = vld [vmem:[%s1984 + $0x24] sm:$0xe]
      %v2605 = vld [vmem:[%s1984 + $0x28] sm:$0xf]
      %v2606 = vld [vmem:[%s1984 + $0x2c] sm:$0x1]
      %v2607 = vld [vmem:[%s1984 + $0x30] sm:$0xe]
      %v2608 = vld [vmem:[%s1984 + $0x34] sm:$0xf]
      %v2609 = vld [vmem:[%s1984 + $0x38] sm:$0x1]
      %v2610 = vld [vmem:[%s1984 + $0x3c] sm:$0xe]
      %v2611 = vld [vmem:[%s1984 + $0x40] sm:$0xf]
      %v2612 = vld [vmem:[%s1984 + $0x44] sm:$0x1]
      %v2613 = vld [vmem:[%s1984 + $0x48] sm:$0xe]
      %v2614 = vld [vmem:[%s1984 + $0x4c] sm:$0xf]
      %v2615 = vld [vmem:[%s1984 + $0x50] sm:$0x1]
      %v2616 = vld [vmem:[%s1984 + $0x54] sm:$0xe]
      %v2617 = vld [vmem:[%s1984 + $0x58] sm:$0xf]
      %v2618 = vld [vmem:[%s1984 + $0x5c] sm:$0x1]
      %v2619 = vld [vmem:[%s1984 + $0x60] sm:$0xe]
      %v2620 = vld [vmem:[%s1984 + $0x64] sm:$0xf]
      %v2621 = vld [vmem:[%s1984 + $0x68] sm:$0x1]
      %v2622 = vld [vmem:[%s1984 + $0x6c] sm:$0xe]
      %v2623 = vld [vmem:[%s1984 + $0x70] sm:$0xf]
      %v2624 = vld [vmem:[%s1984 + $0x74] sm:$0x1]
      %v2625 = vld [vmem:[%s1984 + $0x78] sm:$0xe]
      %v2626 = vld [vmem:[%s1984 + $0x7c] sm:$0xf]
      %v2627 = vld [vmem:[%s1984 + $0x80] sm:$0x1]
      %v2628 = vld [vmem:[%s1984 + $0x84] sm:$0xe]
      %v2629 = vld [vmem:[%s1984 + $0x88] sm:$0xf]
      %v2630 = vld [vmem:[%s1984 + $0x8c] sm:$0x1]
      %v2631 = vld [vmem:[%s1984 + $0x90] sm:$0xe]
      %v2632 = vld [vmem:[%s1984 + $0x94] sm:$0xf]
      %v2633 = vld [vmem:[%s1984 + $0x98] sm:$0x1]
      %v2634 = vld [vmem:[%s1984 + $0x9c] sm:$0xe]
      %v2635 = vld [vmem:[%s1984 + $0xa0] sm:$0xf]
      %v2636 = vld [vmem:[%s1984 + $0xa4] sm:$0x1]
      %v2637 = vld [vmem:[%s1984 + $0xa8] sm:$0xe]
      %v2638 = vld [vmem:[%s1984 + $0xac] sm:$0xf]
      %v2639 = vld [vmem:[%s1984 + $0xb0] sm:$0x1]
      %v2640 = vld [vmem:[%s1984 + $0xb4] sm:$0xe]
      %v2641 = vld [vmem:[%s1984 + $0xb8] sm:$0xf]
      %v2642 = vld [vmem:[%s1984 + $0xbc] sm:$0x1]
      %v2691 = vunpack.c.l.b16 %v2595
      %v2692 = vunpack.c.l.b16 %v2596
      %v2693 = vunpack.c.l.b16 %v2597
      %v2694 = vunpack.c.l.b16 %v2598
      %v2695 = vunpack.c.l.b16 %v2599
      %v2696 = vunpack.c.l.b16 %v2600
      %v2697 = vunpack.c.l.b16 %v2601
      %v2698 = vunpack.c.l.b16 %v2602
      %v2699 = vunpack.c.l.b16 %v2603
      %v2700 = vunpack.c.l.b16 %v2604
      %v2701 = vunpack.c.l.b16 %v2605
      %v2702 = vunpack.c.l.b16 %v2606
      %v2703 = vunpack.c.l.b16 %v2607
      %v2704 = vunpack.c.l.b16 %v2608
      %v2705 = vunpack.c.l.b16 %v2609
      %v2706 = vunpack.c.l.b16 %v2610
      %v2707 = vunpack.c.l.b16 %v2611
      %v2708 = vunpack.c.l.b16 %v2612
      %v2709 = vunpack.c.l.b16 %v2613
      %v2710 = vunpack.c.l.b16 %v2614
      %v2711 = vunpack.c.l.b16 %v2615
      %v2712 = vunpack.c.l.b16 %v2616
      %v2713 = vunpack.c.l.b16 %v2617
      %v2714 = vunpack.c.l.b16 %v2618
      %v2715 = vunpack.c.l.b16 %v2619
      %v2716 = vunpack.c.l.b16 %v2620
      %v2717 = vunpack.c.l.b16 %v2621
      %v2718 = vunpack.c.l.b16 %v2622
      %v2719 = vunpack.c.l.b16 %v2623
      %v2720 = vunpack.c.l.b16 %v2624
      %v2721 = vunpack.c.l.b16 %v2625
      %v2722 = vunpack.c.l.b16 %v2626
      %v2723 = vunpack.c.l.b16 %v2627
      %v2724 = vunpack.c.l.b16 %v2628
      %v2725 = vunpack.c.l.b16 %v2629
      %v2726 = vunpack.c.l.b16 %v2630
      %v2727 = vunpack.c.l.b16 %v2631
      %v2728 = vunpack.c.l.b16 %v2632
      %v2729 = vunpack.c.l.b16 %v2633
      %v2730 = vunpack.c.l.b16 %v2634
      %v2731 = vunpack.c.l.b16 %v2635
      %v2732 = vunpack.c.l.b16 %v2636
      %v2733 = vunpack.c.l.b16 %v2637
      %v2734 = vunpack.c.l.b16 %v2638
      %v2735 = vunpack.c.l.b16 %v2639
      %v2736 = vunpack.c.l.b16 %v2640
      %v2737 = vunpack.c.l.b16 %v2641
      %v2738 = vunpack.c.l.b16 %v2642
      %v2739 = vpack.c.b16 %v2692, %v2691
      %v2740 = vpack.c.b16 %v2693, %v2693
      %v2741 = vpack.c.b16 %v2695, %v2694
      %v2742 = vpack.c.b16 %v2696, %v2696
      %v2743 = vpack.c.b16 %v2698, %v2697
      %v2744 = vpack.c.b16 %v2699, %v2699
      %v2745 = vpack.c.b16 %v2701, %v2700
      %v2746 = vpack.c.b16 %v2702, %v2702
      %v2747 = vpack.c.b16 %v2704, %v2703
      %v2748 = vpack.c.b16 %v2705, %v2705
      %v2749 = vpack.c.b16 %v2707, %v2706
      %v2750 = vpack.c.b16 %v2708, %v2708
      %v2751 = vpack.c.b16 %v2710, %v2709
      %v2752 = vpack.c.b16 %v2711, %v2711
      %v2753 = vpack.c.b16 %v2713, %v2712
      %v2754 = vpack.c.b16 %v2714, %v2714
      %v2755 = vpack.c.b16 %v2716, %v2715
      %v2756 = vpack.c.b16 %v2717, %v2717
      %v2757 = vpack.c.b16 %v2719, %v2718
      %v2758 = vpack.c.b16 %v2720, %v2720
      %v2759 = vpack.c.b16 %v2722, %v2721
      %v2760 = vpack.c.b16 %v2723, %v2723
      %v2761 = vpack.c.b16 %v2725, %v2724
      %v2762 = vpack.c.b16 %v2726, %v2726
      %v2763 = vpack.c.b16 %v2728, %v2727
      %v2764 = vpack.c.b16 %v2729, %v2729
      %v2765 = vpack.c.b16 %v2731, %v2730
      %v2766 = vpack.c.b16 %v2732, %v2732
      %v2767 = vpack.c.b16 %v2734, %v2733
      %v2768 = vpack.c.b16 %v2735, %v2735
      %v2769 = vpack.c.b16 %v2737, %v2736
      %v2770 = vpack.c.b16 %v2738, %v2738
      %v2771 = vrot.slane %v2739, 1
      %v2772 = vrot.slane %v2740, 1
      %v2773 = vsel %vm964, %v2771, %v2772
      %v2774 = vrot.slane %v2741, 1
      %v2775 = vrot.slane %v2742, 1
      %v2776 = vsel %vm964, %v2774, %v2775
      %v2777 = vrot.slane %v2743, 1
      %v2778 = vrot.slane %v2744, 1
      %v2779 = vsel %vm964, %v2777, %v2778
      %v2780 = vrot.slane %v2745, 1
      %v2781 = vrot.slane %v2746, 1
      %v2782 = vsel %vm964, %v2780, %v2781
      %v2783 = vrot.slane %v2747, 1
      %v2784 = vrot.slane %v2748, 1
      %v2785 = vsel %vm964, %v2783, %v2784
      %v2786 = vrot.slane %v2749, 1
      %v2787 = vrot.slane %v2750, 1
      %v2788 = vsel %vm964, %v2786, %v2787
      %v2789 = vrot.slane %v2751, 1
      %v2790 = vrot.slane %v2752, 1
      %v2791 = vsel %vm964, %v2789, %v2790
      %v2792 = vrot.slane %v2753, 1
      %v2793 = vrot.slane %v2754, 1
      %v2794 = vsel %vm964, %v2792, %v2793
      %v2795 = vrot.slane %v2755, 1
      %v2796 = vrot.slane %v2756, 1
      %v2797 = vsel %vm964, %v2795, %v2796
      %v2798 = vrot.slane %v2757, 1
      %v2799 = vrot.slane %v2758, 1
      %v2800 = vsel %vm964, %v2798, %v2799
      %v2801 = vrot.slane %v2759, 1
      %v2802 = vrot.slane %v2760, 1
      %v2803 = vsel %vm964, %v2801, %v2802
      %v2804 = vrot.slane %v2761, 1
      %v2805 = vrot.slane %v2762, 1
      %v2806 = vsel %vm964, %v2804, %v2805
      %v2807 = vrot.slane %v2763, 1
      %v2808 = vrot.slane %v2764, 1
      %v2809 = vsel %vm964, %v2807, %v2808
      %v2810 = vrot.slane %v2765, 1
      %v2811 = vrot.slane %v2766, 1
      %v2812 = vsel %vm964, %v2810, %v2811
      %v2813 = vrot.slane %v2767, 1
      %v2814 = vrot.slane %v2768, 1
      %v2815 = vsel %vm964, %v2813, %v2814
      %v2816 = vrot.slane %v2769, 1
      %v2817 = vrot.slane %v2770, 1
      %v2818 = vsel %vm964, %v2816, %v2817
      %2819 = vrot.lane.b32.xlu0 %v2773, 32
      %v2820 = vpop.permute.xlu0 %2819
      %2821 = vrot.lane.b32.xlu0 %v2776, 32
      %v2822 = vpop.permute.xlu0 %2821
      %2823 = vrot.lane.b32.xlu0 %v2779, 32
      %v2824 = vpop.permute.xlu0 %2823
      %2825 = vrot.lane.b32.xlu0 %v2782, 32
      %v2826 = vpop.permute.xlu0 %2825
      %2827 = vrot.lane.b32.xlu0 %v2785, 32
      %v2828 = vpop.permute.xlu0 %2827
      %2829 = vrot.lane.b32.xlu0 %v2788, 32
      %v2830 = vpop.permute.xlu0 %2829
      %2831 = vrot.lane.b32.xlu0 %v2791, 32
      %v2832 = vpop.permute.xlu0 %2831
      %2833 = vrot.lane.b32.xlu0 %v2794, 32
      %v2834 = vpop.permute.xlu0 %2833
      %2835 = vrot.lane.b32.xlu0 %v2797, 32
      %v2836 = vpop.permute.xlu0 %2835
      %2837 = vrot.lane.b32.xlu0 %v2800, 32
      %v2838 = vpop.permute.xlu0 %2837
      %2839 = vrot.lane.b32.xlu0 %v2803, 32
      %v2840 = vpop.permute.xlu0 %2839
      %2841 = vrot.lane.b32.xlu0 %v2806, 32
      %v2842 = vpop.permute.xlu0 %2841
      %2843 = vrot.lane.b32.xlu0 %v2809, 32
      %v2844 = vpop.permute.xlu0 %2843
      %2845 = vrot.lane.b32.xlu0 %v2812, 32
      %v2846 = vpop.permute.xlu0 %2845
      %2847 = vrot.lane.b32.xlu0 %v2815, 32
      %v2848 = vpop.permute.xlu0 %2847
      %2849 = vrot.lane.b32.xlu0 %v2818, 32
      %v2850 = vpop.permute.xlu0 %2849
      %vm2867 = vcmask 294144
      %2868 = vst.msk [vmem:[#allocation2] sm:$0xff] %vm2867, %v2820
      %2869 = vst.msk [vmem:[#allocation2 + $0x8] sm:$0xff] %vm2867, %v2822
      %2870 = vst.msk [vmem:[#allocation2 + $0x10] sm:$0xff] %vm2867, %v2824
      %2871 = vst.msk [vmem:[#allocation2 + $0x18] sm:$0xff] %vm2867, %v2826
      %2872 = vst.msk [vmem:[#allocation2 + $0x20] sm:$0xff] %vm2867, %v2828
      %2873 = vst.msk [vmem:[#allocation2 + $0x28] sm:$0xff] %vm2867, %v2830
      %2874 = vst.msk [vmem:[#allocation2 + $0x30] sm:$0xff] %vm2867, %v2832
      %2875 = vst.msk [vmem:[#allocation2 + $0x38] sm:$0xff] %vm2867, %v2834
      %2876 = vst.msk [vmem:[#allocation2 + $0x40] sm:$0xff] %vm2867, %v2836
      %2877 = vst.msk [vmem:[#allocation2 + $0x48] sm:$0xff] %vm2867, %v2838
      %2878 = vst.msk [vmem:[#allocation2 + $0x50] sm:$0xff] %vm2867, %v2840
      %2879 = vst.msk [vmem:[#allocation2 + $0x58] sm:$0xff] %vm2867, %v2842
      %2880 = vst.msk [vmem:[#allocation2 + $0x60] sm:$0xff] %vm2867, %v2844
      %2881 = vst.msk [vmem:[#allocation2 + $0x68] sm:$0xff] %vm2867, %v2846
      %2882 = vst.msk [vmem:[#allocation2 + $0x70] sm:$0xff] %vm2867, %v2848
      %2883 = vst.msk [vmem:[#allocation2 + $0x78] sm:$0xff] %vm2867, %v2850
      %v2884 = vld [vmem:[#allocation2] sm:$0xff]
      %v2885 = vld [vmem:[#allocation2 + $0x8] sm:$0xff]
      %v2886 = vld [vmem:[#allocation2 + $0x10] sm:$0xff]
      %v2887 = vld [vmem:[#allocation2 + $0x18] sm:$0xff]
      %v2888 = vld [vmem:[#allocation2 + $0x20] sm:$0xff]
      %v2889 = vld [vmem:[#allocation2 + $0x28] sm:$0xff]
      %v2890 = vld [vmem:[#allocation2 + $0x30] sm:$0xff]
      %v2891 = vld [vmem:[#allocation2 + $0x38] sm:$0xff]
      %v2892 = vld [vmem:[#allocation2 + $0x40] sm:$0xff]
      %v2893 = vld [vmem:[#allocation2 + $0x48] sm:$0xff]
      %v2894 = vld [vmem:[#allocation2 + $0x50] sm:$0xff]
      %v2895 = vld [vmem:[#allocation2 + $0x58] sm:$0xff]
      %v2896 = vld [vmem:[#allocation2 + $0x60] sm:$0xff]
      %v2897 = vld [vmem:[#allocation2 + $0x68] sm:$0xff]
      %v2898 = vld [vmem:[#allocation2 + $0x70] sm:$0xff]
      %v2899 = vld [vmem:[#allocation2 + $0x78] sm:$0xff]
      %v2900 = vld [vmem:[%s1] sm:$0xf]
      %v2901 = vld [vmem:[%s1 + $0x4] sm:$0xf]
      %v2902 = vld [vmem:[%s1 + $0x8] sm:$0xf]
      %v2903 = vld [vmem:[%s1 + $0xc] sm:$0xf]
      %v2904 = vld [vmem:[%s1 + $0x10] sm:$0x3]
      %v2910 = vunpack.c.l.b16 %v2900
      %v2911 = vunpack.c.l.b16 %v2901
      %v2912 = vunpack.c.l.b16 %v2902
      %v2913 = vunpack.c.l.b16 %v2903
      %v2914 = vunpack.c.l.b16 %v2904
      %v2915 = vpack.c.b16 %v2911, %v2910
      %v2916 = vpack.c.b16 %v2913, %v2912
      %v2917 = vpack.c.b16 %v2914, %v2914
      %vm2920 = vcmask 293888
      %v2922 = vsel %vm2920, %v2884, 0
      %v2925 = vsel %vm2920, %v2885, 0
      %v2928 = vsel %vm2920, %v2886, 0
      %v2931 = vsel %vm2920, %v2887, 0
      %v2934 = vsel %vm2920, %v2888, 0
      %v2937 = vsel %vm2920, %v2889, 0
      %v2940 = vsel %vm2920, %v2890, 0
      %v2943 = vsel %vm2920, %v2891, 0
      %v2946 = vsel %vm2920, %v2892, 0
      %v2949 = vsel %vm2920, %v2893, 0
      %v2952 = vsel %vm2920, %v2894, 0
      %v2955 = vsel %vm2920, %v2895, 0
      %v2958 = vsel %vm2920, %v2896, 0
      %v2961 = vsel %vm2920, %v2897, 0
      %v2964 = vsel %vm2920, %v2898, 0
      %v2967 = vsel %vm2920, %v2899, 0
      %vm2969 = vcmask 1041408
      %v2971 = vsel %vm2969, %v2917, 0
      %2973 = vmatprep.subr.bf16.mxu0 0
      %2974 = vmatpush1.bf16.msra.mxu0 %v2915
      %2975 = vmatprep.subr.bf16.mxu0 0
      %2976 = vmatpush1.bf16.msra.mxu0 %v2916
      %2977 = vmatprep.subr.bf16.mxu0 0
      %2978 = vmatpush1.bf16.msra.mxu0 %v2971
      %2979 = vmatprep.subr.bf16.mxu0 0
      %2980 = vmatpush1.bf16.msra.mxu0 0
      %2981 = vmatprep.subr.bf16.mxu0 0
      %2982 = vmatpush1.bf16.msra.mxu0 0
      %2983 = vmatprep.subr.bf16.mxu0 0
      %2984 = vmatpush1.bf16.msra.mxu0 0
      %2985 = vmatprep.subr.bf16.mxu0 0
      %2986 = vmatpush1.bf16.msra.mxu0 0
      %2987 = vmatprep.subr.bf16.mxu0 0
      %2988 = vmatpush1.bf16.msra.mxu0 0
      %2989 = vmatprep.subr.bf16.mxu0 0
      %2990 = vmatpush1.bf16.msra.mxu0 0
      %2991 = vmatprep.subr.bf16.mxu0 0
      %2992 = vmatpush1.bf16.msra.mxu0 0
      %2993 = vmatprep.subr.bf16.mxu0 0
      %2994 = vmatpush1.bf16.msra.mxu0 0
      %2995 = vmatprep.subr.bf16.mxu0 0
      %2996 = vmatpush1.bf16.msra.mxu0 0
      %2997 = vmatprep.subr.bf16.mxu0 0
      %2998 = vmatpush1.bf16.msra.mxu0 0
      %2999 = vmatprep.subr.bf16.mxu0 0
      %3000 = vmatpush1.bf16.msra.mxu0 0
      %3001 = vmatprep.subr.bf16.mxu0 0
      %3002 = vmatpush1.bf16.msra.mxu0 0
      %3003 = vmatprep.subr.bf16.mxu0 0
      %3004 = vmatpush1.bf16.msra.mxu0 0
      %3005 = vmatprep.mubr.bf16.mxu0 0
      %3006 = vmatmul.mubr.bf16.gmra.mrb[0].mxu0 %v2922
      %v3007 = vpop.f32.mrb[0].mxu0
      %v3008 = vadd.f32 0.0, %v3007
      %v3009 = vpop.f32.mrb[0].mxu0
      %v3010 = vpop.f32.mrb[0].mxu0
      %v3011 = vadd.f32 0.0, %v3010
      %v3012 = vpop.f32.mrb[0].mxu0
      %3013 = vmatprep.mubr.bf16.mxu0 0
      %3014 = vmatmul.mubr.bf16.gmra.mrb[0].mxu0 %v2925
      %v3015 = vpop.f32.mrb[0].mxu0
      %v3016 = vadd.f32 0.0, %v3015
      %v3017 = vpop.f32.mrb[0].mxu0
      %v3018 = vpop.f32.mrb[0].mxu0
      %v3019 = vadd.f32 0.0, %v3018
      %v3020 = vpop.f32.mrb[0].mxu0
      %3021 = vmatprep.mubr.bf16.mxu0 0
      %3022 = vmatmul.mubr.bf16.gmra.mrb[0].mxu0 %v2928
      %v3023 = vpop.f32.mrb[0].mxu0
      %v3024 = vadd.f32 0.0, %v3023
      %v3025 = vpop.f32.mrb[0].mxu0
      %v3026 = vpop.f32.mrb[0].mxu0
      %v3027 = vadd.f32 0.0, %v3026
      %v3028 = vpop.f32.mrb[0].mxu0
      %3029 = vmatprep.mubr.bf16.mxu0 0
      %3030 = vmatmul.mubr.bf16.gmra.mrb[0].mxu0 %v2931
      %v3031 = vpop.f32.mrb[0].mxu0
      %v3032 = vadd.f32 0.0, %v3031
      %v3033 = vpop.f32.mrb[0].mxu0
      %v3034 = vpop.f32.mrb[0].mxu0
      %v3035 = vadd.f32 0.0, %v3034
      %v3036 = vpop.f32.mrb[0].mxu0
      %3037 = vmatprep.mubr.bf16.mxu0 0
      %3038 = vmatmul.mubr.bf16.gmra.mrb[0].mxu0 %v2934
      %v3039 = vpop.f32.mrb[0].mxu0
      %v3040 = vadd.f32 0.0, %v3039
      %v3041 = vpop.f32.mrb[0].mxu0
      %v3042 = vpop.f32.mrb[0].mxu0
      %v3043 = vadd.f32 0.0, %v3042
      %v3044 = vpop.f32.mrb[0].mxu0
      %3045 = vmatprep.mubr.bf16.mxu0 0
      %3046 = vmatmul.mubr.bf16.gmra.mrb[0].mxu0 %v2937
      %v3047 = vpop.f32.mrb[0].mxu0
      %v3048 = vadd.f32 0.0, %v3047
      %v3049 = vpop.f32.mrb[0].mxu0
      %v3050 = vpop.f32.mrb[0].mxu0
      %v3051 = vadd.f32 0.0, %v3050
      %v3052 = vpop.f32.mrb[0].mxu0
      %3053 = vmatprep.mubr.bf16.mxu0 0
      %3054 = vmatmul.mubr.bf16.gmra.mrb[0].mxu0 %v2940
      %v3055 = vpop.f32.mrb[0].mxu0
      %v3056 = vadd.f32 0.0, %v3055
      %v3057 = vpop.f32.mrb[0].mxu0
      %v3058 = vpop.f32.mrb[0].mxu0
      %v3059 = vadd.f32 0.0, %v3058
      %v3060 = vpop.f32.mrb[0].mxu0
      %3061 = vmatprep.mubr.bf16.mxu0 0
      %3062 = vmatmul.mubr.bf16.gmra.mrb[0].mxu0 %v2943
      %v3063 = vpop.f32.mrb[0].mxu0
      %v3064 = vadd.f32 0.0, %v3063
      %v3065 = vpop.f32.mrb[0].mxu0
      %v3066 = vpop.f32.mrb[0].mxu0
      %v3067 = vadd.f32 0.0, %v3066
      %v3068 = vpop.f32.mrb[0].mxu0
      %3069 = vmatprep.mubr.bf16.mxu0 0
      %3070 = vmatmul.mubr.bf16.gmra.mrb[0].mxu0 %v2946
      %v3071 = vpop.f32.mrb[0].mxu0
      %v3072 = vadd.f32 0.0, %v3071
      %v3073 = vpop.f32.mrb[0].mxu0
      %v3074 = vpop.f32.mrb[0].mxu0
      %v3075 = vadd.f32 0.0, %v3074
      %v3076 = vpop.f32.mrb[0].mxu0
      %3077 = vmatprep.mubr.bf16.mxu0 0
      %3078 = vmatmul.mubr.bf16.gmra.mrb[0].mxu0 %v2949
      %v3079 = vpop.f32.mrb[0].mxu0
      %v3080 = vadd.f32 0.0, %v3079
      %v3081 = vpop.f32.mrb[0].mxu0
      %v3082 = vpop.f32.mrb[0].mxu0
      %v3083 = vadd.f32 0.0, %v3082
      %v3084 = vpop.f32.mrb[0].mxu0
      %3085 = vmatprep.mubr.bf16.mxu0 0
      %3086 = vmatmul.mubr.bf16.gmra.mrb[0].mxu0 %v2952
      %v3087 = vpop.f32.mrb[0].mxu0
      %v3088 = vadd.f32 0.0, %v3087
      %v3089 = vpop.f32.mrb[0].mxu0
      %v3090 = vpop.f32.mrb[0].mxu0
      %v3091 = vadd.f32 0.0, %v3090
      %v3092 = vpop.f32.mrb[0].mxu0
      %3093 = vmatprep.mubr.bf16.mxu0 0
      %3094 = vmatmul.mubr.bf16.gmra.mrb[0].mxu0 %v2955
      %v3095 = vpop.f32.mrb[0].mxu0
      %v3096 = vadd.f32 0.0, %v3095
      %v3097 = vpop.f32.mrb[0].mxu0
      %v3098 = vpop.f32.mrb[0].mxu0
      %v3099 = vadd.f32 0.0, %v3098
      %v3100 = vpop.f32.mrb[0].mxu0
      %3101 = vmatprep.mubr.bf16.mxu0 0
      %3102 = vmatmul.mubr.bf16.gmra.mrb[0].mxu0 %v2958
      %v3103 = vpop.f32.mrb[0].mxu0
      %v3104 = vadd.f32 0.0, %v3103
      %v3105 = vpop.f32.mrb[0].mxu0
      %v3106 = vpop.f32.mrb[0].mxu0
      %v3107 = vadd.f32 0.0, %v3106
      %v3108 = vpop.f32.mrb[0].mxu0
      %3109 = vmatprep.mubr.bf16.mxu0 0
      %3110 = vmatmul.mubr.bf16.gmra.mrb[0].mxu0 %v2961
      %v3111 = vpop.f32.mrb[0].mxu0
      %v3112 = vadd.f32 0.0, %v3111
      %v3113 = vpop.f32.mrb[0].mxu0
      %v3114 = vpop.f32.mrb[0].mxu0
      %v3115 = vadd.f32 0.0, %v3114
      %v3116 = vpop.f32.mrb[0].mxu0
      %3117 = vmatprep.mubr.bf16.mxu0 0
      %3118 = vmatmul.mubr.bf16.gmra.mrb[0].mxu0 %v2964
      %v3119 = vpop.f32.mrb[0].mxu0
      %v3120 = vadd.f32 0.0, %v3119
      %v3121 = vpop.f32.mrb[0].mxu0
      %v3122 = vpop.f32.mrb[0].mxu0
      %v3123 = vadd.f32 0.0, %v3122
      %v3124 = vpop.f32.mrb[0].mxu0
      %3125 = vmatprep.mubr.bf16.mxu0 0
      %3126 = vmatmul.mubr.bf16.gmra.mrb[0].mxu0 %v2967
      %v3127 = vpop.f32.mrb[0].mxu0
      %v3128 = vadd.f32 0.0, %v3127
      %v3129 = vpop.f32.mrb[0].mxu0
      %v3130 = vpop.f32.mrb[0].mxu0
      %v3131 = vadd.f32 0.0, %v3130
      %v3132 = vpop.f32.mrb[0].mxu0
      %3133 = vdwg.mxu0
      %v3134 = vadd.f32 %v3008, %v3011
      %v3135 = vadd.f32 %v3134, %v3016
      %v3136 = vadd.f32 %v3135, %v3019
      %v3137 = vadd.f32 %v3136, %v3024
      %v3138 = vadd.f32 %v3137, %v3027
      %v3139 = vadd.f32 %v3138, %v3032
      %v3140 = vadd.f32 %v3139, %v3035
      %v3141 = vadd.f32 %v3140, %v3040
      %v3142 = vadd.f32 %v3141, %v3043
      %v3143 = vadd.f32 %v3142, %v3048
      %v3144 = vadd.f32 %v3143, %v3051
      %v3145 = vadd.f32 %v3144, %v3056
      %v3146 = vadd.f32 %v3145, %v3059
      %v3147 = vadd.f32 %v3146, %v3064
      %v3148 = vadd.f32 %v3147, %v3067
      %v3149 = vadd.f32 %v3148, %v3072
      %v3150 = vadd.f32 %v3149, %v3075
      %v3151 = vadd.f32 %v3150, %v3080
      %v3152 = vadd.f32 %v3151, %v3083
      %v3153 = vadd.f32 %v3152, %v3088
      %v3154 = vadd.f32 %v3153, %v3091
      %v3155 = vadd.f32 %v3154, %v3096
      %v3156 = vadd.f32 %v3155, %v3099
      %v3157 = vadd.f32 %v3156, %v3104
      %v3158 = vadd.f32 %v3157, %v3107
      %v3159 = vadd.f32 %v3158, %v3112
      %v3160 = vadd.f32 %v3159, %v3115
      %v3161 = vadd.f32 %v3160, %v3120
      %v3162 = vadd.f32 %v3161, %v3123
      %v3163 = vadd.f32 %v3162, %v3128
      %v3164 = vadd.f32 %v3163, %v3131
      %v3165 = vrot.slane %v3164, 4
      %v3166 = vadd.f32 %v3164, %v3165
      %v3167 = vrot.slane %v3166, 2
      %v3168 = vadd.f32 %v3166, %v3167
      %v3169 = vrot.slane %v3168, 1
      %v3170 = vadd.f32 %v3168, %v3169
      %3171 = vst [vmem:[%s197] sm:$0x1] %v3170
      %v3172 = vmul.f32 %v3008, %v3008
      %v3173 = vmul.f32 %v3011, %v3011
      %v3174 = vmul.f32 %v3016, %v3016
      %v3175 = vmul.f32 %v3019, %v3019
      %v3176 = vmul.f32 %v3024, %v3024
      %v3177 = vmul.f32 %v3027, %v3027
      %v3178 = vmul.f32 %v3032, %v3032
      %v3179 = vmul.f32 %v3035, %v3035
      %v3180 = vmul.f32 %v3040, %v3040
      %v3181 = vmul.f32 %v3043, %v3043
      %v3182 = vmul.f32 %v3048, %v3048
      %v3183 = vmul.f32 %v3051, %v3051
      %v3184 = vmul.f32 %v3056, %v3056
      %v3185 = vmul.f32 %v3059, %v3059
      %v3186 = vmul.f32 %v3064, %v3064
      %v3187 = vmul.f32 %v3067, %v3067
      %v3188 = vmul.f32 %v3072, %v3072
      %v3189 = vmul.f32 %v3075, %v3075
      %v3190 = vmul.f32 %v3080, %v3080
      %v3191 = vmul.f32 %v3083, %v3083
      %v3192 = vmul.f32 %v3088, %v3088
      %v3193 = vmul.f32 %v3091, %v3091
      %v3194 = vmul.f32 %v3096, %v3096
      %v3195 = vmul.f32 %v3099, %v3099
      %v3196 = vmul.f32 %v3104, %v3104
      %v3197 = vmul.f32 %v3107, %v3107
      %v3198 = vmul.f32 %v3112, %v3112
      %v3199 = vmul.f32 %v3115, %v3115
      %v3200 = vmul.f32 %v3120, %v3120
      %v3201 = vmul.f32 %v3123, %v3123
      %v3202 = vmul.f32 %v3128, %v3128
      %v3203 = vmul.f32 %v3131, %v3131
      %v3204 = vadd.f32 %v3172, %v3173
      %v3205 = vadd.f32 %v3204, %v3174
      %v3206 = vadd.f32 %v3205, %v3175
      %v3207 = vadd.f32 %v3206, %v3176
      %v3208 = vadd.f32 %v3207, %v3177
      %v3209 = vadd.f32 %v3208, %v3178
      %v3210 = vadd.f32 %v3209, %v3179
      %v3211 = vadd.f32 %v3210, %v3180
      %v3212 = vadd.f32 %v3211, %v3181
      %v3213 = vadd.f32 %v3212, %v3182
      %v3214 = vadd.f32 %v3213, %v3183
      %v3215 = vadd.f32 %v3214, %v3184
      %v3216 = vadd.f32 %v3215, %v3185
      %v3217 = vadd.f32 %v3216, %v3186
      %v3218 = vadd.f32 %v3217, %v3187
      %v3219 = vadd.f32 %v3218, %v3188
      %v3220 = vadd.f32 %v3219, %v3189
      %v3221 = vadd.f32 %v3220, %v3190
      %v3222 = vadd.f32 %v3221, %v3191
      %v3223 = vadd.f32 %v3222, %v3192
      %v3224 = vadd.f32 %v3223, %v3193
      %v3225 = vadd.f32 %v3224, %v3194
      %v3226 = vadd.f32 %v3225, %v3195
      %v3227 = vadd.f32 %v3226, %v3196
      %v3228 = vadd.f32 %v3227, %v3197
      %v3229 = vadd.f32 %v3228, %v3198
      %v3230 = vadd.f32 %v3229, %v3199
      %v3231 = vadd.f32 %v3230, %v3200
      %v3232 = vadd.f32 %v3231, %v3201
      %v3233 = vadd.f32 %v3232, %v3202
      %v3234 = vadd.f32 %v3233, %v3203
      %v3235 = vrot.slane %v3234, 4
      %v3236 = vadd.f32 %v3234, %v3235
      %v3237 = vrot.slane %v3236, 2
      %v3238 = vadd.f32 %v3236, %v3237
      %v3239 = vrot.slane %v3238, 1
      %v3240 = vadd.f32 %v3238, %v3239
      %3241 = vst [vmem:[%s203] sm:$0x1] %v3240
      %p3242 = scmp.lt.s32.totalorder %s19, 1
      %s3243 = scalar_select %p3242, %s19, 1
      %p3244 = scmp.lt.s32.totalorder %s20, 0
      %s3245 = scalar_select %p3244, %s20, 0
      %s3246 = sadd.s32 %s3245, %s3243
      %s3247 = scalar_lea.vmem %s2, %s3246
      %p3248 = scmp.lt.s32.totalorder %s19, 1
      %s3249 = scalar_select %p3248, %s19, 1
      %p3250 = scmp.lt.s32.totalorder %s20, 0
      %s3251 = scalar_select %p3250, %s20, 0
      %s3252 = sadd.s32 %s3251, %s3249
      %s3253 = scalar_lea.vmem %s3, %s3252
      // Predicated region
      $region29: #{conv_block_forward.2} parent=27 // pred_check
        %p3254 = pneg %p94
      $region30: #{conv_block_forward.2} parent=27 // pred_check_branch
        %3256 = sbr.rel (%p3254) target = $region32
      $region31: #{conv_block_forward.2} parent=27 // pred_region
        _
      $region32: #{conv_block_forward.2} parent=27 // pred_fallthru
        _
      // Predicated region
      $region33: #{conv_block_forward.2} parent=27 // pred_check
        %p3257 = pneg %p122
      $region34: #{conv_block_forward.2} parent=27 // pred_check_branch
        %3259 = sbr.rel (%p3257) target = $region36
      $region35: #{conv_block_forward.2} parent=27 // pred_region
        _
      $region36: #{conv_block_forward.2} parent=27 // pred_fallthru
        _
    $region28: #{conv_block_forward.2} parent=5 // pred_fallthru
      _
    %p3260 = scmp.le.s32.totalorder 2, %s10
    // Predicated region
    $region37: #{conv_block_forward.2} parent=5 // pred_check
      %p3261 = pneg %p3260
    $region38: #{conv_block_forward.2} parent=5 // pred_check_branch
      %3263 = sbr.rel (%p3261) target = $region40
    $region39: #{conv_block_forward.2} parent=5 // pred_region
      %s3264 = ssub.s32 %s10, 2
      // Predicated region
      $region41: #{conv_block_forward.2} parent=39 // pred_check
        %p3265 = pneg %p100
      $region42: #{conv_block_forward.2} parent=39 // pred_check_branch
        %3267 = sbr.rel (%p3265) target = $region44
      $region43: #{conv_block_forward.2} parent=39 // pred_region
        %p3268 = scmp.lt.s32.totalorder %s21, 1
        %s3269 = scalar_select %p3268, %s21, 1
        %p3270 = scmp.lt.s32.totalorder %s22, 0
        %s3271 = scalar_select %p3270, %s22, 0
        %s3272 = sadd.s32 %s3271, %s3269
        %s3273 = scalar_lea.vmem %s2, %s3272
      $region44: #{conv_block_forward.2} parent=39 // pred_fallthru
        _
      // Predicated region
      $region45: #{conv_block_forward.2} parent=39 // pred_check
        %p3274 = pneg %p128
      $region46: #{conv_block_forward.2} parent=39 // pred_check_branch
        %3276 = sbr.rel (%p3274) target = $region48
      $region47: #{conv_block_forward.2} parent=39 // pred_region
        %p3277 = scmp.lt.s32.totalorder %s21, 1
        %s3278 = scalar_select %p3277, %s21, 1
        %p3279 = scmp.lt.s32.totalorder %s22, 0
        %s3280 = scalar_select %p3279, %s22, 0
        %s3281 = sadd.s32 %s3280, %s3278
        %s3282 = scalar_lea.vmem %s3, %s3281
      $region48: #{conv_block_forward.2} parent=39 // pred_fallthru
        _
    $region40: #{conv_block_forward.2} parent=5 // pred_fallthru
      _
  $region6: #{conv_block_forward.2} parent=0 // loop_footer
    %s14 = sadd.s32 1, %s10
  $region7: #{conv_block_forward.2} parent=0 // loop_footer_branch
    %9 = sbr.rel target = $region3
  $region8: #{conv_block_forward.2} parent=0 // loop_exit
    _

// kernel: conv_block_forward.3
$region0: #{conv_block_forward.3}
  #allocation0 [shape = 'u32[]', space=smem, size = 0x4, offset = 0x4, fixed_abs, tag = 'smem constant byte address 0x4 - core index']
  #allocation1 [shape = 'u32[144,128]{1,0:T(1,128)}', space=vmem, size = 0x12000, scoped, tag = 'internal scratch']
  #allocation2 [shape = 'bf16[1,16,16,36]{3,2,1,0:T(16,128)(2,1)}', space=vmem, size = 0x10000, scoped, tag = 'scratch operand']
  #allocation3 [shape = 'f32[1,8,16,128]{3,2,1,0:T(8,128)}', space=vmem, size = 0x10000, scoped, tag = 'scratch operand']
  %s0 = inlined_call_operand.vmem [shape: bf16[2,18,18,4], index: 0, kind: input, shape index: {}]
  %s1 = inlined_call_operand.vmem [shape: bf16[36,128], index: 1, kind: input, shape index: {}]
  %s2 = inlined_call_operand.vmem [shape: f32[1,128], index: 2, kind: input, shape index: {}]
  %s3 = inlined_call_operand.vmem [shape: f32[1,128], index: 3, kind: input, shape index: {}]
  %s4 = inlined_call_operand.vmem [shape: f32[2,8,8,128], index: 4, kind: output, shape index: {}]
  %s5 = sld [smem:[#allocation0]]
  $region49: #{conv_block_forward.3} parent=0
    _
  %s7 = ssub.s32 1, %s5
  %s8 = scalar_select 0, %s7, %s5
  loop: start=0, step=1, limit=4
  $region2: #{conv_block_forward.3} parent=0 // loop_pre_header
    _
  $region3: #{conv_block_forward.3} parent=0 // loop_header
    %s10 = sphi 0, %s14
    %p11 = scmp.ge.s32.totalorder %s10, 4
    %s17 = sphi 0, %s29
    %s18 = sphi 0, %s25
    %s19 = sphi 0, %s17
    %s20 = sphi 0, %s18
    %s21 = sphi 0, %s19
    %s22 = sphi 0, %s20
    %s32 = sphi 0, %s34
    %s35 = sphi 0, %s32
    %s36 = sphi 0, %s35
    %s52 = sphi 0, %s36
    %s56 = sphi 0, %s56
    %s58 = sphi 0, %s56
    %s59 = sphi 0, %s58
    %s73 = sphi 0, %s59
    %s77 = sphi 0, %s77
    %s79 = sphi 0, %s77
    %s80 = sphi 0, %s79
    %s94 = sphi 0, %s80
    %s98 = sphi 0, %s98
    %s100 = sphi 0, %s98
    %s101 = sphi 0, %s100
    %s115 = sphi 0, %s101
    %s123 = sphi 0, %s125
    %s126 = sphi 0, %s123
    %s127 = sphi 0, %s126
    %s143 = sphi 0, %s127
  $region4: #{conv_block_forward.3} parent=0 // loop_header_branch
    %13 = sbr.rel (%p11) target = $region8
  $region5: #{conv_block_forward.3} parent=0 // loop_body
    %s15 = ssub.s32 %s10, 1
    %s16 = ssub.s32 %s10, 2
    %s23 = sadd.s32 1, %s18
    %p24 = scmp.ge.s32.totalorder %s23, 1
    %s25 = scalar_select %p24, 0, %s23
    %s26 = sadd.s32 1, %s17
    %s27 = scalar_select %p24, %s26, %s17
    %p28 = scmp.ge.s32.totalorder %s27, 2
    %s29 = scalar_select %p28, 0, %s27
    %s30 = ssub.s32 %s17, %s29
    %p31 = scmp.eq.s32.totalorder %s30, 0
    %s33 = sadd.s32 %s32, 1
    %s34 = scalar_select %p31, %s32, %s33
    %p37 = pneg %p31
    %p38 = scmp.eq.s32.totalorder %s10, 1
    %p39 = por %p37, %p38
    %p40 = scmp.ne.s32.totalorder %s32, %s35
    %p41 = scmp.eq.s32.totalorder %s10, 0
    %p42 = por %p40, %p41
    %p43 = scmp.ne.s32.totalorder %s32, %s35
    %p44 = scmp.eq.s32.totalorder %s15, 1
    %p45 = por %p43, %p44
    %p46 = scmp.ne.s32.totalorder %s35, %s36
    %p47 = scmp.eq.s32.totalorder %s15, 0
    %p48 = por %p46, %p47
    %p49 = scmp.ne.s32.totalorder %s35, %s36
    %p50 = scmp.eq.s32.totalorder %s16, 1
    %p51 = por %p49, %p50
    %p53 = scmp.ne.s32.totalorder %s36, %s52
    %p54 = scmp.eq.s32.totalorder %s16, 0
    %p55 = por %p53, %p54
    %s57 = sadd.s32 %s56, 1
    %p60 = scmp.eq.s32.totalorder %s10, 1
    %p61 = scmp.ne.s32.totalorder %s56, %s58
    %p62 = scmp.eq.s32.totalorder %s10, 0
    %p63 = por %p61, %p62
    %p64 = scmp.ne.s32.totalorder %s56, %s58
    %p65 = scmp.eq.s32.totalorder %s15, 1
    %p66 = por %p64, %p65
    %p67 = scmp.ne.s32.totalorder %s58, %s59
    %p68 = scmp.eq.s32.totalorder %s15, 0
    %p69 = por %p67, %p68
    %p70 = scmp.ne.s32.totalorder %s58, %s59
    %p71 = scmp.eq.s32.totalorder %s16, 1
    %p72 = por %p70, %p71
    %p74 = scmp.ne.s32.totalorder %s59, %s73
    %p75 = scmp.eq.s32.totalorder %s16, 0
    %p76 = por %p74, %p75
    %s78 = sadd.s32 %s77, 1
    %p81 = scmp.eq.s32.totalorder %s10, 1
    %p82 = scmp.ne.s32.totalorder %s77, %s79
    %p83 = scmp.eq.s32.totalorder %s10, 0
    %p84 = por %p82, %p83
    %p85 = scmp.ne.s32.totalorder %s77, %s79
    %p86 = scmp.eq.s32.totalorder %s15, 1
    %p87 = por %p85, %p86
    %p88 = scmp.ne.s32.totalorder %s79, %s80
    %p89 = scmp.eq.s32.totalorder %s15, 0
    %p90 = por %p88, %p89
    %p91 = scmp.ne.s32.totalorder %s79, %s80
    %p92 = scmp.eq.s32.totalorder %s16, 1
    %p93 = por %p91, %p92
    %p95 = scmp.ne.s32.totalorder %s80, %s94
    %p96 = scmp.eq.s32.totalorder %s16, 0
    %p97 = por %p95, %p96
    %s99 = sadd.s32 %s98, 1
    %p102 = scmp.eq.s32.totalorder %s10, 1
    %p103 = scmp.ne.s32.totalorder %s98, %s100
    %p104 = scmp.eq.s32.totalorder %s10, 0
    %p105 = por %p103, %p104
    %p106 = scmp.ne.s32.totalorder %s98, %s100
    %p107 = scmp.eq.s32.totalorder %s15, 1
    %p108 = por %p106, %p107
    %p109 = scmp.ne.s32.totalorder %s100, %s101
    %p110 = scmp.eq.s32.totalorder %s15, 0
    %p111 = por %p109, %p110
    %p112 = scmp.ne.s32.totalorder %s100, %s101
    %p113 = scmp.eq.s32.totalorder %s16, 1
    %p114 = por %p112, %p113
    %p116 = scmp.ne.s32.totalorder %s101, %s115
    %p117 = scmp.eq.s32.totalorder %s16, 0
    %p118 = por %p116, %p117
    %s119 = ssub.s32 %s17, %s29
    %s120 = ssub.s32 %s18, %s25
    %s121 = sor.u32 %s119, %s120
    %p122 = scmp.eq.s32.totalorder %s121, 0
    %s124 = sadd.s32 %s123, 1
    %s125 = scalar_select %p122, %s123, %s124
    %p128 = pneg %p122
    %p129 = scmp.eq.s32.totalorder %s10, 1
    %p130 = por %p128, %p129
    %p131 = scmp.ne.s32.totalorder %s123, %s126
    %p132 = scmp.eq.s32.totalorder %s10, 0
    %p133 = por %p131, %p132
    %p134 = scmp.ne.s32.totalorder %s123, %s126
    %p135 = scmp.eq.s32.totalorder %s15, 1
    %p136 = por %p134, %p135
    %p137 = scmp.ne.s32.totalorder %s126, %s127
    %p138 = scmp.eq.s32.totalorder %s15, 0
    %p139 = por %p137, %p138
    %p140 = scmp.ne.s32.totalorder %s126, %s127
    %p141 = scmp.eq.s32.totalorder %s16, 1
    %p142 = por %p140, %p141
    %p144 = scmp.ne.s32.totalorder %s127, %s143
    %p145 = scmp.eq.s32.totalorder %s16, 0
    %p146 = por %p144, %p145
    %p147 = scmp.le.s32.totalorder 1, %s10
    %p148 = scmp.lt.s32.totalorder %s10, 3
    %p149 = pnand %p147, %p148
    %p150 = pneg %p149
    // Predicated region
    $region9: #{conv_block_forward.3} parent=5 // pred_check
      _
    $region10: #{conv_block_forward.3} parent=5 // pred_check_branch
      %152 = sbr.rel (%p149) target = $region12
    $region11: #{conv_block_forward.3} parent=5 // pred_region
      %s153 = ssub.s32 %s10, 1
      // Predicated region
      $region13: #{conv_block_forward.3} parent=11 // pred_check
        %p154 = pneg %p69
      $region14: #{conv_block_forward.3} parent=11 // pred_check_branch
        %156 = sbr.rel (%p154) target = $region16
      $region15: #{conv_block_forward.3} parent=11 // pred_region
        _
      $region16: #{conv_block_forward.3} parent=11 // pred_fallthru
        _
      // Predicated region
      $region17: #{conv_block_forward.3} parent=11 // pred_check
        %p157 = pneg %p90
      $region18: #{conv_block_forward.3} parent=11 // pred_check_branch
        %159 = sbr.rel (%p157) target = $region20
      $region19: #{conv_block_forward.3} parent=11 // pred_region
        _
      $region20: #{conv_block_forward.3} parent=11 // pred_fallthru
        _
      // Predicated region
      $region21: #{conv_block_forward.3} parent=11 // pred_check
        %p160 = pneg %p111
      $region22: #{conv_block_forward.3} parent=11 // pred_check_branch
        %162 = sbr.rel (%p160) target = $region24
      $region23: #{conv_block_forward.3} parent=11 // pred_region
        _
      $region24: #{conv_block_forward.3} parent=11 // pred_fallthru
        _
    $region12: #{conv_block_forward.3} parent=5 // pred_fallthru
      _
    %p163 = scmp.lt.s32.totalorder %s10, 2
    // Predicated region
    $region25: #{conv_block_forward.3} parent=5 // pred_check
      %p164 = pneg %p163
    $region26: #{conv_block_forward.3} parent=5 // pred_check_branch
      %166 = sbr.rel (%p164) target = $region28
    $region27: #{conv_block_forward.3} parent=5 // pred_region
      // Predicated region
      $region29: #{conv_block_forward.3} parent=27 // pred_check
        %p167 = pneg %p42
      $region30: #{conv_block_forward.3} parent=27 // pred_check_branch
        %169 = sbr.rel (%p167) target = $region32
      $region31: #{conv_block_forward.3} parent=27 // pred_region
        %p170 = scmp.lt.s32.totalorder %s17, 1
        %s171 = scalar_select %p170, %s17, 1
        %s172 = smul.addr %s171, 54
        %s173 = smul.addr %s172, 4
        %s174 = scalar_lea.vmem %s0, %s173
      $region32: #{conv_block_forward.3} parent=27 // pred_fallthru
        _
    $region28: #{conv_block_forward.3} parent=5 // pred_fallthru
      _
    %p175 = scmp.le.s32.totalorder 1, %s10
    %p176 = scmp.lt.s32.totalorder %s10, 3
    %p177 = pnand %p175, %p176
    %p178 = pneg %p177
    // Predicated region
    $region33: #{conv_block_forward.3} parent=5 // pred_check
      _
    $region34: #{conv_block_forward.3} parent=5 // pred_check_branch
      %180 = sbr.rel (%p177) target = $region36
    $region35: #{conv_block_forward.3} parent=5 // pred_region
      %s181 = ssub.s32 %s10, 1
      %p182 = scmp.lt.s32.totalorder %s19, 1
      %s183 = scalar_select %p182, %s19, 1
      %s184 = smul.addr %s183, 54
      %s185 = smul.addr %s184, 4
      %s186 = scalar_lea.vmem %s0, %s185
      %p187 = pneg %p48
      %p188 = pneg %p45
      %p189 = pneg %p69
      %p190 = pneg %p66
      %p191 = pneg %p90
      %p192 = pneg %p87
      %p193 = pneg %p111
      %p194 = pneg %p108
      %p195 = pneg %p139
      %p196 = pneg %p136
      %s197 = smul.u32 8, %s20
      %p198 = scmp.lt.s32.totalorder %s19, 1
      %s199 = scalar_select %p198, %s19, 1
      %p200 = scmp.lt.s32.totalorder %s197, 7
      %s201 = scalar_select %p200, %s197, 7
      %s202 = smul.addr %s199, 8
      %s203 = sadd.s32 %s201, %s202
      %s204 = smul.addr %s203, 8
      %s205 = scalar_lea.vmem %s4, %s204
      %p206 = scmp.lt.s32.totalorder %s19, 1
      %s207 = scalar_select %p206, %s19, 1
      %s208 = smul.addr %s207, 54
      %s209 = smul.addr %s208, 4
      %s210 = scalar_lea.vmem %s0, %s209
      %s211 = smul.u32 8, %s20
      %p212 = scmp.lt.s32.totalorder %s19, 1
      %s213 = scalar_select %p212, %s19, 1
      %p214 = scmp.lt.s32.totalorder %s211, 7
      %s215 = scalar_select %p214, %s211, 7
      %s216 = smul.addr %s213, 8
      %s217 = sadd.s32 %s215, %s216
      %s218 = smul.addr %s217, 8
      %s219 = scalar_lea.vmem %s4, %s218
      %s220 = smul.u32 8, %s20
      %s222 = smul.u32 %s20, 16
      %s223 = smul.u32 %s222, 3
      %s224 = smul.addr %s223, 4
      %s225 = scalar_lea.vmem %s210, %s224
      %v226 = vld [vmem:[%s225] sm:$0xf]
      %v227 = vld [vmem:[%s225 + $0x4] sm:$0xf]
      %v228 = vld [vmem:[%s225 + $0xc] sm:$0xf]
      %v229 = vld [vmem:[%s225 + $0x10] sm:$0xf]
      %v230 = vld [vmem:[%s225 + $0x18] sm:$0xf]
      %v231 = vld [vmem:[%s225 + $0x1c] sm:$0xf]
      %v232 = vld [vmem:[%s225 + $0x24] sm:$0xf]
      %v233 = vld [vmem:[%s225 + $0x28] sm:$0xf]
      %v234 = vld [vmem:[%s225 + $0x30] sm:$0xf]
      %v235 = vld [vmem:[%s225 + $0x34] sm:$0xf]
      %v236 = vld [vmem:[%s225 + $0x3c] sm:$0xf]
      %v237 = vld [vmem:[%s225 + $0x40] sm:$0xf]
      %v238 = vld [vmem:[%s225 + $0x48] sm:$0xf]
      %v239 = vld [vmem:[%s225 + $0x4c] sm:$0xf]
      %v240 = vld [vmem:[%s225 + $0x54] sm:$0xf]
      %v241 = vld [vmem:[%s225 + $0x58] sm:$0xf]
      %v242 = vld [vmem:[%s225 + $0x60] sm:$0xf]
      %v243 = vld [vmem:[%s225 + $0x64] sm:$0xf]
      %v244 = vld [vmem:[%s225 + $0x6c] sm:$0xf]
      %v245 = vld [vmem:[%s225 + $0x70] sm:$0xf]
      %v246 = vld [vmem:[%s225 + $0x78] sm:$0xf]
      %v247 = vld [vmem:[%s225 + $0x7c] sm:$0xf]
      %v248 = vld [vmem:[%s225 + $0x84] sm:$0xf]
      %v249 = vld [vmem:[%s225 + $0x88] sm:$0xf]
      %v250 = vld [vmem:[%s225 + $0x90] sm:$0xf]
      %v251 = vld [vmem:[%s225 + $0x94] sm:$0xf]
      %v252 = vld [vmem:[%s225 + $0x9c] sm:$0xf]
      %v253 = vld [vmem:[%s225 + $0xa0] sm:$0xf]
      %v254 = vld [vmem:[%s225 + $0xa8] sm:$0xf]
      %v255 = vld [vmem:[%s225 + $0xac] sm:$0xf]
      %v256 = vld [vmem:[%s225 + $0xb4] sm:$0xf]
      %v257 = vld [vmem:[%s225 + $0xb8] sm:$0xf]
      %v290 = vunpack.c.l.b16 %v226
      %v291 = vunpack.c.l.b16 %v227
      %v292 = vunpack.c.l.b16 %v228
      %v293 = vunpack.c.l.b16 %v229
      %v294 = vunpack.c.l.b16 %v230
      %v295 = vunpack.c.l.b16 %v231
      %v296 = vunpack.c.l.b16 %v232
      %v297 = vunpack.c.l.b16 %v233
      %v298 = vunpack.c.l.b16 %v234
      %v299 = vunpack.c.l.b16 %v235
      %v300 = vunpack.c.l.b16 %v236
      %v301 = vunpack.c.l.b16 %v237
      %v302 = vunpack.c.l.b16 %v238
      %v303 = vunpack.c.l.b16 %v239
      %v304 = vunpack.c.l.b16 %v240
      %v305 = vunpack.c.l.b16 %v241
      %v306 = vunpack.c.l.b16 %v242
      %v307 = vunpack.c.l.b16 %v243
      %v308 = vunpack.c.l.b16 %v244
      %v309 = vunpack.c.l.b16 %v245
      %v310 = vunpack.c.l.b16 %v246
      %v311 = vunpack.c.l.b16 %v247
      %v312 = vunpack.c.l.b16 %v248
      %v313 = vunpack.c.l.b16 %v249
      %v314 = vunpack.c.l.b16 %v250
      %v315 = vunpack.c.l.b16 %v251
      %v316 = vunpack.c.l.b16 %v252
      %v317 = vunpack.c.l.b16 %v253
      %v318 = vunpack.c.l.b16 %v254
      %v319 = vunpack.c.l.b16 %v255
      %v320 = vunpack.c.l.b16 %v256
      %v321 = vunpack.c.l.b16 %v257
      %v322 = vpack.c.b16 %v291, %v290
      %v323 = vpack.c.b16 %v293, %v292
      %v324 = vpack.c.b16 %v295, %v294
      %v325 = vpack.c.b16 %v297, %v296
      %v326 = vpack.c.b16 %v299, %v298
      %v327 = vpack.c.b16 %v301, %v300
      %v328 = vpack.c.b16 %v303, %v302
      %v329 = vpack.c.b16 %v305, %v304
      %v330 = vpack.c.b16 %v307, %v306
      %v331 = vpack.c.b16 %v309, %v308
      %v332 = vpack.c.b16 %v311, %v310
      %v333 = vpack.c.b16 %v313, %v312
      %v334 = vpack.c.b16 %v315, %v314
      %v335 = vpack.c.b16 %v317, %v316
      %v336 = vpack.c.b16 %v319, %v318
      %v337 = vpack.c.b16 %v321, %v320
      %vm354 = vcmask 31744
      %355 = vst.msk [vmem:[#allocation2] sm:$0xff] %vm354, %v322
      %356 = vst.msk [vmem:[#allocation2 + $0x8] sm:$0xff] %vm354, %v323
      %357 = vst.msk [vmem:[#allocation2 + $0x10] sm:$0xff] %vm354, %v324
      %358 = vst.msk [vmem:[#allocation2 + $0x18] sm:$0xff] %vm354, %v325
      %359 = vst.msk [vmem:[#allocation2 + $0x20] sm:$0xff] %vm354, %v326
      %360 = vst.msk [vmem:[#allocation2 + $0x28] sm:$0xff] %vm354, %v327
      %361 = vst.msk [vmem:[#allocation2 + $0x30] sm:$0xff] %vm354, %v328
      %362 = vst.msk [vmem:[#allocation2 + $0x38] sm:$0xff] %vm354, %v329
      %363 = vst.msk [vmem:[#allocation2 + $0x40] sm:$0xff] %vm354, %v330
      %364 = vst.msk [vmem:[#allocation2 + $0x48] sm:$0xff] %vm354, %v331
      %365 = vst.msk [vmem:[#allocation2 + $0x50] sm:$0xff] %vm354, %v332
      %366 = vst.msk [vmem:[#allocation2 + $0x58] sm:$0xff] %vm354, %v333
      %367 = vst.msk [vmem:[#allocation2 + $0x60] sm:$0xff] %vm354, %v334
      %368 = vst.msk [vmem:[#allocation2 + $0x68] sm:$0xff] %vm354, %v335
      %369 = vst.msk [vmem:[#allocation2 + $0x70] sm:$0xff] %vm354, %v336
      %370 = vst.msk [vmem:[#allocation2 + $0x78] sm:$0xff] %vm354, %v337
      %v371 = vld [vmem:[%s225] sm:$0xf]
      %v372 = vld [vmem:[%s225 + $0x4] sm:$0xf]
      %v373 = vld [vmem:[%s225 + $0x8] sm:$0x1]
      %v374 = vld [vmem:[%s225 + $0xc] sm:$0xf]
      %v375 = vld [vmem:[%s225 + $0x10] sm:$0xf]
      %v376 = vld [vmem:[%s225 + $0x14] sm:$0x1]
      %v377 = vld [vmem:[%s225 + $0x18] sm:$0xf]
      %v378 = vld [vmem:[%s225 + $0x1c] sm:$0xf]
      %v379 = vld [vmem:[%s225 + $0x20] sm:$0x1]
      %v380 = vld [vmem:[%s225 + $0x24] sm:$0xf]
      %v381 = vld [vmem:[%s225 + $0x28] sm:$0xf]
      %v382 = vld [vmem:[%s225 + $0x2c] sm:$0x1]
      %v383 = vld [vmem:[%s225 + $0x30] sm:$0xf]
      %v384 = vld [vmem:[%s225 + $0x34] sm:$0xf]
      %v385 = vld [vmem:[%s225 + $0x38] sm:$0x1]
      %v386 = vld [vmem:[%s225 + $0x3c] sm:$0xf]
      %v387 = vld [vmem:[%s225 + $0x40] sm:$0xf]
      %v388 = vld [vmem:[%s225 + $0x44] sm:$0x1]
      %v389 = vld [vmem:[%s225 + $0x48] sm:$0xf]
      %v390 = vld [vmem:[%s225 + $0x4c] sm:$0xf]
      %v391 = vld [vmem:[%s225 + $0x50] sm:$0x1]
      %v392 = vld [vmem:[%s225 + $0x54] sm:$0xf]
      %v393 = vld [vmem:[%s225 + $0x58] sm:$0xf]
      %v394 = vld [vmem:[%s225 + $0x5c] sm:$0x1]
      %v395 = vld [vmem:[%s225 + $0x60] sm:$0xf]
      %v396 = vld [vmem:[%s225 + $0x64] sm:$0xf]
      %v397 = vld [vmem:[%s225 + $0x68] sm:$0x1]
      %v398 = vld [vmem:[%s225 + $0x6c] sm:$0xf]
      %v399 = vld [vmem:[%s225 + $0x70] sm:$0xf]
      %v400 = vld [vmem:[%s225 + $0x74] sm:$0x1]
      %v401 = vld [vmem:[%s225 + $0x78] sm:$0xf]
      %v402 = vld [vmem:[%s225 + $0x7c] sm:$0xf]
      %v403 = vld [vmem:[%s225 + $0x80] sm:$0x1]
      %v404 = vld [vmem:[%s225 + $0x84] sm:$0xf]
      %v405 = vld [vmem:[%s225 + $0x88] sm:$0xf]
      %v406 = vld [vmem:[%s225 + $0x8c] sm:$0x1]
      %v407 = vld [vmem:[%s225 + $0x90] sm:$0xf]
      %v408 = vld [vmem:[%s225 + $0x94] sm:$0xf]
      %v409 = vld [vmem:[%s225 + $0x98] sm:$0x1]
      %v410 = vld [vmem:[%s225 + $0x9c] sm:$0xf]
      %v411 = vld [vmem:[%s225 + $0xa0] sm:$0xf]
      %v412 = vld [vmem:[%s225 + $0xa4] sm:$0x1]
      %v413 = vld [vmem:[%s225 + $0xa8] sm:$0xf]
      %v414 = vld [vmem:[%s225 + $0xac] sm:$0xf]
      %v415 = vld [vmem:[%s225 + $0xb0] sm:$0x1]
      %v416 = vld [vmem:[%s225 + $0xb4] sm:$0xf]
      %v417 = vld [vmem:[%s225 + $0xb8] sm:$0xf]
      %v418 = vld [vmem:[%s225 + $0xbc] sm:$0x1]
      %v467 = vunpack.c.l.b16 %v371
      %v468 = vunpack.c.l.b16 %v372
      %v469 = vunpack.c.l.b16 %v373
      %v470 = vunpack.c.l.b16 %v374
      %v471 = vunpack.c.l.b16 %v375
      %v472 = vunpack.c.l.b16 %v376
      %v473 = vunpack.c.l.b16 %v377
      %v474 = vunpack.c.l.b16 %v378
      %v475 = vunpack.c.l.b16 %v379
      %v476 = vunpack.c.l.b16 %v380
      %v477 = vunpack.c.l.b16 %v381
      %v478 = vunpack.c.l.b16 %v382
      %v479 = vunpack.c.l.b16 %v383
      %v480 = vunpack.c.l.b16 %v384
      %v481 = vunpack.c.l.b16 %v385
      %v482 = vunpack.c.l.b16 %v386
      %v483 = vunpack.c.l.b16 %v387
      %v484 = vunpack.c.l.b16 %v388
      %v485 = vunpack.c.l.b16 %v389
      %v486 = vunpack.c.l.b16 %v390
      %v487 = vunpack.c.l.b16 %v391
      %v488 = vunpack.c.l.b16 %v392
      %v489 = vunpack.c.l.b16 %v393
      %v490 = vunpack.c.l.b16 %v394
      %v491 = vunpack.c.l.b16 %v395
      %v492 = vunpack.c.l.b16 %v396
      %v493 = vunpack.c.l.b16 %v397
      %v494 = vunpack.c.l.b16 %v398
      %v495 = vunpack.c.l.b16 %v399
      %v496 = vunpack.c.l.b16 %v400
      %v497 = vunpack.c.l.b16 %v401
      %v498 = vunpack.c.l.b16 %v402
      %v499 = vunpack.c.l.b16 %v403
      %v500 = vunpack.c.l.b16 %v404
      %v501 = vunpack.c.l.b16 %v405
      %v502 = vunpack.c.l.b16 %v406
      %v503 = vunpack.c.l.b16 %v407
      %v504 = vunpack.c.l.b16 %v408
      %v505 = vunpack.c.l.b16 %v409
      %v506 = vunpack.c.l.b16 %v410
      %v507 = vunpack.c.l.b16 %v411
      %v508 = vunpack.c.l.b16 %v412
      %v509 = vunpack.c.l.b16 %v413
      %v510 = vunpack.c.l.b16 %v414
      %v511 = vunpack.c.l.b16 %v415
      %v512 = vunpack.c.l.b16 %v416
      %v513 = vunpack.c.l.b16 %v417
      %v514 = vunpack.c.l.b16 %v418
      %v515 = vpack.c.b16 %v468, %v467
      %v516 = vpack.c.b16 %v469, %v469
      %v517 = vpack.c.b16 %v471, %v470
      %v518 = vpack.c.b16 %v472, %v472
      %v519 = vpack.c.b16 %v474, %v473
      %v520 = vpack.c.b16 %v475, %v475
      %v521 = vpack.c.b16 %v477, %v476
      %v522 = vpack.c.b16 %v478, %v478
      %v523 = vpack.c.b16 %v480, %v479
      %v524 = vpack.c.b16 %v481, %v481
      %v525 = vpack.c.b16 %v483, %v482
      %v526 = vpack.c.b16 %v484, %v484
      %v527 = vpack.c.b16 %v486, %v485
      %v528 = vpack.c.b16 %v487, %v487
      %v529 = vpack.c.b16 %v489, %v488
      %v530 = vpack.c.b16 %v490, %v490
      %v531 = vpack.c.b16 %v492, %v491
      %v532 = vpack.c.b16 %v493, %v493
      %v533 = vpack.c.b16 %v495, %v494
      %v534 = vpack.c.b16 %v496, %v496
      %v535 = vpack.c.b16 %v498, %v497
      %v536 = vpack.c.b16 %v499, %v499
      %v537 = vpack.c.b16 %v501, %v500
      %v538 = vpack.c.b16 %v502, %v502
      %v539 = vpack.c.b16 %v504, %v503
      %v540 = vpack.c.b16 %v505, %v505
      %v541 = vpack.c.b16 %v507, %v506
      %v542 = vpack.c.b16 %v508, %v508
      %v543 = vpack.c.b16 %v510, %v509
      %v544 = vpack.c.b16 %v511, %v511
      %v545 = vpack.c.b16 %v513, %v512
      %v546 = vpack.c.b16 %v514, %v514
      %vm547 = vsmask.f32 7424
      %v549 = vshrl.u32 %v515, 16
      %v551 = vshll.u32 %v515, 16
      %v553 = vrot.slane %v551, 1
      %v554 = vor.u32 %v549, %v553
      %v556 = vshll.u32 %v516, 16
      %v558 = vrot.slane %v556, 1
      %v559 = vsel %vm547, %v554, %v558
      %v561 = vshrl.u32 %v517, 16
      %v563 = vshll.u32 %v517, 16
      %v565 = vrot.slane %v563, 1
      %v566 = vor.u32 %v561, %v565
      %v568 = vshll.u32 %v518, 16
      %v570 = vrot.slane %v568, 1
      %v571 = vsel %vm547, %v566, %v570
      %v573 = vshrl.u32 %v519, 16
      %v575 = vshll.u32 %v519, 16
      %v577 = vrot.slane %v575, 1
      %v578 = vor.u32 %v573, %v577
      %v580 = vshll.u32 %v520, 16
      %v582 = vrot.slane %v580, 1
      %v583 = vsel %vm547, %v578, %v582
      %v585 = vshrl.u32 %v521, 16
      %v587 = vshll.u32 %v521, 16
      %v589 = vrot.slane %v587, 1
      %v590 = vor.u32 %v585, %v589
      %v592 = vshll.u32 %v522, 16
      %v594 = vrot.slane %v592, 1
      %v595 = vsel %vm547, %v590, %v594
      %v597 = vshrl.u32 %v523, 16
      %v599 = vshll.u32 %v523, 16
      %v601 = vrot.slane %v599, 1
      %v602 = vor.u32 %v597, %v601
      %v604 = vshll.u32 %v524, 16
      %v606 = vrot.slane %v604, 1
      %v607 = vsel %vm547, %v602, %v606
      %v609 = vshrl.u32 %v525, 16
      %v611 = vshll.u32 %v525, 16
      %v613 = vrot.slane %v611, 1
      %v614 = vor.u32 %v609, %v613
      %v616 = vshll.u32 %v526, 16
      %v618 = vrot.slane %v616, 1
      %v619 = vsel %vm547, %v614, %v618
      %v621 = vshrl.u32 %v527, 16
      %v623 = vshll.u32 %v527, 16
      %v625 = vrot.slane %v623, 1
      %v626 = vor.u32 %v621, %v625
      %v628 = vshll.u32 %v528, 16
      %v630 = vrot.slane %v628, 1
      %v631 = vsel %vm547, %v626, %v630
      %v633 = vshrl.u32 %v529, 16
      %v635 = vshll.u32 %v529, 16
      %v637 = vrot.slane %v635, 1
      %v638 = vor.u32 %v633, %v637
      %v640 = vshll.u32 %v530, 16
      %v642 = vrot.slane %v640, 1
      %v643 = vsel %vm547, %v638, %v642
      %v645 = vshrl.u32 %v531, 16
      %v647 = vshll.u32 %v531, 16
      %v649 = vrot.slane %v647, 1
      %v650 = vor.u32 %v645, %v649
      %v652 = vshll.u32 %v532, 16
      %v654 = vrot.slane %v652, 1
      %v655 = vsel %vm547, %v650, %v654
      %v657 = vshrl.u32 %v533, 16
      %v659 = vshll.u32 %v533, 16
      %v661 = vrot.slane %v659, 1
      %v662 = vor.u32 %v657, %v661
      %v664 = vshll.u32 %v534, 16
      %v666 = vrot.slane %v664, 1
      %v667 = vsel %vm547, %v662, %v666
      %v669 = vshrl.u32 %v535, 16
      %v671 = vshll.u32 %v535, 16
      %v673 = vrot.slane %v671, 1
      %v674 = vor.u32 %v669, %v673
      %v676 = vshll.u32 %v536, 16
      %v678 = vrot.slane %v676, 1
      %v679 = vsel %vm547, %v674, %v678
      %v681 = vshrl.u32 %v537, 16
      %v683 = vshll.u32 %v537, 16
      %v685 = vrot.slane %v683, 1
      %v686 = vor.u32 %v681, %v685
      %v688 = vshll.u32 %v538, 16
      %v690 = vrot.slane %v688, 1
      %v691 = vsel %vm547, %v686, %v690
      %v693 = vshrl.u32 %v539, 16
      %v695 = vshll.u32 %v539, 16
      %v697 = vrot.slane %v695, 1
      %v698 = vor.u32 %v693, %v697
      %v700 = vshll.u32 %v540, 16
      %v702 = vrot.slane %v700, 1
      %v703 = vsel %vm547, %v698, %v702
      %v705 = vshrl.u32 %v541, 16
      %v707 = vshll.u32 %v541, 16
      %v709 = vrot.slane %v707, 1
      %v710 = vor.u32 %v705, %v709
      %v712 = vshll.u32 %v542, 16
      %v714 = vrot.slane %v712, 1
      %v715 = vsel %vm547, %v710, %v714
      %v717 = vshrl.u32 %v543, 16
      %v719 = vshll.u32 %v543, 16
      %v721 = vrot.slane %v719, 1
      %v722 = vor.u32 %v717, %v721
      %v724 = vshll.u32 %v544, 16
      %v726 = vrot.slane %v724, 1
      %v727 = vsel %vm547, %v722, %v726
      %v729 = vshrl.u32 %v545, 16
      %v731 = vshll.u32 %v545, 16
      %v733 = vrot.slane %v731, 1
      %v734 = vor.u32 %v729, %v733
      %v736 = vshll.u32 %v546, 16
      %v738 = vrot.slane %v736, 1
      %v739 = vsel %vm547, %v734, %v738
      %740 = vrot.lane.b32.xlu0 %v559, 4
      %v741 = vpop.permute.xlu0 %740
      %742 = vrot.lane.b32.xlu0 %v571, 4
      %v743 = vpop.permute.xlu0 %742
      %744 = vrot.lane.b32.xlu0 %v583, 4
      %v745 = vpop.permute.xlu0 %744
      %746 = vrot.lane.b32.xlu0 %v595, 4
      %v747 = vpop.permute.xlu0 %746
      %748 = vrot.lane.b32.xlu0 %v607, 4
      %v749 = vpop.permute.xlu0 %748
      %750 = vrot.lane.b32.xlu0 %v619, 4
      %v751 = vpop.permute.xlu0 %750
      %752 = vrot.lane.b32.xlu0 %v631, 4
      %v753 = vpop.permute.xlu0 %752
      %754 = vrot.lane.b32.xlu0 %v643, 4
      %v755 = vpop.permute.xlu0 %754
      %756 = vrot.lane.b32.xlu0 %v655, 4
      %v757 = vpop.permute.xlu0 %756
      %758 = vrot.lane.b32.xlu0 %v667, 4
      %v759 = vpop.permute.xlu0 %758
      %760 = vrot.lane.b32.xlu0 %v679, 4
      %v761 = vpop.permute.xlu0 %760
      %762 = vrot.lane.b32.xlu0 %v691, 4
      %v763 = vpop.permute.xlu0 %762
      %764 = vrot.lane.b32.xlu0 %v703, 4
      %v765 = vpop.permute.xlu0 %764
      %766 = vrot.lane.b32.xlu0 %v715, 4
      %v767 = vpop.permute.xlu0 %766
      %768 = vrot.lane.b32.xlu0 %v727, 4
      %v769 = vpop.permute.xlu0 %768
      %770 = vrot.lane.b32.xlu0 %v739, 4
      %v771 = vpop.permute.xlu0 %770
      %vm788 = vcmask 64544
      %789 = vst.msk [vmem:[#allocation2] sm:$0xff] %vm788, %v741
      %790 = vst.msk [vmem:[#allocation2 + $0x8] sm:$0xff] %vm788, %v743
      %791 = vst.msk [vmem:[#allocation2 + $0x10] sm:$0xff] %vm788, %v745
      %792 = vst.msk [vmem:[#allocation2 + $0x18] sm:$0xff] %vm788, %v747
      %793 = vst.msk [vmem:[#allocation2 + $0x20] sm:$0xff] %vm788, %v749
      %794 = vst.msk [vmem:[#allocation2 + $0x28] sm:$0xff] %vm788, %v751
      %795 = vst.msk [vmem:[#allocation2 + $0x30] sm:$0xff] %vm788, %v753
      %796 = vst.msk [vmem:[#allocation2 + $0x38] sm:$0xff] %vm788, %v755
      %797 = vst.msk [vmem:[#allocation2 + $0x40] sm:$0xff] %vm788, %v757
      %798 = vst.msk [vmem:[#allocation2 + $0x48] sm:$0xff] %vm788, %v759
      %799 = vst.msk [vmem:[#allocation2 + $0x50] sm:$0xff] %vm788, %v761
      %800 = vst.msk [vmem:[#allocation2 + $0x58] sm:$0xff] %vm788, %v763
      %801 = vst.msk [vmem:[#allocation2 + $0x60] sm:$0xff] %vm788, %v765
      %802 = vst.msk [vmem:[#allocation2 + $0x68] sm:$0xff] %vm788, %v767
      %803 = vst.msk [vmem:[#allocation2 + $0x70] sm:$0xff] %vm788, %v769
      %804 = vst.msk [vmem:[#allocation2 + $0x78] sm:$0xff] %vm788, %v771
      %v805 = vld [vmem:[%s225] sm:$0xe]
      %v806 = vld [vmem:[%s225 + $0x4] sm:$0xf]
      %v807 = vld [vmem:[%s225 + $0x8] sm:$0x1]
      %v808 = vld [vmem:[%s225 + $0xc] sm:$0xe]
      %v809 = vld [vmem:[%s225 + $0x10] sm:$0xf]
      %v810 = vld [vmem:[%s225 + $0x14] sm:$0x1]
      %v811 = vld [vmem:[%s225 + $0x18] sm:$0xe]
      %v812 = vld [vmem:[%s225 + $0x1c] sm:$0xf]
      %v813 = vld [vmem:[%s225 + $0x20] sm:$0x1]
      %v814 = vld [vmem:[%s225 + $0x24] sm:$0xe]
      %v815 = vld [vmem:[%s225 + $0x28] sm:$0xf]
      %v816 = vld [vmem:[%s225 + $0x2c] sm:$0x1]
      %v817 = vld [vmem:[%s225 + $0x30] sm:$0xe]
      %v818 = vld [vmem:[%s225 + $0x34] sm:$0xf]
      %v819 = vld [vmem:[%s225 + $0x38] sm:$0x1]
      %v820 = vld [vmem:[%s225 + $0x3c] sm:$0xe]
      %v821 = vld [vmem:[%s225 + $0x40] sm:$0xf]
      %v822 = vld [vmem:[%s225 + $0x44] sm:$0x1]
      %v823 = vld [vmem:[%s225 + $0x48] sm:$0xe]
      %v824 = vld [vmem:[%s225 + $0x4c] sm:$0xf]
      %v825 = vld [vmem:[%s225 + $0x50] sm:$0x1]
      %v826 = vld [vmem:[%s225 + $0x54] sm:$0xe]
      %v827 = vld [vmem:[%s225 + $0x58] sm:$0xf]
      %v828 = vld [vmem:[%s225 + $0x5c] sm:$0x1]
      %v829 = vld [vmem:[%s225 + $0x60] sm:$0xe]
      %v830 = vld [vmem:[%s225 + $0x64] sm:$0xf]
      %v831 = vld [vmem:[%s225 + $0x68] sm:$0x1]
      %v832 = vld [vmem:[%s225 + $0x6c] sm:$0xe]
      %v833 = vld [vmem:[%s225 + $0x70] sm:$0xf]
      %v834 = vld [vmem:[%s225 + $0x74] sm:$0x1]
      %v835 = vld [vmem:[%s225 + $0x78] sm:$0xe]
      %v836 = vld [vmem:[%s225 + $0x7c] sm:$0xf]
      %v837 = vld [vmem:[%s225 + $0x80] sm:$0x1]
      %v838 = vld [vmem:[%s225 + $0x84] sm:$0xe]
      %v839 = vld [vmem:[%s225 + $0x88] sm:$0xf]
      %v840 = vld [vmem:[%s225 + $0x8c] sm:$0x1]
      %v841 = vld [vmem:[%s225 + $0x90] sm:$0xe]
      %v842 = vld [vmem:[%s225 + $0x94] sm:$0xf]
      %v843 = vld [vmem:[%s225 + $0x98] sm:$0x1]
      %v844 = vld [vmem:[%s225 + $0x9c] sm:$0xe]
      %v845 = vld [vmem:[%s225 + $0xa0] sm:$0xf]
      %v846 = vld [vmem:[%s225 + $0xa4] sm:$0x1]
      %v847 = vld [vmem:[%s225 + $0xa8] sm:$0xe]
      %v848 = vld [vmem:[%s225 + $0xac] sm:$0xf]
      %v849 = vld [vmem:[%s225 + $0xb0] sm:$0x1]
      %v850 = vld [vmem:[%s225 + $0xb4] sm:$0xe]
      %v851 = vld [vmem:[%s225 + $0xb8] sm:$0xf]
      %v852 = vld [vmem:[%s225 + $0xbc] sm:$0x1]
      %v901 = vunpack.c.l.b16 %v805
      %v902 = vunpack.c.l.b16 %v806
      %v903 = vunpack.c.l.b16 %v807
      %v904 = vunpack.c.l.b16 %v808
      %v905 = vunpack.c.l.b16 %v809
      %v906 = vunpack.c.l.b16 %v810
      %v907 = vunpack.c.l.b16 %v811
      %v908 = vunpack.c.l.b16 %v812
      %v909 = vunpack.c.l.b16 %v813
      %v910 = vunpack.c.l.b16 %v814
      %v911 = vunpack.c.l.b16 %v815
      %v912 = vunpack.c.l.b16 %v816
      %v913 = vunpack.c.l.b16 %v817
      %v914 = vunpack.c.l.b16 %v818
      %v915 = vunpack.c.l.b16 %v819
      %v916 = vunpack.c.l.b16 %v820
      %v917 = vunpack.c.l.b16 %v821
      %v918 = vunpack.c.l.b16 %v822
      %v919 = vunpack.c.l.b16 %v823
      %v920 = vunpack.c.l.b16 %v824
      %v921 = vunpack.c.l.b16 %v825
      %v922 = vunpack.c.l.b16 %v826
      %v923 = vunpack.c.l.b16 %v827
      %v924 = vunpack.c.l.b16 %v828
      %v925 = vunpack.c.l.b16 %v829
      %v926 = vunpack.c.l.b16 %v830
      %v927 = vunpack.c.l.b16 %v831
      %v928 = vunpack.c.l.b16 %v832
      %v929 = vunpack.c.l.b16 %v833
      %v930 = vunpack.c.l.b16 %v834
      %v931 = vunpack.c.l.b16 %v835
      %v932 = vunpack.c.l.b16 %v836
      %v933 = vunpack.c.l.b16 %v837
      %v934 = vunpack.c.l.b16 %v838
      %v935 = vunpack.c.l.b16 %v839
      %v936 = vunpack.c.l.b16 %v840
      %v937 = vunpack.c.l.b16 %v841
      %v938 = vunpack.c.l.b16 %v842
      %v939 = vunpack.c.l.b16 %v843
      %v940 = vunpack.c.l.b16 %v844
      %v941 = vunpack.c.l.b16 %v845
      %v942 = vunpack.c.l.b16 %v846
      %v943 = vunpack.c.l.b16 %v847
      %v944 = vunpack.c.l.b16 %v848
      %v945 = vunpack.c.l.b16 %v849
      %v946 = vunpack.c.l.b16 %v850
      %v947 = vunpack.c.l.b16 %v851
      %v948 = vunpack.c.l.b16 %v852
      %v949 = vpack.c.b16 %v902, %v901
      %v950 = vpack.c.b16 %v903, %v903
      %v951 = vpack.c.b16 %v905, %v904
      %v952 = vpack.c.b16 %v906, %v906
      %v953 = vpack.c.b16 %v908, %v907
      %v954 = vpack.c.b16 %v909, %v909
      %v955 = vpack.c.b16 %v911, %v910
      %v956 = vpack.c.b16 %v912, %v912
      %v957 = vpack.c.b16 %v914, %v913
      %v958 = vpack.c.b16 %v915, %v915
      %v959 = vpack.c.b16 %v917, %v916
      %v960 = vpack.c.b16 %v918, %v918
      %v961 = vpack.c.b16 %v920, %v919
      %v962 = vpack.c.b16 %v921, %v921
      %v963 = vpack.c.b16 %v923, %v922
      %v964 = vpack.c.b16 %v924, %v924
      %v965 = vpack.c.b16 %v926, %v925
      %v966 = vpack.c.b16 %v927, %v927
      %v967 = vpack.c.b16 %v929, %v928
      %v968 = vpack.c.b16 %v930, %v930
      %v969 = vpack.c.b16 %v932, %v931
      %v970 = vpack.c.b16 %v933, %v933
      %v971 = vpack.c.b16 %v935, %v934
      %v972 = vpack.c.b16 %v936, %v936
      %v973 = vpack.c.b16 %v938, %v937
      %v974 = vpack.c.b16 %v939, %v939
      %v975 = vpack.c.b16 %v941, %v940
      %v976 = vpack.c.b16 %v942, %v942
      %v977 = vpack.c.b16 %v944, %v943
      %v978 = vpack.c.b16 %v945, %v945
      %v979 = vpack.c.b16 %v947, %v946
      %v980 = vpack.c.b16 %v948, %v948
      %vm981 = vcmask 1046528
      %v982 = vrot.slane %v949, 1
      %v983 = vrot.slane %v950, 1
      %v984 = vsel %vm981, %v982, %v983
      %v985 = vrot.slane %v951, 1
      %v986 = vrot.slane %v952, 1
      %v987 = vsel %vm981, %v985, %v986
      %v988 = vrot.slane %v953, 1
      %v989 = vrot.slane %v954, 1
      %v990 = vsel %vm981, %v988, %v989
      %v991 = vrot.slane %v955, 1
      %v992 = vrot.slane %v956, 1
      %v993 = vsel %vm981, %v991, %v992
      %v994 = vrot.slane %v957, 1
      %v995 = vrot.slane %v958, 1
      %v996 = vsel %vm981, %v994, %v995
      %v997 = vrot.slane %v959, 1
      %v998 = vrot.slane %v960, 1
      %v999 = vsel %vm981, %v997, %v998
      %v1000 = vrot.slane %v961, 1
      %v1001 = vrot.slane %v962, 1
      %v1002 = vsel %vm981, %v1000, %v1001
      %v1003 = vrot.slane %v963, 1
      %v1004 = vrot.slane %v964, 1
      %v1005 = vsel %vm981, %v1003, %v1004
      %v1006 = vrot.slane %v965, 1
      %v1007 = vrot.slane %v966, 1
      %v1008 = vsel %vm981, %v1006, %v1007
      %v1009 = vrot.slane %v967, 1
      %v1010 = vrot.slane %v968, 1
      %v1011 = vsel %vm981, %v1009, %v1010
      %v1012 = vrot.slane %v969, 1
      %v1013 = vrot.slane %v970, 1
      %v1014 = vsel %vm981, %v1012, %v1013
      %v1015 = vrot.slane %v971, 1
      %v1016 = vrot.slane %v972, 1
      %v1017 = vsel %vm981, %v1015, %v1016
      %v1018 = vrot.slane %v973, 1
      %v1019 = vrot.slane %v974, 1
      %v1020 = vsel %vm981, %v1018, %v1019
      %v1021 = vrot.slane %v975, 1
      %v1022 = vrot.slane %v976, 1
      %v1023 = vsel %vm981, %v1021, %v1022
      %v1024 = vrot.slane %v977, 1
      %v1025 = vrot.slane %v978, 1
      %v1026 = vsel %vm981, %v1024, %v1025
      %v1027 = vrot.slane %v979, 1
      %v1028 = vrot.slane %v980, 1
      %v1029 = vsel %vm981, %v1027, %v1028
      %1030 = vrot.lane.b32.xlu0 %v984, 8
      %v1031 = vpop.permute.xlu0 %1030
      %1032 = vrot.lane.b32.xlu0 %v987, 8
      %v1033 = vpop.permute.xlu0 %1032
      %1034 = vrot.lane.b32.xlu0 %v990, 8
      %v1035 = vpop.permute.xlu0 %1034
      %1036 = vrot.lane.b32.xlu0 %v993, 8
      %v1037 = vpop.permute.xlu0 %1036
      %1038 = vrot.lane.b32.xlu0 %v996, 8
      %v1039 = vpop.permute.xlu0 %1038
      %1040 = vrot.lane.b32.xlu0 %v999, 8
      %v1041 = vpop.permute.xlu0 %1040
      %1042 = vrot.lane.b32.xlu0 %v1002, 8
      %v1043 = vpop.permute.xlu0 %1042
      %1044 = vrot.lane.b32.xlu0 %v1005, 8
      %v1045 = vpop.permute.xlu0 %1044
      %1046 = vrot.lane.b32.xlu0 %v1008, 8
      %v1047 = vpop.permute.xlu0 %1046
      %1048 = vrot.lane.b32.xlu0 %v1011, 8
      %v1049 = vpop.permute.xlu0 %1048
      %1050 = vrot.lane.b32.xlu0 %v1014, 8
      %v1051 = vpop.permute.xlu0 %1050
      %1052 = vrot.lane.b32.xlu0 %v1017, 8
      %v1053 = vpop.permute.xlu0 %1052
      %1054 = vrot.lane.b32.xlu0 %v1020, 8
      %v1055 = vpop.permute.xlu0 %1054
      %1056 = vrot.lane.b32.xlu0 %v1023, 8
      %v1057 = vpop.permute.xlu0 %1056
      %1058 = vrot.lane.b32.xlu0 %v1026, 8
      %v1059 = vpop.permute.xlu0 %1058
      %1060 = vrot.lane.b32.xlu0 %v1029, 8
      %v1061 = vpop.permute.xlu0 %1060
      %vm1078 = vcmask 97344
      %1079 = vst.msk [vmem:[#allocation2] sm:$0xff] %vm1078, %v1031
      %1080 = vst.msk [vmem:[#allocation2 + $0x8] sm:$0xff] %vm1078, %v1033
      %1081 = vst.msk [vmem:[#allocation2 + $0x10] sm:$0xff] %vm1078, %v1035
      %1082 = vst.msk [vmem:[#allocation2 + $0x18] sm:$0xff] %vm1078, %v1037
      %1083 = vst.msk [vmem:[#allocation2 + $0x20] sm:$0xff] %vm1078, %v1039
      %1084 = vst.msk [vmem:[#allocation2 + $0x28] sm:$0xff] %vm1078, %v1041
      %1085 = vst.msk [vmem:[#allocation2 + $0x30] sm:$0xff] %vm1078, %v1043
      %1086 = vst.msk [vmem:[#allocation2 + $0x38] sm:$0xff] %vm1078, %v1045
      %1087 = vst.msk [vmem:[#allocation2 + $0x40] sm:$0xff] %vm1078, %v1047
      %1088 = vst.msk [vmem:[#allocation2 + $0x48] sm:$0xff] %vm1078, %v1049
      %1089 = vst.msk [vmem:[#allocation2 + $0x50] sm:$0xff] %vm1078, %v1051
      %1090 = vst.msk [vmem:[#allocation2 + $0x58] sm:$0xff] %vm1078, %v1053
      %1091 = vst.msk [vmem:[#allocation2 + $0x60] sm:$0xff] %vm1078, %v1055
      %1092 = vst.msk [vmem:[#allocation2 + $0x68] sm:$0xff] %vm1078, %v1057
      %1093 = vst.msk [vmem:[#allocation2 + $0x70] sm:$0xff] %vm1078, %v1059
      %1094 = vst.msk [vmem:[#allocation2 + $0x78] sm:$0xff] %vm1078, %v1061
      %s1095 = sadd.s32 %s222, 1
      %s1096 = smul.u32 %s1095, 3
      %s1097 = smul.addr %s1096, 4
      %s1098 = scalar_lea.vmem %s210, %s1097
      %v1099 = vld [vmem:[%s1098] sm:$0xf]
      %v1100 = vld [vmem:[%s1098 + $0x4] sm:$0xf]
      %v1101 = vld [vmem:[%s1098 + $0xc] sm:$0xf]
      %v1102 = vld [vmem:[%s1098 + $0x10] sm:$0xf]
      %v1103 = vld [vmem:[%s1098 + $0x18] sm:$0xf]
      %v1104 = vld [vmem:[%s1098 + $0x1c] sm:$0xf]
      %v1105 = vld [vmem:[%s1098 + $0x24] sm:$0xf]
      %v1106 = vld [vmem:[%s1098 + $0x28] sm:$0xf]
      %v1107 = vld [vmem:[%s1098 + $0x30] sm:$0xf]
      %v1108 = vld [vmem:[%s1098 + $0x34] sm:$0xf]
      %v1109 = vld [vmem:[%s1098 + $0x3c] sm:$0xf]
      %v1110 = vld [vmem:[%s1098 + $0x40] sm:$0xf]
      %v1111 = vld [vmem:[%s1098 + $0x48] sm:$0xf]
      %v1112 = vld [vmem:[%s1098 + $0x4c] sm:$0xf]
      %v1113 = vld [vmem:[%s1098 + $0x54] sm:$0xf]
      %v1114 = vld [vmem:[%s1098 + $0x58] sm:$0xf]
      %v1115 = vld [vmem:[%s1098 + $0x60] sm:$0xf]
      %v1116 = vld [vmem:[%s1098 + $0x64] sm:$0xf]
      %v1117 = vld [vmem:[%s1098 + $0x6c] sm:$0xf]
      %v1118 = vld [vmem:[%s1098 + $0x70] sm:$0xf]
      %v1119 = vld [vmem:[%s1098 + $0x78] sm:$0xf]
      %v1120 = vld [vmem:[%s1098 + $0x7c] sm:$0xf]
      %v1121 = vld [vmem:[%s1098 + $0x84] sm:$0xf]
      %v1122 = vld [vmem:[%s1098 + $0x88] sm:$0xf]
      %v1123 = vld [vmem:[%s1098 + $0x90] sm:$0xf]
      %v1124 = vld [vmem:[%s1098 + $0x94] sm:$0xf]
      %v1125 = vld [vmem:[%s1098 + $0x9c] sm:$0xf]
      %v1126 = vld [vmem:[%s1098 + $0xa0] sm:$0xf]
      %v1127 = vld [vmem:[%s1098 + $0xa8] sm:$0xf]
      %v1128 = vld [vmem:[%s1098 + $0xac] sm:$0xf]
      %v1129 = vld [vmem:[%s1098 + $0xb4] sm:$0xf]
      %v1130 = vld [vmem:[%s1098 + $0xb8] sm:$0xf]
      %v1163 = vunpack.c.l.b16 %v1099
      %v1164 = vunpack.c.l.b16 %v1100
      %v1165 = vunpack.c.l.b16 %v1101
      %v1166 = vunpack.c.l.b16 %v1102
      %v1167 = vunpack.c.l.b16 %v1103
      %v1168 = vunpack.c.l.b16 %v1104
      %v1169 = vunpack.c.l.b16 %v1105
      %v1170 = vunpack.c.l.b16 %v1106
      %v1171 = vunpack.c.l.b16 %v1107
      %v1172 = vunpack.c.l.b16 %v1108
      %v1173 = vunpack.c.l.b16 %v1109
      %v1174 = vunpack.c.l.b16 %v1110
      %v1175 = vunpack.c.l.b16 %v1111
      %v1176 = vunpack.c.l.b16 %v1112
      %v1177 = vunpack.c.l.b16 %v1113
      %v1178 = vunpack.c.l.b16 %v1114
      %v1179 = vunpack.c.l.b16 %v1115
      %v1180 = vunpack.c.l.b16 %v1116
      %v1181 = vunpack.c.l.b16 %v1117
      %v1182 = vunpack.c.l.b16 %v1118
      %v1183 = vunpack.c.l.b16 %v1119
      %v1184 = vunpack.c.l.b16 %v1120
      %v1185 = vunpack.c.l.b16 %v1121
      %v1186 = vunpack.c.l.b16 %v1122
      %v1187 = vunpack.c.l.b16 %v1123
      %v1188 = vunpack.c.l.b16 %v1124
      %v1189 = vunpack.c.l.b16 %v1125
      %v1190 = vunpack.c.l.b16 %v1126
      %v1191 = vunpack.c.l.b16 %v1127
      %v1192 = vunpack.c.l.b16 %v1128
      %v1193 = vunpack.c.l.b16 %v1129
      %v1194 = vunpack.c.l.b16 %v1130
      %v1195 = vpack.c.b16 %v1164, %v1163
      %v1196 = vpack.c.b16 %v1166, %v1165
      %v1197 = vpack.c.b16 %v1168, %v1167
      %v1198 = vpack.c.b16 %v1170, %v1169
      %v1199 = vpack.c.b16 %v1172, %v1171
      %v1200 = vpack.c.b16 %v1174, %v1173
      %v1201 = vpack.c.b16 %v1176, %v1175
      %v1202 = vpack.c.b16 %v1178, %v1177
      %v1203 = vpack.c.b16 %v1180, %v1179
      %v1204 = vpack.c.b16 %v1182, %v1181
      %v1205 = vpack.c.b16 %v1184, %v1183
      %v1206 = vpack.c.b16 %v1186, %v1185
      %v1207 = vpack.c.b16 %v1188, %v1187
      %v1208 = vpack.c.b16 %v1190, %v1189
      %v1209 = vpack.c.b16 %v1192, %v1191
      %v1210 = vpack.c.b16 %v1194, %v1193
      %1211 = vrot.lane.b32.xlu0 %v1195, 12
      %v1212 = vpop.permute.xlu0 %1211
      %1213 = vrot.lane.b32.xlu0 %v1196, 12
      %v1214 = vpop.permute.xlu0 %1213
      %1215 = vrot.lane.b32.xlu0 %v1197, 12
      %v1216 = vpop.permute.xlu0 %1215
      %1217 = vrot.lane.b32.xlu0 %v1198, 12
      %v1218 = vpop.permute.xlu0 %1217
      %1219 = vrot.lane.b32.xlu0 %v1199, 12
      %v1220 = vpop.permute.xlu0 %1219
      %1221 = vrot.lane.b32.xlu0 %v1200, 12
      %v1222 = vpop.permute.xlu0 %1221
      %1223 = vrot.lane.b32.xlu0 %v1201, 12
      %v1224 = vpop.permute.xlu0 %1223
      %1225 = vrot.lane.b32.xlu0 %v1202, 12
      %v1226 = vpop.permute.xlu0 %1225
      %1227 = vrot.lane.b32.xlu0 %v1203, 12
      %v1228 = vpop.permute.xlu0 %1227
      %1229 = vrot.lane.b32.xlu0 %v1204, 12
      %v1230 = vpop.permute.xlu0 %1229
      %1231 = vrot.lane.b32.xlu0 %v1205, 12
      %v1232 = vpop.permute.xlu0 %1231
      %1233 = vrot.lane.b32.xlu0 %v1206, 12
      %v1234 = vpop.permute.xlu0 %1233
      %1235 = vrot.lane.b32.xlu0 %v1207, 12
      %v1236 = vpop.permute.xlu0 %1235
      %1237 = vrot.lane.b32.xlu0 %v1208, 12
      %v1238 = vpop.permute.xlu0 %1237
      %1239 = vrot.lane.b32.xlu0 %v1209, 12
      %v1240 = vpop.permute.xlu0 %1239
      %1241 = vrot.lane.b32.xlu0 %v1210, 12
      %v1242 = vpop.permute.xlu0 %1241
      %vm1259 = vcmask 130144
      %1260 = vst.msk [vmem:[#allocation2] sm:$0xff] %vm1259, %v1212
      %1261 = vst.msk [vmem:[#allocation2 + $0x8] sm:$0xff] %vm1259, %v1214
      %1262 = vst.msk [vmem:[#allocation2 + $0x10] sm:$0xff] %vm1259, %v1216
      %1263 = vst.msk [vmem:[#allocation2 + $0x18] sm:$0xff] %vm1259, %v1218
      %1264 = vst.msk [vmem:[#allocation2 + $0x20] sm:$0xff] %vm1259, %v1220
      %1265 = vst.msk [vmem:[#allocation2 + $0x28] sm:$0xff] %vm1259, %v1222
      %1266 = vst.msk [vmem:[#allocation2 + $0x30] sm:$0xff] %vm1259, %v1224
      %1267 = vst.msk [vmem:[#allocation2 + $0x38] sm:$0xff] %vm1259, %v1226
      %1268 = vst.msk [vmem:[#allocation2 + $0x40] sm:$0xff] %vm1259, %v1228
      %1269 = vst.msk [vmem:[#allocation2 + $0x48] sm:$0xff] %vm1259, %v1230
      %1270 = vst.msk [vmem:[#allocation2 + $0x50] sm:$0xff] %vm1259, %v1232
      %1271 = vst.msk [vmem:[#allocation2 + $0x58] sm:$0xff] %vm1259, %v1234
      %1272 = vst.msk [vmem:[#allocation2 + $0x60] sm:$0xff] %vm1259, %v1236
      %1273 = vst.msk [vmem:[#allocation2 + $0x68] sm:$0xff] %vm1259, %v1238
      %1274 = vst.msk [vmem:[#allocation2 + $0x70] sm:$0xff] %vm1259, %v1240
      %1275 = vst.msk [vmem:[#allocation2 + $0x78] sm:$0xff] %vm1259, %v1242
      %v1276 = vld [vmem:[%s1098] sm:$0xf]
      %v1277 = vld [vmem:[%s1098 + $0x4] sm:$0xf]
      %v1278 = vld [vmem:[%s1098 + $0x8] sm:$0x1]
      %v1279 = vld [vmem:[%s1098 + $0xc] sm:$0xf]
      %v1280 = vld [vmem:[%s1098 + $0x10] sm:$0xf]
      %v1281 = vld [vmem:[%s1098 + $0x14] sm:$0x1]
      %v1282 = vld [vmem:[%s1098 + $0x18] sm:$0xf]
      %v1283 = vld [vmem:[%s1098 + $0x1c] sm:$0xf]
      %v1284 = vld [vmem:[%s1098 + $0x20] sm:$0x1]
      %v1285 = vld [vmem:[%s1098 + $0x24] sm:$0xf]
      %v1286 = vld [vmem:[%s1098 + $0x28] sm:$0xf]
      %v1287 = vld [vmem:[%s1098 + $0x2c] sm:$0x1]
      %v1288 = vld [vmem:[%s1098 + $0x30] sm:$0xf]
      %v1289 = vld [vmem:[%s1098 + $0x34] sm:$0xf]
      %v1290 = vld [vmem:[%s1098 + $0x38] sm:$0x1]
      %v1291 = vld [vmem:[%s1098 + $0x3c] sm:$0xf]
      %v1292 = vld [vmem:[%s1098 + $0x40] sm:$0xf]
      %v1293 = vld [vmem:[%s1098 + $0x44] sm:$0x1]
      %v1294 = vld [vmem:[%s1098 + $0x48] sm:$0xf]
      %v1295 = vld [vmem:[%s1098 + $0x4c] sm:$0xf]
      %v1296 = vld [vmem:[%s1098 + $0x50] sm:$0x1]
      %v1297 = vld [vmem:[%s1098 + $0x54] sm:$0xf]
      %v1298 = vld [vmem:[%s1098 + $0x58] sm:$0xf]
      %v1299 = vld [vmem:[%s1098 + $0x5c] sm:$0x1]
      %v1300 = vld [vmem:[%s1098 + $0x60] sm:$0xf]
      %v1301 = vld [vmem:[%s1098 + $0x64] sm:$0xf]
      %v1302 = vld [vmem:[%s1098 + $0x68] sm:$0x1]
      %v1303 = vld [vmem:[%s1098 + $0x6c] sm:$0xf]
      %v1304 = vld [vmem:[%s1098 + $0x70] sm:$0xf]
      %v1305 = vld [vmem:[%s1098 + $0x74] sm:$0x1]
      %v1306 = vld [vmem:[%s1098 + $0x78] sm:$0xf]
      %v1307 = vld [vmem:[%s1098 + $0x7c] sm:$0xf]
      %v1308 = vld [vmem:[%s1098 + $0x80] sm:$0x1]
      %v1309 = vld [vmem:[%s1098 + $0x84] sm:$0xf]
      %v1310 = vld [vmem:[%s1098 + $0x88] sm:$0xf]
      %v1311 = vld [vmem:[%s1098 + $0x8c] sm:$0x1]
      %v1312 = vld [vmem:[%s1098 + $0x90] sm:$0xf]
      %v1313 = vld [vmem:[%s1098 + $0x94] sm:$0xf]
      %v1314 = vld [vmem:[%s1098 + $0x98] sm:$0x1]
      %v1315 = vld [vmem:[%s1098 + $0x9c] sm:$0xf]
      %v1316 = vld [vmem:[%s1098 + $0xa0] sm:$0xf]
      %v1317 = vld [vmem:[%s1098 + $0xa4] sm:$0x1]
      %v1318 = vld [vmem:[%s1098 + $0xa8] sm:$0xf]
      %v1319 = vld [vmem:[%s1098 + $0xac] sm:$0xf]
      %v1320 = vld [vmem:[%s1098 + $0xb0] sm:$0x1]
      %v1321 = vld [vmem:[%s1098 + $0xb4] sm:$0xf]
      %v1322 = vld [vmem:[%s1098 + $0xb8] sm:$0xf]
      %v1323 = vld [vmem:[%s1098 + $0xbc] sm:$0x1]
      %v1372 = vunpack.c.l.b16 %v1276
      %v1373 = vunpack.c.l.b16 %v1277
      %v1374 = vunpack.c.l.b16 %v1278
      %v1375 = vunpack.c.l.b16 %v1279
      %v1376 = vunpack.c.l.b16 %v1280
      %v1377 = vunpack.c.l.b16 %v1281
      %v1378 = vunpack.c.l.b16 %v1282
      %v1379 = vunpack.c.l.b16 %v1283
      %v1380 = vunpack.c.l.b16 %v1284
      %v1381 = vunpack.c.l.b16 %v1285
      %v1382 = vunpack.c.l.b16 %v1286
      %v1383 = vunpack.c.l.b16 %v1287
      %v1384 = vunpack.c.l.b16 %v1288
      %v1385 = vunpack.c.l.b16 %v1289
      %v1386 = vunpack.c.l.b16 %v1290
      %v1387 = vunpack.c.l.b16 %v1291
      %v1388 = vunpack.c.l.b16 %v1292
      %v1389 = vunpack.c.l.b16 %v1293
      %v1390 = vunpack.c.l.b16 %v1294
      %v1391 = vunpack.c.l.b16 %v1295
      %v1392 = vunpack.c.l.b16 %v1296
      %v1393 = vunpack.c.l.b16 %v1297
      %v1394 = vunpack.c.l.b16 %v1298
      %v1395 = vunpack.c.l.b16 %v1299
      %v1396 = vunpack.c.l.b16 %v1300
      %v1397 = vunpack.c.l.b16 %v1301
      %v1398 = vunpack.c.l.b16 %v1302
      %v1399 = vunpack.c.l.b16 %v1303
      %v1400 = vunpack.c.l.b16 %v1304
      %v1401 = vunpack.c.l.b16 %v1305
      %v1402 = vunpack.c.l.b16 %v1306
      %v1403 = vunpack.c.l.b16 %v1307
      %v1404 = vunpack.c.l.b16 %v1308
      %v1405 = vunpack.c.l.b16 %v1309
      %v1406 = vunpack.c.l.b16 %v1310
      %v1407 = vunpack.c.l.b16 %v1311
      %v1408 = vunpack.c.l.b16 %v1312
      %v1409 = vunpack.c.l.b16 %v1313
      %v1410 = vunpack.c.l.b16 %v1314
      %v1411 = vunpack.c.l.b16 %v1315
      %v1412 = vunpack.c.l.b16 %v1316
      %v1413 = vunpack.c.l.b16 %v1317
      %v1414 = vunpack.c.l.b16 %v1318
      %v1415 = vunpack.c.l.b16 %v1319
      %v1416 = vunpack.c.l.b16 %v1320
      %v1417 = vunpack.c.l.b16 %v1321
      %v1418 = vunpack.c.l.b16 %v1322
      %v1419 = vunpack.c.l.b16 %v1323
      %v1420 = vpack.c.b16 %v1373, %v1372
      %v1421 = vpack.c.b16 %v1374, %v1374
      %v1422 = vpack.c.b16 %v1376, %v1375
      %v1423 = vpack.c.b16 %v1377, %v1377
      %v1424 = vpack.c.b16 %v1379, %v1378
      %v1425 = vpack.c.b16 %v1380, %v1380
      %v1426 = vpack.c.b16 %v1382, %v1381
      %v1427 = vpack.c.b16 %v1383, %v1383
      %v1428 = vpack.c.b16 %v1385, %v1384
      %v1429 = vpack.c.b16 %v1386, %v1386
      %v1430 = vpack.c.b16 %v1388, %v1387
      %v1431 = vpack.c.b16 %v1389, %v1389
      %v1432 = vpack.c.b16 %v1391, %v1390
      %v1433 = vpack.c.b16 %v1392, %v1392
      %v1434 = vpack.c.b16 %v1394, %v1393
      %v1435 = vpack.c.b16 %v1395, %v1395
      %v1436 = vpack.c.b16 %v1397, %v1396
      %v1437 = vpack.c.b16 %v1398, %v1398
      %v1438 = vpack.c.b16 %v1400, %v1399
      %v1439 = vpack.c.b16 %v1401, %v1401
      %v1440 = vpack.c.b16 %v1403, %v1402
      %v1441 = vpack.c.b16 %v1404, %v1404
      %v1442 = vpack.c.b16 %v1406, %v1405
      %v1443 = vpack.c.b16 %v1407, %v1407
      %v1444 = vpack.c.b16 %v1409, %v1408
      %v1445 = vpack.c.b16 %v1410, %v1410
      %v1446 = vpack.c.b16 %v1412, %v1411
      %v1447 = vpack.c.b16 %v1413, %v1413
      %v1448 = vpack.c.b16 %v1415, %v1414
      %v1449 = vpack.c.b16 %v1416, %v1416
      %v1450 = vpack.c.b16 %v1418, %v1417
      %v1451 = vpack.c.b16 %v1419, %v1419
      %v1453 = vshrl.u32 %v1420, 16
      %v1455 = vshll.u32 %v1420, 16
      %v1457 = vrot.slane %v1455, 1
      %v1458 = vor.u32 %v1453, %v1457
      %v1460 = vshll.u32 %v1421, 16
      %v1462 = vrot.slane %v1460, 1
      %v1463 = vsel %vm547, %v1458, %v1462
      %v1465 = vshrl.u32 %v1422, 16
      %v1467 = vshll.u32 %v1422, 16
      %v1469 = vrot.slane %v1467, 1
      %v1470 = vor.u32 %v1465, %v1469
      %v1472 = vshll.u32 %v1423, 16
      %v1474 = vrot.slane %v1472, 1
      %v1475 = vsel %vm547, %v1470, %v1474
      %v1477 = vshrl.u32 %v1424, 16
      %v1479 = vshll.u32 %v1424, 16
      %v1481 = vrot.slane %v1479, 1
      %v1482 = vor.u32 %v1477, %v1481
      %v1484 = vshll.u32 %v1425, 16
      %v1486 = vrot.slane %v1484, 1
      %v1487 = vsel %vm547, %v1482, %v1486
      %v1489 = vshrl.u32 %v1426, 16
      %v1491 = vshll.u32 %v1426, 16
      %v1493 = vrot.slane %v1491, 1
      %v1494 = vor.u32 %v1489, %v1493
      %v1496 = vshll.u32 %v1427, 16
      %v1498 = vrot.slane %v1496, 1
      %v1499 = vsel %vm547, %v1494, %v1498
      %v1501 = vshrl.u32 %v1428, 16
      %v1503 = vshll.u32 %v1428, 16
      %v1505 = vrot.slane %v1503, 1
      %v1506 = vor.u32 %v1501, %v1505
      %v1508 = vshll.u32 %v1429, 16
      %v1510 = vrot.slane %v1508, 1
      %v1511 = vsel %vm547, %v1506, %v1510
      %v1513 = vshrl.u32 %v1430, 16
      %v1515 = vshll.u32 %v1430, 16
      %v1517 = vrot.slane %v1515, 1
      %v1518 = vor.u32 %v1513, %v1517
      %v1520 = vshll.u32 %v1431, 16
      %v1522 = vrot.slane %v1520, 1
      %v1523 = vsel %vm547, %v1518, %v1522
      %v1525 = vshrl.u32 %v1432, 16
      %v1527 = vshll.u32 %v1432, 16
      %v1529 = vrot.slane %v1527, 1
      %v1530 = vor.u32 %v1525, %v1529
      %v1532 = vshll.u32 %v1433, 16
      %v1534 = vrot.slane %v1532, 1
      %v1535 = vsel %vm547, %v1530, %v1534
      %v1537 = vshrl.u32 %v1434, 16
      %v1539 = vshll.u32 %v1434, 16
      %v1541 = vrot.slane %v1539, 1
      %v1542 = vor.u32 %v1537, %v1541
      %v1544 = vshll.u32 %v1435, 16
      %v1546 = vrot.slane %v1544, 1
      %v1547 = vsel %vm547, %v1542, %v1546
      %v1549 = vshrl.u32 %v1436, 16
      %v1551 = vshll.u32 %v1436, 16
      %v1553 = vrot.slane %v1551, 1
      %v1554 = vor.u32 %v1549, %v1553
      %v1556 = vshll.u32 %v1437, 16
      %v1558 = vrot.slane %v1556, 1
      %v1559 = vsel %vm547, %v1554, %v1558
      %v1561 = vshrl.u32 %v1438, 16
      %v1563 = vshll.u32 %v1438, 16
      %v1565 = vrot.slane %v1563, 1
      %v1566 = vor.u32 %v1561, %v1565
      %v1568 = vshll.u32 %v1439, 16
      %v1570 = vrot.slane %v1568, 1
      %v1571 = vsel %vm547, %v1566, %v1570
      %v1573 = vshrl.u32 %v1440, 16
      %v1575 = vshll.u32 %v1440, 16
      %v1577 = vrot.slane %v1575, 1
      %v1578 = vor.u32 %v1573, %v1577
      %v1580 = vshll.u32 %v1441, 16
      %v1582 = vrot.slane %v1580, 1
      %v1583 = vsel %vm547, %v1578, %v1582
      %v1585 = vshrl.u32 %v1442, 16
      %v1587 = vshll.u32 %v1442, 16
      %v1589 = vrot.slane %v1587, 1
      %v1590 = vor.u32 %v1585, %v1589
      %v1592 = vshll.u32 %v1443, 16
      %v1594 = vrot.slane %v1592, 1
      %v1595 = vsel %vm547, %v1590, %v1594
      %v1597 = vshrl.u32 %v1444, 16
      %v1599 = vshll.u32 %v1444, 16
      %v1601 = vrot.slane %v1599, 1
      %v1602 = vor.u32 %v1597, %v1601
      %v1604 = vshll.u32 %v1445, 16
      %v1606 = vrot.slane %v1604, 1
      %v1607 = vsel %vm547, %v1602, %v1606
      %v1609 = vshrl.u32 %v1446, 16
      %v1611 = vshll.u32 %v1446, 16
      %v1613 = vrot.slane %v1611, 1
      %v1614 = vor.u32 %v1609, %v1613
      %v1616 = vshll.u32 %v1447, 16
      %v1618 = vrot.slane %v1616, 1
      %v1619 = vsel %vm547, %v1614, %v1618
      %v1621 = vshrl.u32 %v1448, 16
      %v1623 = vshll.u32 %v1448, 16
      %v1625 = vrot.slane %v1623, 1
      %v1626 = vor.u32 %v1621, %v1625
      %v1628 = vshll.u32 %v1449, 16
      %v1630 = vrot.slane %v1628, 1
      %v1631 = vsel %vm547, %v1626, %v1630
      %v1633 = vshrl.u32 %v1450, 16
      %v1635 = vshll.u32 %v1450, 16
      %v1637 = vrot.slane %v1635, 1
      %v1638 = vor.u32 %v1633, %v1637
      %v1640 = vshll.u32 %v1451, 16
      %v1642 = vrot.slane %v1640, 1
      %v1643 = vsel %vm547, %v1638, %v1642
      %1644 = vrot.lane.b32.xlu0 %v1463, 16
      %v1645 = vpop.permute.xlu0 %1644
      %1646 = vrot.lane.b32.xlu0 %v1475, 16
      %v1647 = vpop.permute.xlu0 %1646
      %1648 = vrot.lane.b32.xlu0 %v1487, 16
      %v1649 = vpop.permute.xlu0 %1648
      %1650 = vrot.lane.b32.xlu0 %v1499, 16
      %v1651 = vpop.permute.xlu0 %1650
      %1652 = vrot.lane.b32.xlu0 %v1511, 16
      %v1653 = vpop.permute.xlu0 %1652
      %1654 = vrot.lane.b32.xlu0 %v1523, 16
      %v1655 = vpop.permute.xlu0 %1654
      %1656 = vrot.lane.b32.xlu0 %v1535, 16
      %v1657 = vpop.permute.xlu0 %1656
      %1658 = vrot.lane.b32.xlu0 %v1547, 16
      %v1659 = vpop.permute.xlu0 %1658
      %1660 = vrot.lane.b32.xlu0 %v1559, 16
      %v1661 = vpop.permute.xlu0 %1660
      %1662 = vrot.lane.b32.xlu0 %v1571, 16
      %v1663 = vpop.permute.xlu0 %1662
      %1664 = vrot.lane.b32.xlu0 %v1583, 16
      %v1665 = vpop.permute.xlu0 %1664
      %1666 = vrot.lane.b32.xlu0 %v1595, 16
      %v1667 = vpop.permute.xlu0 %1666
      %1668 = vrot.lane.b32.xlu0 %v1607, 16
      %v1669 = vpop.permute.xlu0 %1668
      %1670 = vrot.lane.b32.xlu0 %v1619, 16
      %v1671 = vpop.permute.xlu0 %1670
      %1672 = vrot.lane.b32.xlu0 %v1631, 16
      %v1673 = vpop.permute.xlu0 %1672
      %1674 = vrot.lane.b32.xlu0 %v1643, 16
      %v1675 = vpop.permute.xlu0 %1674
      %vm1692 = vcmask 162944
      %1693 = vst.msk [vmem:[#allocation2] sm:$0xff] %vm1692, %v1645
      %1694 = vst.msk [vmem:[#allocation2 + $0x8] sm:$0xff] %vm1692, %v1647
      %1695 = vst.msk [vmem:[#allocation2 + $0x10] sm:$0xff] %vm1692, %v1649
      %1696 = vst.msk [vmem:[#allocation2 + $0x18] sm:$0xff] %vm1692, %v1651
      %1697 = vst.msk [vmem:[#allocation2 + $0x20] sm:$0xff] %vm1692, %v1653
      %1698 = vst.msk [vmem:[#allocation2 + $0x28] sm:$0xff] %vm1692, %v1655
      %1699 = vst.msk [vmem:[#allocation2 + $0x30] sm:$0xff] %vm1692, %v1657
      %1700 = vst.msk [vmem:[#allocation2 + $0x38] sm:$0xff] %vm1692, %v1659
      %1701 = vst.msk [vmem:[#allocation2 + $0x40] sm:$0xff] %vm1692, %v1661
      %1702 = vst.msk [vmem:[#allocation2 + $0x48] sm:$0xff] %vm1692, %v1663
      %1703 = vst.msk [vmem:[#allocation2 + $0x50] sm:$0xff] %vm1692, %v1665
      %1704 = vst.msk [vmem:[#allocation2 + $0x58] sm:$0xff] %vm1692, %v1667
      %1705 = vst.msk [vmem:[#allocation2 + $0x60] sm:$0xff] %vm1692, %v1669
      %1706 = vst.msk [vmem:[#allocation2 + $0x68] sm:$0xff] %vm1692, %v1671
      %1707 = vst.msk [vmem:[#allocation2 + $0x70] sm:$0xff] %vm1692, %v1673
      %1708 = vst.msk [vmem:[#allocation2 + $0x78] sm:$0xff] %vm1692, %v1675
      %v1709 = vld [vmem:[%s1098] sm:$0xe]
      %v1710 = vld [vmem:[%s1098 + $0x4] sm:$0xf]
      %v1711 = vld [vmem:[%s1098 + $0x8] sm:$0x1]
      %v1712 = vld [vmem:[%s1098 + $0xc] sm:$0xe]
      %v1713 = vld [vmem:[%s1098 + $0x10] sm:$0xf]
      %v1714 = vld [vmem:[%s1098 + $0x14] sm:$0x1]
      %v1715 = vld [vmem:[%s1098 + $0x18] sm:$0xe]
      %v1716 = vld [vmem:[%s1098 + $0x1c] sm:$0xf]
      %v1717 = vld [vmem:[%s1098 + $0x20] sm:$0x1]
      %v1718 = vld [vmem:[%s1098 + $0x24] sm:$0xe]
      %v1719 = vld [vmem:[%s1098 + $0x28] sm:$0xf]
      %v1720 = vld [vmem:[%s1098 + $0x2c] sm:$0x1]
      %v1721 = vld [vmem:[%s1098 + $0x30] sm:$0xe]
      %v1722 = vld [vmem:[%s1098 + $0x34] sm:$0xf]
      %v1723 = vld [vmem:[%s1098 + $0x38] sm:$0x1]
      %v1724 = vld [vmem:[%s1098 + $0x3c] sm:$0xe]
      %v1725 = vld [vmem:[%s1098 + $0x40] sm:$0xf]
      %v1726 = vld [vmem:[%s1098 + $0x44] sm:$0x1]
      %v1727 = vld [vmem:[%s1098 + $0x48] sm:$0xe]
      %v1728 = vld [vmem:[%s1098 + $0x4c] sm:$0xf]
      %v1729 = vld [vmem:[%s1098 + $0x50] sm:$0x1]
      %v1730 = vld [vmem:[%s1098 + $0x54] sm:$0xe]
      %v1731 = vld [vmem:[%s1098 + $0x58] sm:$0xf]
      %v1732 = vld [vmem:[%s1098 + $0x5c] sm:$0x1]
      %v1733 = vld [vmem:[%s1098 + $0x60] sm:$0xe]
      %v1734 = vld [vmem:[%s1098 + $0x64] sm:$0xf]
      %v1735 = vld [vmem:[%s1098 + $0x68] sm:$0x1]
      %v1736 = vld [vmem:[%s1098 + $0x6c] sm:$0xe]
      %v1737 = vld [vmem:[%s1098 + $0x70] sm:$0xf]
      %v1738 = vld [vmem:[%s1098 + $0x74] sm:$0x1]
      %v1739 = vld [vmem:[%s1098 + $0x78] sm:$0xe]
      %v1740 = vld [vmem:[%s1098 + $0x7c] sm:$0xf]
      %v1741 = vld [vmem:[%s1098 + $0x80] sm:$0x1]
      %v1742 = vld [vmem:[%s1098 + $0x84] sm:$0xe]
      %v1743 = vld [vmem:[%s1098 + $0x88] sm:$0xf]
      %v1744 = vld [vmem:[%s1098 + $0x8c] sm:$0x1]
      %v1745 = vld [vmem:[%s1098 + $0x90] sm:$0xe]
      %v1746 = vld [vmem:[%s1098 + $0x94] sm:$0xf]
      %v1747 = vld [vmem:[%s1098 + $0x98] sm:$0x1]
      %v1748 = vld [vmem:[%s1098 + $0x9c] sm:$0xe]
      %v1749 = vld [vmem:[%s1098 + $0xa0] sm:$0xf]
      %v1750 = vld [vmem:[%s1098 + $0xa4] sm:$0x1]
      %v1751 = vld [vmem:[%s1098 + $0xa8] sm:$0xe]
      %v1752 = vld [vmem:[%s1098 + $0xac] sm:$0xf]
      %v1753 = vld [vmem:[%s1098 + $0xb0] sm:$0x1]
      %v1754 = vld [vmem:[%s1098 + $0xb4] sm:$0xe]
      %v1755 = vld [vmem:[%s1098 + $0xb8] sm:$0xf]
      %v1756 = vld [vmem:[%s1098 + $0xbc] sm:$0x1]
      %v1805 = vunpack.c.l.b16 %v1709
      %v1806 = vunpack.c.l.b16 %v1710
      %v1807 = vunpack.c.l.b16 %v1711
      %v1808 = vunpack.c.l.b16 %v1712
      %v1809 = vunpack.c.l.b16 %v1713
      %v1810 = vunpack.c.l.b16 %v1714
      %v1811 = vunpack.c.l.b16 %v1715
      %v1812 = vunpack.c.l.b16 %v1716
      %v1813 = vunpack.c.l.b16 %v1717
      %v1814 = vunpack.c.l.b16 %v1718
      %v1815 = vunpack.c.l.b16 %v1719
      %v1816 = vunpack.c.l.b16 %v1720
      %v1817 = vunpack.c.l.b16 %v1721
      %v1818 = vunpack.c.l.b16 %v1722
      %v1819 = vunpack.c.l.b16 %v1723
      %v1820 = vunpack.c.l.b16 %v1724
      %v1821 = vunpack.c.l.b16 %v1725
      %v1822 = vunpack.c.l.b16 %v1726
      %v1823 = vunpack.c.l.b16 %v1727
      %v1824 = vunpack.c.l.b16 %v1728
      %v1825 = vunpack.c.l.b16 %v1729
      %v1826 = vunpack.c.l.b16 %v1730
      %v1827 = vunpack.c.l.b16 %v1731
      %v1828 = vunpack.c.l.b16 %v1732
      %v1829 = vunpack.c.l.b16 %v1733
      %v1830 = vunpack.c.l.b16 %v1734
      %v1831 = vunpack.c.l.b16 %v1735
      %v1832 = vunpack.c.l.b16 %v1736
      %v1833 = vunpack.c.l.b16 %v1737
      %v1834 = vunpack.c.l.b16 %v1738
      %v1835 = vunpack.c.l.b16 %v1739
      %v1836 = vunpack.c.l.b16 %v1740
      %v1837 = vunpack.c.l.b16 %v1741
      %v1838 = vunpack.c.l.b16 %v1742
      %v1839 = vunpack.c.l.b16 %v1743
      %v1840 = vunpack.c.l.b16 %v1744
      %v1841 = vunpack.c.l.b16 %v1745
      %v1842 = vunpack.c.l.b16 %v1746
      %v1843 = vunpack.c.l.b16 %v1747
      %v1844 = vunpack.c.l.b16 %v1748
      %v1845 = vunpack.c.l.b16 %v1749
      %v1846 = vunpack.c.l.b16 %v1750
      %v1847 = vunpack.c.l.b16 %v1751
      %v1848 = vunpack.c.l.b16 %v1752
      %v1849 = vunpack.c.l.b16 %v1753
      %v1850 = vunpack.c.l.b16 %v1754
      %v1851 = vunpack.c.l.b16 %v1755
      %v1852 = vunpack.c.l.b16 %v1756
      %v1853 = vpack.c.b16 %v1806, %v1805
      %v1854 = vpack.c.b16 %v1807, %v1807
      %v1855 = vpack.c.b16 %v1809, %v1808
      %v1856 = vpack.c.b16 %v1810, %v1810
      %v1857 = vpack.c.b16 %v1812, %v1811
      %v1858 = vpack.c.b16 %v1813, %v1813
      %v1859 = vpack.c.b16 %v1815, %v1814
      %v1860 = vpack.c.b16 %v1816, %v1816
      %v1861 = vpack.c.b16 %v1818, %v1817
      %v1862 = vpack.c.b16 %v1819, %v1819
      %v1863 = vpack.c.b16 %v1821, %v1820
      %v1864 = vpack.c.b16 %v1822, %v1822
      %v1865 = vpack.c.b16 %v1824, %v1823
      %v1866 = vpack.c.b16 %v1825, %v1825
      %v1867 = vpack.c.b16 %v1827, %v1826
      %v1868 = vpack.c.b16 %v1828, %v1828
      %v1869 = vpack.c.b16 %v1830, %v1829
      %v1870 = vpack.c.b16 %v1831, %v1831
      %v1871 = vpack.c.b16 %v1833, %v1832
      %v1872 = vpack.c.b16 %v1834, %v1834
      %v1873 = vpack.c.b16 %v1836, %v1835
      %v1874 = vpack.c.b16 %v1837, %v1837
      %v1875 = vpack.c.b16 %v1839, %v1838
      %v1876 = vpack.c.b16 %v1840, %v1840
      %v1877 = vpack.c.b16 %v1842, %v1841
      %v1878 = vpack.c.b16 %v1843, %v1843
      %v1879 = vpack.c.b16 %v1845, %v1844
      %v1880 = vpack.c.b16 %v1846, %v1846
      %v1881 = vpack.c.b16 %v1848, %v1847
      %v1882 = vpack.c.b16 %v1849, %v1849
      %v1883 = vpack.c.b16 %v1851, %v1850
      %v1884 = vpack.c.b16 %v1852, %v1852
      %v1885 = vrot.slane %v1853, 1
      %v1886 = vrot.slane %v1854, 1
      %v1887 = vsel %vm981, %v1885, %v1886
      %v1888 = vrot.slane %v1855, 1
      %v1889 = vrot.slane %v1856, 1
      %v1890 = vsel %vm981, %v1888, %v1889
      %v1891 = vrot.slane %v1857, 1
      %v1892 = vrot.slane %v1858, 1
      %v1893 = vsel %vm981, %v1891, %v1892
      %v1894 = vrot.slane %v1859, 1
      %v1895 = vrot.slane %v1860, 1
      %v1896 = vsel %vm981, %v1894, %v1895
      %v1897 = vrot.slane %v1861, 1
      %v1898 = vrot.slane %v1862, 1
      %v1899 = vsel %vm981, %v1897, %v1898
      %v1900 = vrot.slane %v1863, 1
      %v1901 = vrot.slane %v1864, 1
      %v1902 = vsel %vm981, %v1900, %v1901
      %v1903 = vrot.slane %v1865, 1
      %v1904 = vrot.slane %v1866, 1
      %v1905 = vsel %vm981, %v1903, %v1904
      %v1906 = vrot.slane %v1867, 1
      %v1907 = vrot.slane %v1868, 1
      %v1908 = vsel %vm981, %v1906, %v1907
      %v1909 = vrot.slane %v1869, 1
      %v1910 = vrot.slane %v1870, 1
      %v1911 = vsel %vm981, %v1909, %v1910
      %v1912 = vrot.slane %v1871, 1
      %v1913 = vrot.slane %v1872, 1
      %v1914 = vsel %vm981, %v1912, %v1913
      %v1915 = vrot.slane %v1873, 1
      %v1916 = vrot.slane %v1874, 1
      %v1917 = vsel %vm981, %v1915, %v1916
      %v1918 = vrot.slane %v1875, 1
      %v1919 = vrot.slane %v1876, 1
      %v1920 = vsel %vm981, %v1918, %v1919
      %v1921 = vrot.slane %v1877, 1
      %v1922 = vrot.slane %v1878, 1
      %v1923 = vsel %vm981, %v1921, %v1922
      %v1924 = vrot.slane %v1879, 1
      %v1925 = vrot.slane %v1880, 1
      %v1926 = vsel %vm981, %v1924, %v1925
      %v1927 = vrot.slane %v1881, 1
      %v1928 = vrot.slane %v1882, 1
      %v1929 = vsel %vm981, %v1927, %v1928
      %v1930 = vrot.slane %v1883, 1
      %v1931 = vrot.slane %v1884, 1
      %v1932 = vsel %vm981, %v1930, %v1931
      %1933 = vrot.lane.b32.xlu0 %v1887, 20
      %v1934 = vpop.permute.xlu0 %1933
      %1935 = vrot.lane.b32.xlu0 %v1890, 20
      %v1936 = vpop.permute.xlu0 %1935
      %1937 = vrot.lane.b32.xlu0 %v1893, 20
      %v1938 = vpop.permute.xlu0 %1937
      %1939 = vrot.lane.b32.xlu0 %v1896, 20
      %v1940 = vpop.permute.xlu0 %1939
      %1941 = vrot.lane.b32.xlu0 %v1899, 20
      %v1942 = vpop.permute.xlu0 %1941
      %1943 = vrot.lane.b32.xlu0 %v1902, 20
      %v1944 = vpop.permute.xlu0 %1943
      %1945 = vrot.lane.b32.xlu0 %v1905, 20
      %v1946 = vpop.permute.xlu0 %1945
      %1947 = vrot.lane.b32.xlu0 %v1908, 20
      %v1948 = vpop.permute.xlu0 %1947
      %1949 = vrot.lane.b32.xlu0 %v1911, 20
      %v1950 = vpop.permute.xlu0 %1949
      %1951 = vrot.lane.b32.xlu0 %v1914, 20
      %v1952 = vpop.permute.xlu0 %1951
      %1953 = vrot.lane.b32.xlu0 %v1917, 20
      %v1954 = vpop.permute.xlu0 %1953
      %1955 = vrot.lane.b32.xlu0 %v1920, 20
      %v1956 = vpop.permute.xlu0 %1955
      %1957 = vrot.lane.b32.xlu0 %v1923, 20
      %v1958 = vpop.permute.xlu0 %1957
      %1959 = vrot.lane.b32.xlu0 %v1926, 20
      %v1960 = vpop.permute.xlu0 %1959
      %1961 = vrot.lane.b32.xlu0 %v1929, 20
      %v1962 = vpop.permute.xlu0 %1961
      %1963 = vrot.lane.b32.xlu0 %v1932, 20
      %v1964 = vpop.permute.xlu0 %1963
      %vm1981 = vcmask 195744
      %1982 = vst.msk [vmem:[#allocation2] sm:$0xff] %vm1981, %v1934
      %1983 = vst.msk [vmem:[#allocation2 + $0x8] sm:$0xff] %vm1981, %v1936
      %1984 = vst.msk [vmem:[#allocation2 + $0x10] sm:$0xff] %vm1981, %v1938
      %1985 = vst.msk [vmem:[#allocation2 + $0x18] sm:$0xff] %vm1981, %v1940
      %1986 = vst.msk [vmem:[#allocation2 + $0x20] sm:$0xff] %vm1981, %v1942
      %1987 = vst.msk [vmem:[#allocation2 + $0x28] sm:$0xff] %vm1981, %v1944
      %1988 = vst.msk [vmem:[#allocation2 + $0x30] sm:$0xff] %vm1981, %v1946
      %1989 = vst.msk [vmem:[#allocation2 + $0x38] sm:$0xff] %vm1981, %v1948
      %1990 = vst.msk [vmem:[#allocation2 + $0x40] sm:$0xff] %vm1981, %v1950
      %1991 = vst.msk [vmem:[#allocation2 + $0x48] sm:$0xff] %vm1981, %v1952
      %1992 = vst.msk [vmem:[#allocation2 + $0x50] sm:$0xff] %vm1981, %v1954
      %1993 = vst.msk [vmem:[#allocation2 + $0x58] sm:$0xff] %vm1981, %v1956
      %1994 = vst.msk [vmem:[#allocation2 + $0x60] sm:$0xff] %vm1981, %v1958
      %1995 = vst.msk [vmem:[#allocation2 + $0x68] sm:$0xff] %vm1981, %v1960
      %1996 = vst.msk [vmem:[#allocation2 + $0x70] sm:$0xff] %vm1981, %v1962
      %1997 = vst.msk [vmem:[#allocation2 + $0x78] sm:$0xff] %vm1981, %v1964
      %s1998 = sadd.s32 %s222, 2
      %s1999 = smul.u32 %s1998, 3
      %s2000 = smul.addr %s1999, 4
      %s2001 = scalar_lea.vmem %s210, %s2000
      %v2002 = vld [vmem:[%s2001] sm:$0xf]
      %v2003 = vld [vmem:[%s2001 + $0x4] sm:$0xf]
      %v2004 = vld [vmem:[%s2001 + $0xc] sm:$0xf]
      %v2005 = vld [vmem:[%s2001 + $0x10] sm:$0xf]
      %v2006 = vld [vmem:[%s2001 + $0x18] sm:$0xf]
      %v2007 = vld [vmem:[%s2001 + $0x1c] sm:$0xf]
      %v2008 = vld [vmem:[%s2001 + $0x24] sm:$0xf]
      %v2009 = vld [vmem:[%s2001 + $0x28] sm:$0xf]
      %v2010 = vld [vmem:[%s2001 + $0x30] sm:$0xf]
      %v2011 = vld [vmem:[%s2001 + $0x34] sm:$0xf]
      %v2012 = vld [vmem:[%s2001 + $0x3c] sm:$0xf]
      %v2013 = vld [vmem:[%s2001 + $0x40] sm:$0xf]
      %v2014 = vld [vmem:[%s2001 + $0x48] sm:$0xf]
      %v2015 = vld [vmem:[%s2001 + $0x4c] sm:$0xf]
      %v2016 = vld [vmem:[%s2001 + $0x54] sm:$0xf]
      %v2017 = vld [vmem:[%s2001 + $0x58] sm:$0xf]
      %v2018 = vld [vmem:[%s2001 + $0x60] sm:$0xf]
      %v2019 = vld [vmem:[%s2001 + $0x64] sm:$0xf]
      %v2020 = vld [vmem:[%s2001 + $0x6c] sm:$0xf]
      %v2021 = vld [vmem:[%s2001 + $0x70] sm:$0xf]
      %v2022 = vld [vmem:[%s2001 + $0x78] sm:$0xf]
      %v2023 = vld [vmem:[%s2001 + $0x7c] sm:$0xf]
      %v2024 = vld [vmem:[%s2001 + $0x84] sm:$0xf]
      %v2025 = vld [vmem:[%s2001 + $0x88] sm:$0xf]
      %v2026 = vld [vmem:[%s2001 + $0x90] sm:$0xf]
      %v2027 = vld [vmem:[%s2001 + $0x94] sm:$0xf]
      %v2028 = vld [vmem:[%s2001 + $0x9c] sm:$0xf]
      %v2029 = vld [vmem:[%s2001 + $0xa0] sm:$0xf]
      %v2030 = vld [vmem:[%s2001 + $0xa8] sm:$0xf]
      %v2031 = vld [vmem:[%s2001 + $0xac] sm:$0xf]
      %v2032 = vld [vmem:[%s2001 + $0xb4] sm:$0xf]
      %v2033 = vld [vmem:[%s2001 + $0xb8] sm:$0xf]
      %v2066 = vunpack.c.l.b16 %v2002
      %v2067 = vunpack.c.l.b16 %v2003
      %v2068 = vunpack.c.l.b16 %v2004
      %v2069 = vunpack.c.l.b16 %v2005
      %v2070 = vunpack.c.l.b16 %v2006
      %v2071 = vunpack.c.l.b16 %v2007
      %v2072 = vunpack.c.l.b16 %v2008
      %v2073 = vunpack.c.l.b16 %v2009
      %v2074 = vunpack.c.l.b16 %v2010
      %v2075 = vunpack.c.l.b16 %v2011
      %v2076 = vunpack.c.l.b16 %v2012
      %v2077 = vunpack.c.l.b16 %v2013
      %v2078 = vunpack.c.l.b16 %v2014
      %v2079 = vunpack.c.l.b16 %v2015
      %v2080 = vunpack.c.l.b16 %v2016
      %v2081 = vunpack.c.l.b16 %v2017
      %v2082 = vunpack.c.l.b16 %v2018
      %v2083 = vunpack.c.l.b16 %v2019
      %v2084 = vunpack.c.l.b16 %v2020
      %v2085 = vunpack.c.l.b16 %v2021
      %v2086 = vunpack.c.l.b16 %v2022
      %v2087 = vunpack.c.l.b16 %v2023
      %v2088 = vunpack.c.l.b16 %v2024
      %v2089 = vunpack.c.l.b16 %v2025
      %v2090 = vunpack.c.l.b16 %v2026
      %v2091 = vunpack.c.l.b16 %v2027
      %v2092 = vunpack.c.l.b16 %v2028
      %v2093 = vunpack.c.l.b16 %v2029
      %v2094 = vunpack.c.l.b16 %v2030
      %v2095 = vunpack.c.l.b16 %v2031
      %v2096 = vunpack.c.l.b16 %v2032
      %v2097 = vunpack.c.l.b16 %v2033
      %v2098 = vpack.c.b16 %v2067, %v2066
      %v2099 = vpack.c.b16 %v2069, %v2068
      %v2100 = vpack.c.b16 %v2071, %v2070
      %v2101 = vpack.c.b16 %v2073, %v2072
      %v2102 = vpack.c.b16 %v2075, %v2074
      %v2103 = vpack.c.b16 %v2077, %v2076
      %v2104 = vpack.c.b16 %v2079, %v2078
      %v2105 = vpack.c.b16 %v2081, %v2080
      %v2106 = vpack.c.b16 %v2083, %v2082
      %v2107 = vpack.c.b16 %v2085, %v2084
      %v2108 = vpack.c.b16 %v2087, %v2086
      %v2109 = vpack.c.b16 %v2089, %v2088
      %v2110 = vpack.c.b16 %v2091, %v2090
      %v2111 = vpack.c.b16 %v2093, %v2092
      %v2112 = vpack.c.b16 %v2095, %v2094
      %v2113 = vpack.c.b16 %v2097, %v2096
      %2114 = vrot.lane.b32.xlu0 %v2098, 24
      %v2115 = vpop.permute.xlu0 %2114
      %2116 = vrot.lane.b32.xlu0 %v2099, 24
      %v2117 = vpop.permute.xlu0 %2116
      %2118 = vrot.lane.b32.xlu0 %v2100, 24
      %v2119 = vpop.permute.xlu0 %2118
      %2120 = vrot.lane.b32.xlu0 %v2101, 24
      %v2121 = vpop.permute.xlu0 %2120
      %2122 = vrot.lane.b32.xlu0 %v2102, 24
      %v2123 = vpop.permute.xlu0 %2122
      %2124 = vrot.lane.b32.xlu0 %v2103, 24
      %v2125 = vpop.permute.xlu0 %2124
      %2126 = vrot.lane.b32.xlu0 %v2104, 24
      %v2127 = vpop.permute.xlu0 %2126
      %2128 = vrot.lane.b32.xlu0 %v2105, 24
      %v2129 = vpop.permute.xlu0 %2128
      %2130 = vrot.lane.b32.xlu0 %v2106, 24
      %v2131 = vpop.permute.xlu0 %2130
      %2132 = vrot.lane.b32.xlu0 %v2107, 24
      %v2133 = vpop.permute.xlu0 %2132
      %2134 = vrot.lane.b32.xlu0 %v2108, 24
      %v2135 = vpop.permute.xlu0 %2134
      %2136 = vrot.lane.b32.xlu0 %v2109, 24
      %v2137 = vpop.permute.xlu0 %2136
      %2138 = vrot.lane.b32.xlu0 %v2110, 24
      %v2139 = vpop.permute.xlu0 %2138
      %2140 = vrot.lane.b32.xlu0 %v2111, 24
      %v2141 = vpop.permute.xlu0 %2140
      %2142 = vrot.lane.b32.xlu0 %v2112, 24
      %v2143 = vpop.permute.xlu0 %2142
      %2144 = vrot.lane.b32.xlu0 %v2113, 24
      %v2145 = vpop.permute.xlu0 %2144
      %vm2162 = vcmask 228544
      %2163 = vst.msk [vmem:[#allocation2] sm:$0xff] %vm2162, %v2115
      %2164 = vst.msk [vmem:[#allocation2 + $0x8] sm:$0xff] %vm2162, %v2117
      %2165 = vst.msk [vmem:[#allocation2 + $0x10] sm:$0xff] %vm2162, %v2119
      %2166 = vst.msk [vmem:[#allocation2 + $0x18] sm:$0xff] %vm2162, %v2121
      %2167 = vst.msk [vmem:[#allocation2 + $0x20] sm:$0xff] %vm2162, %v2123
      %2168 = vst.msk [vmem:[#allocation2 + $0x28] sm:$0xff] %vm2162, %v2125
      %2169 = vst.msk [vmem:[#allocation2 + $0x30] sm:$0xff] %vm2162, %v2127
      %2170 = vst.msk [vmem:[#allocation2 + $0x38] sm:$0xff] %vm2162, %v2129
      %2171 = vst.msk [vmem:[#allocation2 + $0x40] sm:$0xff] %vm2162, %v2131
      %2172 = vst.msk [vmem:[#allocation2 + $0x48] sm:$0xff] %vm2162, %v2133
      %2173 = vst.msk [vmem:[#allocation2 + $0x50] sm:$0xff] %vm2162, %v2135
      %2174 = vst.msk [vmem:[#allocation2 + $0x58] sm:$0xff] %vm2162, %v2137
      %2175 = vst.msk [vmem:[#allocation2 + $0x60] sm:$0xff] %vm2162, %v2139
      %2176 = vst.msk [vmem:[#allocation2 + $0x68] sm:$0xff] %vm2162, %v2141
      %2177 = vst.msk [vmem:[#allocation2 + $0x70] sm:$0xff] %vm2162, %v2143
      %2178 = vst.msk [vmem:[#allocation2 + $0x78] sm:$0xff] %vm2162, %v2145
      %v2179 = vld [vmem:[%s2001] sm:$0xf]
      %v2180 = vld [vmem:[%s2001 + $0x4] sm:$0xf]
      %v2181 = vld [vmem:[%s2001 + $0x8] sm:$0x1]
      %v2182 = vld [vmem:[%s2001 + $0xc] sm:$0xf]
      %v2183 = vld [vmem:[%s2001 + $0x10] sm:$0xf]
      %v2184 = vld [vmem:[%s2001 + $0x14] sm:$0x1]
      %v2185 = vld [vmem:[%s2001 + $0x18] sm:$0xf]
      %v2186 = vld [vmem:[%s2001 + $0x1c] sm:$0xf]
      %v2187 = vld [vmem:[%s2001 + $0x20] sm:$0x1]
      %v2188 = vld [vmem:[%s2001 + $0x24] sm:$0xf]
      %v2189 = vld [vmem:[%s2001 + $0x28] sm:$0xf]
      %v2190 = vld [vmem:[%s2001 + $0x2c] sm:$0x1]
      %v2191 = vld [vmem:[%s2001 + $0x30] sm:$0xf]
      %v2192 = vld [vmem:[%s2001 + $0x34] sm:$0xf]
      %v2193 = vld [vmem:[%s2001 + $0x38] sm:$0x1]
      %v2194 = vld [vmem:[%s2001 + $0x3c] sm:$0xf]
      %v2195 = vld [vmem:[%s2001 + $0x40] sm:$0xf]
      %v2196 = vld [vmem:[%s2001 + $0x44] sm:$0x1]
      %v2197 = vld [vmem:[%s2001 + $0x48] sm:$0xf]
      %v2198 = vld [vmem:[%s2001 + $0x4c] sm:$0xf]
      %v2199 = vld [vmem:[%s2001 + $0x50] sm:$0x1]
      %v2200 = vld [vmem:[%s2001 + $0x54] sm:$0xf]
      %v2201 = vld [vmem:[%s2001 + $0x58] sm:$0xf]
      %v2202 = vld [vmem:[%s2001 + $0x5c] sm:$0x1]
      %v2203 = vld [vmem:[%s2001 + $0x60] sm:$0xf]
      %v2204 = vld [vmem:[%s2001 + $0x64] sm:$0xf]
      %v2205 = vld [vmem:[%s2001 + $0x68] sm:$0x1]
      %v2206 = vld [vmem:[%s2001 + $0x6c] sm:$0xf]
      %v2207 = vld [vmem:[%s2001 + $0x70] sm:$0xf]
      %v2208 = vld [vmem:[%s2001 + $0x74] sm:$0x1]
      %v2209 = vld [vmem:[%s2001 + $0x78] sm:$0xf]
      %v2210 = vld [vmem:[%s2001 + $0x7c] sm:$0xf]
      %v2211 = vld [vmem:[%s2001 + $0x80] sm:$0x1]
      %v2212 = vld [vmem:[%s2001 + $0x84] sm:$0xf]
      %v2213 = vld [vmem:[%s2001 + $0x88] sm:$0xf]
      %v2214 = vld [vmem:[%s2001 + $0x8c] sm:$0x1]
      %v2215 = vld [vmem:[%s2001 + $0x90] sm:$0xf]
      %v2216 = vld [vmem:[%s2001 + $0x94] sm:$0xf]
      %v2217 = vld [vmem:[%s2001 + $0x98] sm:$0x1]
      %v2218 = vld [vmem:[%s2001 + $0x9c] sm:$0xf]
      %v2219 = vld [vmem:[%s2001 + $0xa0] sm:$0xf]
      %v2220 = vld [vmem:[%s2001 + $0xa4] sm:$0x1]
      %v2221 = vld [vmem:[%s2001 + $0xa8] sm:$0xf]
      %v2222 = vld [vmem:[%s2001 + $0xac] sm:$0xf]
      %v2223 = vld [vmem:[%s2001 + $0xb0] sm:$0x1]
      %v2224 = vld [vmem:[%s2001 + $0xb4] sm:$0xf]
      %v2225 = vld [vmem:[%s2001 + $0xb8] sm:$0xf]
      %v2226 = vld [vmem:[%s2001 + $0xbc] sm:$0x1]
      %v2275 = vunpack.c.l.b16 %v2179
      %v2276 = vunpack.c.l.b16 %v2180
      %v2277 = vunpack.c.l.b16 %v2181
      %v2278 = vunpack.c.l.b16 %v2182
      %v2279 = vunpack.c.l.b16 %v2183
      %v2280 = vunpack.c.l.b16 %v2184
      %v2281 = vunpack.c.l.b16 %v2185
      %v2282 = vunpack.c.l.b16 %v2186
      %v2283 = vunpack.c.l.b16 %v2187
      %v2284 = vunpack.c.l.b16 %v2188
      %v2285 = vunpack.c.l.b16 %v2189
      %v2286 = vunpack.c.l.b16 %v2190
      %v2287 = vunpack.c.l.b16 %v2191
      %v2288 = vunpack.c.l.b16 %v2192
      %v2289 = vunpack.c.l.b16 %v2193
      %v2290 = vunpack.c.l.b16 %v2194
      %v2291 = vunpack.c.l.b16 %v2195
      %v2292 = vunpack.c.l.b16 %v2196
      %v2293 = vunpack.c.l.b16 %v2197
      %v2294 = vunpack.c.l.b16 %v2198
      %v2295 = vunpack.c.l.b16 %v2199
      %v2296 = vunpack.c.l.b16 %v2200
      %v2297 = vunpack.c.l.b16 %v2201
      %v2298 = vunpack.c.l.b16 %v2202
      %v2299 = vunpack.c.l.b16 %v2203
      %v2300 = vunpack.c.l.b16 %v2204
      %v2301 = vunpack.c.l.b16 %v2205
      %v2302 = vunpack.c.l.b16 %v2206
      %v2303 = vunpack.c.l.b16 %v2207
      %v2304 = vunpack.c.l.b16 %v2208
      %v2305 = vunpack.c.l.b16 %v2209
      %v2306 = vunpack.c.l.b16 %v2210
      %v2307 = vunpack.c.l.b16 %v2211
      %v2308 = vunpack.c.l.b16 %v2212
      %v2309 = vunpack.c.l.b16 %v2213
      %v2310 = vunpack.c.l.b16 %v2214
      %v2311 = vunpack.c.l.b16 %v2215
      %v2312 = vunpack.c.l.b16 %v2216
      %v2313 = vunpack.c.l.b16 %v2217
      %v2314 = vunpack.c.l.b16 %v2218
      %v2315 = vunpack.c.l.b16 %v2219
      %v2316 = vunpack.c.l.b16 %v2220
      %v2317 = vunpack.c.l.b16 %v2221
      %v2318 = vunpack.c.l.b16 %v2222
      %v2319 = vunpack.c.l.b16 %v2223
      %v2320 = vunpack.c.l.b16 %v2224
      %v2321 = vunpack.c.l.b16 %v2225
      %v2322 = vunpack.c.l.b16 %v2226
      %v2323 = vpack.c.b16 %v2276, %v2275
      %v2324 = vpack.c.b16 %v2277, %v2277
      %v2325 = vpack.c.b16 %v2279, %v2278
      %v2326 = vpack.c.b16 %v2280, %v2280
      %v2327 = vpack.c.b16 %v2282, %v2281
      %v2328 = vpack.c.b16 %v2283, %v2283
      %v2329 = vpack.c.b16 %v2285, %v2284
      %v2330 = vpack.c.b16 %v2286, %v2286
      %v2331 = vpack.c.b16 %v2288, %v2287
      %v2332 = vpack.c.b16 %v2289, %v2289
      %v2333 = vpack.c.b16 %v2291, %v2290
      %v2334 = vpack.c.b16 %v2292, %v2292
      %v2335 = vpack.c.b16 %v2294, %v2293
      %v2336 = vpack.c.b16 %v2295, %v2295
      %v2337 = vpack.c.b16 %v2297, %v2296
      %v2338 = vpack.c.b16 %v2298, %v2298
      %v2339 = vpack.c.b16 %v2300, %v2299
      %v2340 = vpack.c.b16 %v2301, %v2301
      %v2341 = vpack.c.b16 %v2303, %v2302
      %v2342 = vpack.c.b16 %v2304, %v2304
      %v2343 = vpack.c.b16 %v2306, %v2305
      %v2344 = vpack.c.b16 %v2307, %v2307
      %v2345 = vpack.c.b16 %v2309, %v2308
      %v2346 = vpack.c.b16 %v2310, %v2310
      %v2347 = vpack.c.b16 %v2312, %v2311
      %v2348 = vpack.c.b16 %v2313, %v2313
      %v2349 = vpack.c.b16 %v2315, %v2314
      %v2350 = vpack.c.b16 %v2316, %v2316
      %v2351 = vpack.c.b16 %v2318, %v2317
      %v2352 = vpack.c.b16 %v2319, %v2319
      %v2353 = vpack.c.b16 %v2321, %v2320
      %v2354 = vpack.c.b16 %v2322, %v2322
      %v2356 = vshrl.u32 %v2323, 16
      %v2358 = vshll.u32 %v2323, 16
      %v2360 = vrot.slane %v2358, 1
      %v2361 = vor.u32 %v2356, %v2360
      %v2363 = vshll.u32 %v2324, 16
      %v2365 = vrot.slane %v2363, 1
      %v2366 = vsel %vm547, %v2361, %v2365
      %v2368 = vshrl.u32 %v2325, 16
      %v2370 = vshll.u32 %v2325, 16
      %v2372 = vrot.slane %v2370, 1
      %v2373 = vor.u32 %v2368, %v2372
      %v2375 = vshll.u32 %v2326, 16
      %v2377 = vrot.slane %v2375, 1
      %v2378 = vsel %vm547, %v2373, %v2377
      %v2380 = vshrl.u32 %v2327, 16
      %v2382 = vshll.u32 %v2327, 16
      %v2384 = vrot.slane %v2382, 1
      %v2385 = vor.u32 %v2380, %v2384
      %v2387 = vshll.u32 %v2328, 16
      %v2389 = vrot.slane %v2387, 1
      %v2390 = vsel %vm547, %v2385, %v2389
      %v2392 = vshrl.u32 %v2329, 16
      %v2394 = vshll.u32 %v2329, 16
      %v2396 = vrot.slane %v2394, 1
      %v2397 = vor.u32 %v2392, %v2396
      %v2399 = vshll.u32 %v2330, 16
      %v2401 = vrot.slane %v2399, 1
      %v2402 = vsel %vm547, %v2397, %v2401
      %v2404 = vshrl.u32 %v2331, 16
      %v2406 = vshll.u32 %v2331, 16
      %v2408 = vrot.slane %v2406, 1
      %v2409 = vor.u32 %v2404, %v2408
      %v2411 = vshll.u32 %v2332, 16
      %v2413 = vrot.slane %v2411, 1
      %v2414 = vsel %vm547, %v2409, %v2413
      %v2416 = vshrl.u32 %v2333, 16
      %v2418 = vshll.u32 %v2333, 16
      %v2420 = vrot.slane %v2418, 1
      %v2421 = vor.u32 %v2416, %v2420
      %v2423 = vshll.u32 %v2334, 16
      %v2425 = vrot.slane %v2423, 1
      %v2426 = vsel %vm547, %v2421, %v2425
      %v2428 = vshrl.u32 %v2335, 16
      %v2430 = vshll.u32 %v2335, 16
      %v2432 = vrot.slane %v2430, 1
      %v2433 = vor.u32 %v2428, %v2432
      %v2435 = vshll.u32 %v2336, 16
      %v2437 = vrot.slane %v2435, 1
      %v2438 = vsel %vm547, %v2433, %v2437
      %v2440 = vshrl.u32 %v2337, 16
      %v2442 = vshll.u32 %v2337, 16
      %v2444 = vrot.slane %v2442, 1
      %v2445 = vor.u32 %v2440, %v2444
      %v2447 = vshll.u32 %v2338, 16
      %v2449 = vrot.slane %v2447, 1
      %v2450 = vsel %vm547, %v2445, %v2449
      %v2452 = vshrl.u32 %v2339, 16
      %v2454 = vshll.u32 %v2339, 16
      %v2456 = vrot.slane %v2454, 1
      %v2457 = vor.u32 %v2452, %v2456
      %v2459 = vshll.u32 %v2340, 16
      %v2461 = vrot.slane %v2459, 1
      %v2462 = vsel %vm547, %v2457, %v2461
      %v2464 = vshrl.u32 %v2341, 16
      %v2466 = vshll.u32 %v2341, 16
      %v2468 = vrot.slane %v2466, 1
      %v2469 = vor.u32 %v2464, %v2468
      %v2471 = vshll.u32 %v2342, 16
      %v2473 = vrot.slane %v2471, 1
      %v2474 = vsel %vm547, %v2469, %v2473
      %v2476 = vshrl.u32 %v2343, 16
      %v2478 = vshll.u32 %v2343, 16
      %v2480 = vrot.slane %v2478, 1
      %v2481 = vor.u32 %v2476, %v2480
      %v2483 = vshll.u32 %v2344, 16
      %v2485 = vrot.slane %v2483, 1
      %v2486 = vsel %vm547, %v2481, %v2485
      %v2488 = vshrl.u32 %v2345, 16
      %v2490 = vshll.u32 %v2345, 16
      %v2492 = vrot.slane %v2490, 1
      %v2493 = vor.u32 %v2488, %v2492
      %v2495 = vshll.u32 %v2346, 16
      %v2497 = vrot.slane %v2495, 1
      %v2498 = vsel %vm547, %v2493, %v2497
      %v2500 = vshrl.u32 %v2347, 16
      %v2502 = vshll.u32 %v2347, 16
      %v2504 = vrot.slane %v2502, 1
      %v2505 = vor.u32 %v2500, %v2504
      %v2507 = vshll.u32 %v2348, 16
      %v2509 = vrot.slane %v2507, 1
      %v2510 = vsel %vm547, %v2505, %v2509
      %v2512 = vshrl.u32 %v2349, 16
      %v2514 = vshll.u32 %v2349, 16
      %v2516 = vrot.slane %v2514, 1
      %v2517 = vor.u32 %v2512, %v2516
      %v2519 = vshll.u32 %v2350, 16
      %v2521 = vrot.slane %v2519, 1
      %v2522 = vsel %vm547, %v2517, %v2521
      %v2524 = vshrl.u32 %v2351, 16
      %v2526 = vshll.u32 %v2351, 16
      %v2528 = vrot.slane %v2526, 1
      %v2529 = vor.u32 %v2524, %v2528
      %v2531 = vshll.u32 %v2352, 16
      %v2533 = vrot.slane %v2531, 1
      %v2534 = vsel %vm547, %v2529, %v2533
      %v2536 = vshrl.u32 %v2353, 16
      %v2538 = vshll.u32 %v2353, 16
      %v2540 = vrot.slane %v2538, 1
      %v2541 = vor.u32 %v2536, %v2540
      %v2543 = vshll.u32 %v2354, 16
      %v2545 = vrot.slane %v2543, 1
      %v2546 = vsel %vm547, %v2541, %v2545
      %2547 = vrot.lane.b32.xlu0 %v2366, 28
      %v2548 = vpop.permute.xlu0 %2547
      %2549 = vrot.lane.b32.xlu0 %v2378, 28
      %v2550 = vpop.permute.xlu0 %2549
      %2551 = vrot.lane.b32.xlu0 %v2390, 28
      %v2552 = vpop.permute.xlu0 %2551
      %2553 = vrot.lane.b32.xlu0 %v2402, 28
      %v2554 = vpop.permute.xlu0 %2553
      %2555 = vrot.lane.b32.xlu0 %v2414, 28
      %v2556 = vpop.permute.xlu0 %2555
      %2557 = vrot.lane.b32.xlu0 %v2426, 28
      %v2558 = vpop.permute.xlu0 %2557
      %2559 = vrot.lane.b32.xlu0 %v2438, 28
      %v2560 = vpop.permute.xlu0 %2559
      %2561 = vrot.lane.b32.xlu0 %v2450, 28
      %v2562 = vpop.permute.xlu0 %2561
      %2563 = vrot.lane.b32.xlu0 %v2462, 28
      %v2564 = vpop.permute.xlu0 %2563
      %2565 = vrot.lane.b32.xlu0 %v2474, 28
      %v2566 = vpop.permute.xlu0 %2565
      %2567 = vrot.lane.b32.xlu0 %v2486, 28
      %v2568 = vpop.permute.xlu0 %2567
      %2569 = vrot.lane.b32.xlu0 %v2498, 28
      %v2570 = vpop.permute.xlu0 %2569
      %2571 = vrot.lane.b32.xlu0 %v2510, 28
      %v2572 = vpop.permute.xlu0 %2571
      %2573 = vrot.lane.b32.xlu0 %v2522, 28
      %v2574 = vpop.permute.xlu0 %2573
      %2575 = vrot.lane.b32.xlu0 %v2534, 28
      %v2576 = vpop.permute.xlu0 %2575
      %2577 = vrot.lane.b32.xlu0 %v2546, 28
      %v2578 = vpop.permute.xlu0 %2577
      %vm2595 = vcmask 261344
      %2596 = vst.msk [vmem:[#allocation2] sm:$0xff] %vm2595, %v2548
      %2597 = vst.msk [vmem:[#allocation2 + $0x8] sm:$0xff] %vm2595, %v2550
      %2598 = vst.msk [vmem:[#allocation2 + $0x10] sm:$0xff] %vm2595, %v2552
      %2599 = vst.msk [vmem:[#allocation2 + $0x18] sm:$0xff] %vm2595, %v2554
      %2600 = vst.msk [vmem:[#allocation2 + $0x20] sm:$0xff] %vm2595, %v2556
      %2601 = vst.msk [vmem:[#allocation2 + $0x28] sm:$0xff] %vm2595, %v2558
      %2602 = vst.msk [vmem:[#allocation2 + $0x30] sm:$0xff] %vm2595, %v2560
      %2603 = vst.msk [vmem:[#allocation2 + $0x38] sm:$0xff] %vm2595, %v2562
      %2604 = vst.msk [vmem:[#allocation2 + $0x40] sm:$0xff] %vm2595, %v2564
      %2605 = vst.msk [vmem:[#allocation2 + $0x48] sm:$0xff] %vm2595, %v2566
      %2606 = vst.msk [vmem:[#allocation2 + $0x50] sm:$0xff] %vm2595, %v2568
      %2607 = vst.msk [vmem:[#allocation2 + $0x58] sm:$0xff] %vm2595, %v2570
      %2608 = vst.msk [vmem:[#allocation2 + $0x60] sm:$0xff] %vm2595, %v2572
      %2609 = vst.msk [vmem:[#allocation2 + $0x68] sm:$0xff] %vm2595, %v2574
      %2610 = vst.msk [vmem:[#allocation2 + $0x70] sm:$0xff] %vm2595, %v2576
      %2611 = vst.msk [vmem:[#allocation2 + $0x78] sm:$0xff] %vm2595, %v2578
      %v2612 = vld [vmem:[%s2001] sm:$0xe]
      %v2613 = vld [vmem:[%s2001 + $0x4] sm:$0xf]
      %v2614 = vld [vmem:[%s2001 + $0x8] sm:$0x1]
      %v2615 = vld [vmem:[%s2001 + $0xc] sm:$0xe]
      %v2616 = vld [vmem:[%s2001 + $0x10] sm:$0xf]
      %v2617 = vld [vmem:[%s2001 + $0x14] sm:$0x1]
      %v2618 = vld [vmem:[%s2001 + $0x18] sm:$0xe]
      %v2619 = vld [vmem:[%s2001 + $0x1c] sm:$0xf]
      %v2620 = vld [vmem:[%s2001 + $0x20] sm:$0x1]
      %v2621 = vld [vmem:[%s2001 + $0x24] sm:$0xe]
      %v2622 = vld [vmem:[%s2001 + $0x28] sm:$0xf]
      %v2623 = vld [vmem:[%s2001 + $0x2c] sm:$0x1]
      %v2624 = vld [vmem:[%s2001 + $0x30] sm:$0xe]
      %v2625 = vld [vmem:[%s2001 + $0x34] sm:$0xf]
      %v2626 = vld [vmem:[%s2001 + $0x38] sm:$0x1]
      %v2627 = vld [vmem:[%s2001 + $0x3c] sm:$0xe]
      %v2628 = vld [vmem:[%s2001 + $0x40] sm:$0xf]
      %v2629 = vld [vmem:[%s2001 + $0x44] sm:$0x1]
      %v2630 = vld [vmem:[%s2001 + $0x48] sm:$0xe]
      %v2631 = vld [vmem:[%s2001 + $0x4c] sm:$0xf]
      %v2632 = vld [vmem:[%s2001 + $0x50] sm:$0x1]
      %v2633 = vld [vmem:[%s2001 + $0x54] sm:$0xe]
      %v2634 = vld [vmem:[%s2001 + $0x58] sm:$0xf]
      %v2635 = vld [vmem:[%s2001 + $0x5c] sm:$0x1]
      %v2636 = vld [vmem:[%s2001 + $0x60] sm:$0xe]
      %v2637 = vld [vmem:[%s2001 + $0x64] sm:$0xf]
      %v2638 = vld [vmem:[%s2001 + $0x68] sm:$0x1]
      %v2639 = vld [vmem:[%s2001 + $0x6c] sm:$0xe]
      %v2640 = vld [vmem:[%s2001 + $0x70] sm:$0xf]
      %v2641 = vld [vmem:[%s2001 + $0x74] sm:$0x1]
      %v2642 = vld [vmem:[%s2001 + $0x78] sm:$0xe]
      %v2643 = vld [vmem:[%s2001 + $0x7c] sm:$0xf]
      %v2644 = vld [vmem:[%s2001 + $0x80] sm:$0x1]
      %v2645 = vld [vmem:[%s2001 + $0x84] sm:$0xe]
      %v2646 = vld [vmem:[%s2001 + $0x88] sm:$0xf]
      %v2647 = vld [vmem:[%s2001 + $0x8c] sm:$0x1]
      %v2648 = vld [vmem:[%s2001 + $0x90] sm:$0xe]
      %v2649 = vld [vmem:[%s2001 + $0x94] sm:$0xf]
      %v2650 = vld [vmem:[%s2001 + $0x98] sm:$0x1]
      %v2651 = vld [vmem:[%s2001 + $0x9c] sm:$0xe]
      %v2652 = vld [vmem:[%s2001 + $0xa0] sm:$0xf]
      %v2653 = vld [vmem:[%s2001 + $0xa4] sm:$0x1]
      %v2654 = vld [vmem:[%s2001 + $0xa8] sm:$0xe]
      %v2655 = vld [vmem:[%s2001 + $0xac] sm:$0xf]
      %v2656 = vld [vmem:[%s2001 + $0xb0] sm:$0x1]
      %v2657 = vld [vmem:[%s2001 + $0xb4] sm:$0xe]
      %v2658 = vld [vmem:[%s2001 + $0xb8] sm:$0xf]
      %v2659 = vld [vmem:[%s2001 + $0xbc] sm:$0x1]
      %v2708 = vunpack.c.l.b16 %v2612
      %v2709 = vunpack.c.l.b16 %v2613
      %v2710 = vunpack.c.l.b16 %v2614
      %v2711 = vunpack.c.l.b16 %v2615
      %v2712 = vunpack.c.l.b16 %v2616
      %v2713 = vunpack.c.l.b16 %v2617
      %v2714 = vunpack.c.l.b16 %v2618
      %v2715 = vunpack.c.l.b16 %v2619
      %v2716 = vunpack.c.l.b16 %v2620
      %v2717 = vunpack.c.l.b16 %v2621
      %v2718 = vunpack.c.l.b16 %v2622
      %v2719 = vunpack.c.l.b16 %v2623
      %v2720 = vunpack.c.l.b16 %v2624
      %v2721 = vunpack.c.l.b16 %v2625
      %v2722 = vunpack.c.l.b16 %v2626
      %v2723 = vunpack.c.l.b16 %v2627
      %v2724 = vunpack.c.l.b16 %v2628
      %v2725 = vunpack.c.l.b16 %v2629
      %v2726 = vunpack.c.l.b16 %v2630
      %v2727 = vunpack.c.l.b16 %v2631
      %v2728 = vunpack.c.l.b16 %v2632
      %v2729 = vunpack.c.l.b16 %v2633
      %v2730 = vunpack.c.l.b16 %v2634
      %v2731 = vunpack.c.l.b16 %v2635
      %v2732 = vunpack.c.l.b16 %v2636
      %v2733 = vunpack.c.l.b16 %v2637
      %v2734 = vunpack.c.l.b16 %v2638
      %v2735 = vunpack.c.l.b16 %v2639
      %v2736 = vunpack.c.l.b16 %v2640
      %v2737 = vunpack.c.l.b16 %v2641
      %v2738 = vunpack.c.l.b16 %v2642
      %v2739 = vunpack.c.l.b16 %v2643
      %v2740 = vunpack.c.l.b16 %v2644
      %v2741 = vunpack.c.l.b16 %v2645
      %v2742 = vunpack.c.l.b16 %v2646
      %v2743 = vunpack.c.l.b16 %v2647
      %v2744 = vunpack.c.l.b16 %v2648
      %v2745 = vunpack.c.l.b16 %v2649
      %v2746 = vunpack.c.l.b16 %v2650
      %v2747 = vunpack.c.l.b16 %v2651
      %v2748 = vunpack.c.l.b16 %v2652
      %v2749 = vunpack.c.l.b16 %v2653
      %v2750 = vunpack.c.l.b16 %v2654
      %v2751 = vunpack.c.l.b16 %v2655
      %v2752 = vunpack.c.l.b16 %v2656
      %v2753 = vunpack.c.l.b16 %v2657
      %v2754 = vunpack.c.l.b16 %v2658
      %v2755 = vunpack.c.l.b16 %v2659
      %v2756 = vpack.c.b16 %v2709, %v2708
      %v2757 = vpack.c.b16 %v2710, %v2710
      %v2758 = vpack.c.b16 %v2712, %v2711
      %v2759 = vpack.c.b16 %v2713, %v2713
      %v2760 = vpack.c.b16 %v2715, %v2714
      %v2761 = vpack.c.b16 %v2716, %v2716
      %v2762 = vpack.c.b16 %v2718, %v2717
      %v2763 = vpack.c.b16 %v2719, %v2719
      %v2764 = vpack.c.b16 %v2721, %v2720
      %v2765 = vpack.c.b16 %v2722, %v2722
      %v2766 = vpack.c.b16 %v2724, %v2723
      %v2767 = vpack.c.b16 %v2725, %v2725
      %v2768 = vpack.c.b16 %v2727, %v2726
      %v2769 = vpack.c.b16 %v2728, %v2728
      %v2770 = vpack.c.b16 %v2730, %v2729
      %v2771 = vpack.c.b16 %v2731, %v2731
      %v2772 = vpack.c.b16 %v2733, %v2732
      %v2773 = vpack.c.b16 %v2734, %v2734
      %v2774 = vpack.c.b16 %v2736, %v2735
      %v2775 = vpack.c.b16 %v2737, %v2737
      %v2776 = vpack.c.b16 %v2739, %v2738
      %v2777 = vpack.c.b16 %v2740, %v2740
      %v2778 = vpack.c.b16 %v2742, %v2741
      %v2779 = vpack.c.b16 %v2743, %v2743
      %v2780 = vpack.c.b16 %v2745, %v2744
      %v2781 = vpack.c.b16 %v2746, %v2746
      %v2782 = vpack.c.b16 %v2748, %v2747
      %v2783 = vpack.c.b16 %v2749, %v2749
      %v2784 = vpack.c.b16 %v2751, %v2750
      %v2785 = vpack.c.b16 %v2752, %v2752
      %v2786 = vpack.c.b16 %v2754, %v2753
      %v2787 = vpack.c.b16 %v2755, %v2755
      %v2788 = vrot.slane %v2756, 1
      %v2789 = vrot.slane %v2757, 1
      %v2790 = vsel %vm981, %v2788, %v2789
      %v2791 = vrot.slane %v2758, 1
      %v2792 = vrot.slane %v2759, 1
      %v2793 = vsel %vm981, %v2791, %v2792
      %v2794 = vrot.slane %v2760, 1
      %v2795 = vrot.slane %v2761, 1
      %v2796 = vsel %vm981, %v2794, %v2795
      %v2797 = vrot.slane %v2762, 1
      %v2798 = vrot.slane %v2763, 1
      %v2799 = vsel %vm981, %v2797, %v2798
      %v2800 = vrot.slane %v2764, 1
      %v2801 = vrot.slane %v2765, 1
      %v2802 = vsel %vm981, %v2800, %v2801
      %v2803 = vrot.slane %v2766, 1
      %v2804 = vrot.slane %v2767, 1
      %v2805 = vsel %vm981, %v2803, %v2804
      %v2806 = vrot.slane %v2768, 1
      %v2807 = vrot.slane %v2769, 1
      %v2808 = vsel %vm981, %v2806, %v2807
      %v2809 = vrot.slane %v2770, 1
      %v2810 = vrot.slane %v2771, 1
      %v2811 = vsel %vm981, %v2809, %v2810
      %v2812 = vrot.slane %v2772, 1
      %v2813 = vrot.slane %v2773, 1
      %v2814 = vsel %vm981, %v2812, %v2813
      %v2815 = vrot.slane %v2774, 1
      %v2816 = vrot.slane %v2775, 1
      %v2817 = vsel %vm981, %v2815, %v2816
      %v2818 = vrot.slane %v2776, 1
      %v2819 = vrot.slane %v2777, 1
      %v2820 = vsel %vm981, %v2818, %v2819
      %v2821 = vrot.slane %v2778, 1
      %v2822 = vrot.slane %v2779, 1
      %v2823 = vsel %vm981, %v2821, %v2822
      %v2824 = vrot.slane %v2780, 1
      %v2825 = vrot.slane %v2781, 1
      %v2826 = vsel %vm981, %v2824, %v2825
      %v2827 = vrot.slane %v2782, 1
      %v2828 = vrot.slane %v2783, 1
      %v2829 = vsel %vm981, %v2827, %v2828
      %v2830 = vrot.slane %v2784, 1
      %v2831 = vrot.slane %v2785, 1
      %v2832 = vsel %vm981, %v2830, %v2831
      %v2833 = vrot.slane %v2786, 1
      %v2834 = vrot.slane %v2787, 1
      %v2835 = vsel %vm981, %v2833, %v2834
      %2836 = vrot.lane.b32.xlu0 %v2790, 32
      %v2837 = vpop.permute.xlu0 %2836
      %2838 = vrot.lane.b32.xlu0 %v2793, 32
      %v2839 = vpop.permute.xlu0 %2838
      %2840 = vrot.lane.b32.xlu0 %v2796, 32
      %v2841 = vpop.permute.xlu0 %2840
      %2842 = vrot.lane.b32.xlu0 %v2799, 32
      %v2843 = vpop.permute.xlu0 %2842
      %2844 = vrot.lane.b32.xlu0 %v2802, 32
      %v2845 = vpop.permute.xlu0 %2844
      %2846 = vrot.lane.b32.xlu0 %v2805, 32
      %v2847 = vpop.permute.xlu0 %2846
      %2848 = vrot.lane.b32.xlu0 %v2808, 32
      %v2849 = vpop.permute.xlu0 %2848
      %2850 = vrot.lane.b32.xlu0 %v2811, 32
      %v2851 = vpop.permute.xlu0 %2850
      %2852 = vrot.lane.b32.xlu0 %v2814, 32
      %v2853 = vpop.permute.xlu0 %2852
      %2854 = vrot.lane.b32.xlu0 %v2817, 32
      %v2855 = vpop.permute.xlu0 %2854
      %2856 = vrot.lane.b32.xlu0 %v2820, 32
      %v2857 = vpop.permute.xlu0 %2856
      %2858 = vrot.lane.b32.xlu0 %v2823, 32
      %v2859 = vpop.permute.xlu0 %2858
      %2860 = vrot.lane.b32.xlu0 %v2826, 32
      %v2861 = vpop.permute.xlu0 %2860
      %2862 = vrot.lane.b32.xlu0 %v2829, 32
      %v2863 = vpop.permute.xlu0 %2862
      %2864 = vrot.lane.b32.xlu0 %v2832, 32
      %v2865 = vpop.permute.xlu0 %2864
      %2866 = vrot.lane.b32.xlu0 %v2835, 32
      %v2867 = vpop.permute.xlu0 %2866
      %vm2884 = vcmask 294144
      %2885 = vst.msk [vmem:[#allocation2] sm:$0xff] %vm2884, %v2837
      %2886 = vst.msk [vmem:[#allocation2 + $0x8] sm:$0xff] %vm2884, %v2839
      %2887 = vst.msk [vmem:[#allocation2 + $0x10] sm:$0xff] %vm2884, %v2841
      %2888 = vst.msk [vmem:[#allocation2 + $0x18] sm:$0xff] %vm2884, %v2843
      %2889 = vst.msk [vmem:[#allocation2 + $0x20] sm:$0xff] %vm2884, %v2845
      %2890 = vst.msk [vmem:[#allocation2 + $0x28] sm:$0xff] %vm2884, %v2847
      %2891 = vst.msk [vmem:[#allocation2 + $0x30] sm:$0xff] %vm2884, %v2849
      %2892 = vst.msk [vmem:[#allocation2 + $0x38] sm:$0xff] %vm2884, %v2851
      %2893 = vst.msk [vmem:[#allocation2 + $0x40] sm:$0xff] %vm2884, %v2853
      %2894 = vst.msk [vmem:[#allocation2 + $0x48] sm:$0xff] %vm2884, %v2855
      %2895 = vst.msk [vmem:[#allocation2 + $0x50] sm:$0xff] %vm2884, %v2857
      %2896 = vst.msk [vmem:[#allocation2 + $0x58] sm:$0xff] %vm2884, %v2859
      %2897 = vst.msk [vmem:[#allocation2 + $0x60] sm:$0xff] %vm2884, %v2861
      %2898 = vst.msk [vmem:[#allocation2 + $0x68] sm:$0xff] %vm2884, %v2863
      %2899 = vst.msk [vmem:[#allocation2 + $0x70] sm:$0xff] %vm2884, %v2865
      %2900 = vst.msk [vmem:[#allocation2 + $0x78] sm:$0xff] %vm2884, %v2867
      %v2901 = vld [vmem:[#allocation2] sm:$0xff]
      %v2902 = vld [vmem:[#allocation2 + $0x8] sm:$0xff]
      %v2903 = vld [vmem:[#allocation2 + $0x10] sm:$0xff]
      %v2904 = vld [vmem:[#allocation2 + $0x18] sm:$0xff]
      %v2905 = vld [vmem:[#allocation2 + $0x20] sm:$0xff]
      %v2906 = vld [vmem:[#allocation2 + $0x28] sm:$0xff]
      %v2907 = vld [vmem:[#allocation2 + $0x30] sm:$0xff]
      %v2908 = vld [vmem:[#allocation2 + $0x38] sm:$0xff]
      %v2909 = vld [vmem:[#allocation2 + $0x40] sm:$0xff]
      %v2910 = vld [vmem:[#allocation2 + $0x48] sm:$0xff]
      %v2911 = vld [vmem:[#allocation2 + $0x50] sm:$0xff]
      %v2912 = vld [vmem:[#allocation2 + $0x58] sm:$0xff]
      %v2913 = vld [vmem:[#allocation2 + $0x60] sm:$0xff]
      %v2914 = vld [vmem:[#allocation2 + $0x68] sm:$0xff]
      %v2915 = vld [vmem:[#allocation2 + $0x70] sm:$0xff]
      %v2916 = vld [vmem:[#allocation2 + $0x78] sm:$0xff]
      %v2917 = vld [vmem:[%s1] sm:$0xf]
      %v2918 = vld [vmem:[%s1 + $0x4] sm:$0xf]
      %v2919 = vld [vmem:[%s1 + $0x8] sm:$0xf]
      %v2920 = vld [vmem:[%s1 + $0xc] sm:$0xf]
      %v2921 = vld [vmem:[%s1 + $0x10] sm:$0x3]
      %v2927 = vunpack.c.l.b16 %v2917
      %v2928 = vunpack.c.l.b16 %v2918
      %v2929 = vunpack.c.l.b16 %v2919
      %v2930 = vunpack.c.l.b16 %v2920
      %v2931 = vunpack.c.l.b16 %v2921
      %v2932 = vpack.c.b16 %v2928, %v2927
      %v2933 = vpack.c.b16 %v2930, %v2929
      %v2934 = vpack.c.b16 %v2931, %v2931
      %vm2937 = vcmask 293888
      %v2939 = vsel %vm2937, %v2901, 0
      %v2942 = vsel %vm2937, %v2902, 0
      %v2945 = vsel %vm2937, %v2903, 0
      %v2948 = vsel %vm2937, %v2904, 0
      %v2951 = vsel %vm2937, %v2905, 0
      %v2954 = vsel %vm2937, %v2906, 0
      %v2957 = vsel %vm2937, %v2907, 0
      %v2960 = vsel %vm2937, %v2908, 0
      %v2963 = vsel %vm2937, %v2909, 0
      %v2966 = vsel %vm2937, %v2910, 0
      %v2969 = vsel %vm2937, %v2911, 0
      %v2972 = vsel %vm2937, %v2912, 0
      %v2975 = vsel %vm2937, %v2913, 0
      %v2978 = vsel %vm2937, %v2914, 0
      %v2981 = vsel %vm2937, %v2915, 0
      %v2984 = vsel %vm2937, %v2916, 0
      %vm2986 = vcmask 1041408
      %v2988 = vsel %vm2986, %v2934, 0
      %2990 = vmatprep.subr.bf16.mxu0 0
      %2991 = vmatpush1.bf16.msra.mxu0 %v2932
      %2992 = vmatprep.subr.bf16.mxu0 0
      %2993 = vmatpush1.bf16.msra.mxu0 %v2933
      %2994 = vmatprep.subr.bf16.mxu0 0
      %2995 = vmatpush1.bf16.msra.mxu0 %v2988
      %2996 = vmatprep.subr.bf16.mxu0 0
      %2997 = vmatpush1.bf16.msra.mxu0 0
      %2998 = vmatprep.subr.bf16.mxu0 0
      %2999 = vmatpush1.bf16.msra.mxu0 0
      %3000 = vmatprep.subr.bf16.mxu0 0
      %3001 = vmatpush1.bf16.msra.mxu0 0
      %3002 = vmatprep.subr.bf16.mxu0 0
      %3003 = vmatpush1.bf16.msra.mxu0 0
      %3004 = vmatprep.subr.bf16.mxu0 0
      %3005 = vmatpush1.bf16.msra.mxu0 0
      %3006 = vmatprep.subr.bf16.mxu0 0
      %3007 = vmatpush1.bf16.msra.mxu0 0
      %3008 = vmatprep.subr.bf16.mxu0 0
      %3009 = vmatpush1.bf16.msra.mxu0 0
      %3010 = vmatprep.subr.bf16.mxu0 0
      %3011 = vmatpush1.bf16.msra.mxu0 0
      %3012 = vmatprep.subr.bf16.mxu0 0
      %3013 = vmatpush1.bf16.msra.mxu0 0
      %3014 = vmatprep.subr.bf16.mxu0 0
      %3015 = vmatpush1.bf16.msra.mxu0 0
      %3016 = vmatprep.subr.bf16.mxu0 0
      %3017 = vmatpush1.bf16.msra.mxu0 0
      %3018 = vmatprep.subr.bf16.mxu0 0
      %3019 = vmatpush1.bf16.msra.mxu0 0
      %3020 = vmatprep.subr.bf16.mxu0 0
      %3021 = vmatpush1.bf16.msra.mxu0 0
      %3022 = vmatprep.mubr.bf16.mxu0 0
      %3023 = vmatmul.mubr.bf16.gmra.mrb[0].mxu0 %v2939
      %v3024 = vpop.f32.mrb[0].mxu0
      %v3025 = vadd.f32 0.0, %v3024
      %v3026 = vpop.f32.mrb[0].mxu0
      %v3027 = vpop.f32.mrb[0].mxu0
      %v3028 = vadd.f32 0.0, %v3027
      %v3029 = vpop.f32.mrb[0].mxu0
      %3030 = vmatprep.mubr.bf16.mxu0 0
      %3031 = vmatmul.mubr.bf16.gmra.mrb[0].mxu0 %v2942
      %v3032 = vpop.f32.mrb[0].mxu0
      %v3033 = vadd.f32 0.0, %v3032
      %v3034 = vpop.f32.mrb[0].mxu0
      %v3035 = vpop.f32.mrb[0].mxu0
      %v3036 = vadd.f32 0.0, %v3035
      %v3037 = vpop.f32.mrb[0].mxu0
      %3038 = vmatprep.mubr.bf16.mxu0 0
      %3039 = vmatmul.mubr.bf16.gmra.mrb[0].mxu0 %v2945
      %v3040 = vpop.f32.mrb[0].mxu0
      %v3041 = vadd.f32 0.0, %v3040
      %v3042 = vpop.f32.mrb[0].mxu0
      %v3043 = vpop.f32.mrb[0].mxu0
      %v3044 = vadd.f32 0.0, %v3043
      %v3045 = vpop.f32.mrb[0].mxu0
      %3046 = vmatprep.mubr.bf16.mxu0 0
      %3047 = vmatmul.mubr.bf16.gmra.mrb[0].mxu0 %v2948
      %v3048 = vpop.f32.mrb[0].mxu0
      %v3049 = vadd.f32 0.0, %v3048
      %v3050 = vpop.f32.mrb[0].mxu0
      %v3051 = vpop.f32.mrb[0].mxu0
      %v3052 = vadd.f32 0.0, %v3051
      %v3053 = vpop.f32.mrb[0].mxu0
      %3054 = vmatprep.mubr.bf16.mxu0 0
      %3055 = vmatmul.mubr.bf16.gmra.mrb[0].mxu0 %v2951
      %v3056 = vpop.f32.mrb[0].mxu0
      %v3057 = vadd.f32 0.0, %v3056
      %v3058 = vpop.f32.mrb[0].mxu0
      %v3059 = vpop.f32.mrb[0].mxu0
      %v3060 = vadd.f32 0.0, %v3059
      %v3061 = vpop.f32.mrb[0].mxu0
      %3062 = vmatprep.mubr.bf16.mxu0 0
      %3063 = vmatmul.mubr.bf16.gmra.mrb[0].mxu0 %v2954
      %v3064 = vpop.f32.mrb[0].mxu0
      %v3065 = vadd.f32 0.0, %v3064
      %v3066 = vpop.f32.mrb[0].mxu0
      %v3067 = vpop.f32.mrb[0].mxu0
      %v3068 = vadd.f32 0.0, %v3067
      %v3069 = vpop.f32.mrb[0].mxu0
      %3070 = vmatprep.mubr.bf16.mxu0 0
      %3071 = vmatmul.mubr.bf16.gmra.mrb[0].mxu0 %v2957
      %v3072 = vpop.f32.mrb[0].mxu0
      %v3073 = vadd.f32 0.0, %v3072
      %v3074 = vpop.f32.mrb[0].mxu0
      %v3075 = vpop.f32.mrb[0].mxu0
      %v3076 = vadd.f32 0.0, %v3075
      %v3077 = vpop.f32.mrb[0].mxu0
      %3078 = vmatprep.mubr.bf16.mxu0 0
      %3079 = vmatmul.mubr.bf16.gmra.mrb[0].mxu0 %v2960
      %v3080 = vpop.f32.mrb[0].mxu0
      %v3081 = vadd.f32 0.0, %v3080
      %v3082 = vpop.f32.mrb[0].mxu0
      %v3083 = vpop.f32.mrb[0].mxu0
      %v3084 = vadd.f32 0.0, %v3083
      %v3085 = vpop.f32.mrb[0].mxu0
      %3086 = vmatprep.mubr.bf16.mxu0 0
      %3087 = vmatmul.mubr.bf16.gmra.mrb[0].mxu0 %v2963
      %v3088 = vpop.f32.mrb[0].mxu0
      %v3089 = vadd.f32 0.0, %v3088
      %v3090 = vpop.f32.mrb[0].mxu0
      %v3091 = vpop.f32.mrb[0].mxu0
      %v3092 = vadd.f32 0.0, %v3091
      %v3093 = vpop.f32.mrb[0].mxu0
      %3094 = vmatprep.mubr.bf16.mxu0 0
      %3095 = vmatmul.mubr.bf16.gmra.mrb[0].mxu0 %v2966
      %v3096 = vpop.f32.mrb[0].mxu0
      %v3097 = vadd.f32 0.0, %v3096
      %v3098 = vpop.f32.mrb[0].mxu0
      %v3099 = vpop.f32.mrb[0].mxu0
      %v3100 = vadd.f32 0.0, %v3099
      %v3101 = vpop.f32.mrb[0].mxu0
      %3102 = vmatprep.mubr.bf16.mxu0 0
      %3103 = vmatmul.mubr.bf16.gmra.mrb[0].mxu0 %v2969
      %v3104 = vpop.f32.mrb[0].mxu0
      %v3105 = vadd.f32 0.0, %v3104
      %v3106 = vpop.f32.mrb[0].mxu0
      %v3107 = vpop.f32.mrb[0].mxu0
      %v3108 = vadd.f32 0.0, %v3107
      %v3109 = vpop.f32.mrb[0].mxu0
      %3110 = vmatprep.mubr.bf16.mxu0 0
      %3111 = vmatmul.mubr.bf16.gmra.mrb[0].mxu0 %v2972
      %v3112 = vpop.f32.mrb[0].mxu0
      %v3113 = vadd.f32 0.0, %v3112
      %v3114 = vpop.f32.mrb[0].mxu0
      %v3115 = vpop.f32.mrb[0].mxu0
      %v3116 = vadd.f32 0.0, %v3115
      %v3117 = vpop.f32.mrb[0].mxu0
      %3118 = vmatprep.mubr.bf16.mxu0 0
      %3119 = vmatmul.mubr.bf16.gmra.mrb[0].mxu0 %v2975
      %v3120 = vpop.f32.mrb[0].mxu0
      %v3121 = vadd.f32 0.0, %v3120
      %v3122 = vpop.f32.mrb[0].mxu0
      %v3123 = vpop.f32.mrb[0].mxu0
      %v3124 = vadd.f32 0.0, %v3123
      %v3125 = vpop.f32.mrb[0].mxu0
      %3126 = vmatprep.mubr.bf16.mxu0 0
      %3127 = vmatmul.mubr.bf16.gmra.mrb[0].mxu0 %v2978
      %v3128 = vpop.f32.mrb[0].mxu0
      %v3129 = vadd.f32 0.0, %v3128
      %v3130 = vpop.f32.mrb[0].mxu0
      %v3131 = vpop.f32.mrb[0].mxu0
      %v3132 = vadd.f32 0.0, %v3131
      %v3133 = vpop.f32.mrb[0].mxu0
      %3134 = vmatprep.mubr.bf16.mxu0 0
      %3135 = vmatmul.mubr.bf16.gmra.mrb[0].mxu0 %v2981
      %v3136 = vpop.f32.mrb[0].mxu0
      %v3137 = vadd.f32 0.0, %v3136
      %v3138 = vpop.f32.mrb[0].mxu0
      %v3139 = vpop.f32.mrb[0].mxu0
      %v3140 = vadd.f32 0.0, %v3139
      %v3141 = vpop.f32.mrb[0].mxu0
      %3142 = vmatprep.mubr.bf16.mxu0 0
      %3143 = vmatmul.mubr.bf16.gmra.mrb[0].mxu0 %v2984
      %v3144 = vpop.f32.mrb[0].mxu0
      %v3145 = vadd.f32 0.0, %v3144
      %v3146 = vpop.f32.mrb[0].mxu0
      %v3147 = vpop.f32.mrb[0].mxu0
      %v3148 = vadd.f32 0.0, %v3147
      %v3149 = vpop.f32.mrb[0].mxu0
      %3150 = vdwg.mxu0
      %v3151 = vld [vmem:[%s2] sm:$0x1]
      %v3153 = vlaneseq
      %v3154 = vshrl.u32 %v3153, 7
      %v3155 = vsub.s32 0, %v3154
      %v3156 = vrot.slane %v3151, %v3155
      %v3158 = vmul.f32 %v3025, %v3156
      %v3159 = vmul.f32 %v3028, %v3156
      %v3160 = vmul.f32 %v3033, %v3156
      %v3161 = vmul.f32 %v3036, %v3156
      %v3162 = vmul.f32 %v3041, %v3156
      %v3163 = vmul.f32 %v3044, %v3156
      %v3164 = vmul.f32 %v3049, %v3156
      %v3165 = vmul.f32 %v3052, %v3156
      %v3166 = vmul.f32 %v3057, %v3156
      %v3167 = vmul.f32 %v3060, %v3156
      %v3168 = vmul.f32 %v3065, %v3156
      %v3169 = vmul.f32 %v3068, %v3156
      %v3170 = vmul.f32 %v3073, %v3156
      %v3171 = vmul.f32 %v3076, %v3156
      %v3172 = vmul.f32 %v3081, %v3156
      %v3173 = vmul.f32 %v3084, %v3156
      %v3174 = vmul.f32 %v3089, %v3156
      %v3175 = vmul.f32 %v3092, %v3156
      %v3176 = vmul.f32 %v3097, %v3156
      %v3177 = vmul.f32 %v3100, %v3156
      %v3178 = vmul.f32 %v3105, %v3156
      %v3179 = vmul.f32 %v3108, %v3156
      %v3180 = vmul.f32 %v3113, %v3156
      %v3181 = vmul.f32 %v3116, %v3156
      %v3182 = vmul.f32 %v3121, %v3156
      %v3183 = vmul.f32 %v3124, %v3156
      %v3184 = vmul.f32 %v3129, %v3156
      %v3185 = vmul.f32 %v3132, %v3156
      %v3186 = vmul.f32 %v3137, %v3156
      %v3187 = vmul.f32 %v3140, %v3156
      %v3188 = vmul.f32 %v3145, %v3156
      %v3189 = vmul.f32 %v3148, %v3156
      %v3190 = vld [vmem:[%s3] sm:$0x1]
      %v3192 = vlaneseq
      %v3193 = vshrl.u32 %v3192, 7
      %v3194 = vsub.s32 0, %v3193
      %v3195 = vrot.slane %v3190, %v3194
      %v3197 = vadd.f32 %v3158, %v3195
      %v3198 = vadd.f32 %v3159, %v3195
      %v3199 = vadd.f32 %v3160, %v3195
      %v3200 = vadd.f32 %v3161, %v3195
      %v3201 = vadd.f32 %v3162, %v3195
      %v3202 = vadd.f32 %v3163, %v3195
      %v3203 = vadd.f32 %v3164, %v3195
      %v3204 = vadd.f32 %v3165, %v3195
      %v3205 = vadd.f32 %v3166, %v3195
      %v3206 = vadd.f32 %v3167, %v3195
      %v3207 = vadd.f32 %v3168, %v3195
      %v3208 = vadd.f32 %v3169, %v3195
      %v3209 = vadd.f32 %v3170, %v3195
      %v3210 = vadd.f32 %v3171, %v3195
      %v3211 = vadd.f32 %v3172, %v3195
      %v3212 = vadd.f32 %v3173, %v3195
      %v3213 = vadd.f32 %v3174, %v3195
      %v3214 = vadd.f32 %v3175, %v3195
      %v3215 = vadd.f32 %v3176, %v3195
      %v3216 = vadd.f32 %v3177, %v3195
      %v3217 = vadd.f32 %v3178, %v3195
      %v3218 = vadd.f32 %v3179, %v3195
      %v3219 = vadd.f32 %v3180, %v3195
      %v3220 = vadd.f32 %v3181, %v3195
      %v3221 = vadd.f32 %v3182, %v3195
      %v3222 = vadd.f32 %v3183, %v3195
      %v3223 = vadd.f32 %v3184, %v3195
      %v3224 = vadd.f32 %v3185, %v3195
      %v3225 = vadd.f32 %v3186, %v3195
      %v3226 = vadd.f32 %v3187, %v3195
      %v3227 = vadd.f32 %v3188, %v3195
      %v3228 = vadd.f32 %v3189, %v3195
      %v3229 = vmax.f32 %v3197, 0.0
      %v3230 = vmax.f32 %v3198, 0.0
      %v3231 = vmax.f32 %v3199, 0.0
      %v3232 = vmax.f32 %v3200, 0.0
      %v3233 = vmax.f32 %v3201, 0.0
      %v3234 = vmax.f32 %v3202, 0.0
      %v3235 = vmax.f32 %v3203, 0.0
      %v3236 = vmax.f32 %v3204, 0.0
      %v3237 = vmax.f32 %v3205, 0.0
      %v3238 = vmax.f32 %v3206, 0.0
      %v3239 = vmax.f32 %v3207, 0.0
      %v3240 = vmax.f32 %v3208, 0.0
      %v3241 = vmax.f32 %v3209, 0.0
      %v3242 = vmax.f32 %v3210, 0.0
      %v3243 = vmax.f32 %v3211, 0.0
      %v3244 = vmax.f32 %v3212, 0.0
      %v3245 = vmax.f32 %v3213, 0.0
      %v3246 = vmax.f32 %v3214, 0.0
      %v3247 = vmax.f32 %v3215, 0.0
      %v3248 = vmax.f32 %v3216, 0.0
      %v3249 = vmax.f32 %v3217, 0.0
      %v3250 = vmax.f32 %v3218, 0.0
      %v3251 = vmax.f32 %v3219, 0.0
      %v3252 = vmax.f32 %v3220, 0.0
      %v3253 = vmax.f32 %v3221, 0.0
      %v3254 = vmax.f32 %v3222, 0.0
      %v3255 = vmax.f32 %v3223, 0.0
      %v3256 = vmax.f32 %v3224, 0.0
      %v3257 = vmax.f32 %v3225, 0.0
      %v3258 = vmax.f32 %v3226, 0.0
      %v3259 = vmax.f32 %v3227, 0.0
      %v3260 = vmax.f32 %v3228, 0.0
      %v3261 = vmax.f32 %v3229, %v3231
      %v3262 = vmax.f32 %v3230, %v3232
      %v3263 = vmax.f32 %v3233, %v3235
      %v3264 = vmax.f32 %v3234, %v3236
      %v3265 = vmax.f32 %v3237, %v3239
      %v3266 = vmax.f32 %v3238, %v3240
      %v3267 = vmax.f32 %v3241, %v3243
      %v3268 = vmax.f32 %v3242, %v3244
      %v3269 = vmax.f32 %v3245, %v3247
      %v3270 = vmax.f32 %v3246, %v3248
      %v3271 = vmax.f32 %v3249, %v3251
      %v3272 = vmax.f32 %v3250, %v3252
      %v3273 = vmax.f32 %v3253, %v3255
      %v3274 = vmax.f32 %v3254, %v3256
      %v3275 = vmax.f32 %v3257, %v3259
      %v3276 = vmax.f32 %v3258, %v3260
      %3277 = vst [vmem:[#allocation3] sm:$0xff] %v3261
      %3278 = vst [vmem:[#allocation3 + $0x8] sm:$0xff] %v3262
      %3279 = vst [vmem:[#allocation3 + $0x10] sm:$0xff] %v3263
      %3280 = vst [vmem:[#allocation3 + $0x18] sm:$0xff] %v3264
      %3281 = vst [vmem:[#allocation3 + $0x20] sm:$0xff] %v3265
      %3282 = vst [vmem:[#allocation3 + $0x28] sm:$0xff] %v3266
      %3283 = vst [vmem:[#allocation3 + $0x30] sm:$0xff] %v3267
      %3284 = vst [vmem:[#allocation3 + $0x38] sm:$0xff] %v3268
      %3285 = vst [vmem:[#allocation3 + $0x40] sm:$0xff] %v3269
      %3286 = vst [vmem:[#allocation3 + $0x48] sm:$0xff] %v3270
      %3287 = vst [vmem:[#allocation3 + $0x50] sm:$0xff] %v3271
      %3288 = vst [vmem:[#allocation3 + $0x58] sm:$0xff] %v3272
      %3289 = vst [vmem:[#allocation3 + $0x60] sm:$0xff] %v3273
      %3290 = vst [vmem:[#allocation3 + $0x68] sm:$0xff] %v3274
      %3291 = vst [vmem:[#allocation3 + $0x70] sm:$0xff] %v3275
      %3292 = vst [vmem:[#allocation3 + $0x78] sm:$0xff] %v3276
      %v3293 = vld [vmem:[#allocation3] ss:$2 sm:$0xff]
      %s3294 = scalar_lea.vmem [#allocation3], 16
      %v3295 = vld [vmem:[%s3294] ss:$2 sm:$0xff]
      %s3296 = scalar_lea.vmem [#allocation3], 32
      %v3297 = vld [vmem:[%s3296] ss:$2 sm:$0xff]
      %s3298 = scalar_lea.vmem [#allocation3], 48
      %v3299 = vld [vmem:[%s3298] ss:$2 sm:$0xff]
      %s3300 = scalar_lea.vmem [#allocation3], 64
      %v3301 = vld [vmem:[%s3300] ss:$2 sm:$0xff]
      %s3302 = scalar_lea.vmem [#allocation3], 80
      %v3303 = vld [vmem:[%s3302] ss:$2 sm:$0xff]
      %s3304 = scalar_lea.vmem [#allocation3], 96
      %v3305 = vld [vmem:[%s3304] ss:$2 sm:$0xff]
      %s3306 = scalar_lea.vmem [#allocation3], 112
      %v3307 = vld [vmem:[%s3306] ss:$2 sm:$0xff]
      %s3308 = scalar_lea.vmem [#allocation3], 1
      %v3309 = vld [vmem:[%s3308] ss:$2 sm:$0xff]
      %s3310 = scalar_lea.vmem [#allocation3], 17
      %v3311 = vld [vmem:[%s3310] ss:$2 sm:$0xff]
      %s3312 = scalar_lea.vmem [#allocation3], 33
      %v3313 = vld [vmem:[%s3312] ss:$2 sm:$0xff]
      %s3314 = scalar_lea.vmem [#allocation3], 49
      %v3315 = vld [vmem:[%s3314] ss:$2 sm:$0xff]
      %s3316 = scalar_lea.vmem [#allocation3], 65
      %v3317 = vld [vmem:[%s3316] ss:$2 sm:$0xff]
      %s3318 = scalar_lea.vmem [#allocation3], 81
      %v3319 = vld [vmem:[%s3318] ss:$2 sm:$0xff]
      %s3320 = scalar_lea.vmem [#allocation3], 97
      %v3321 = vld [vmem:[%s3320] ss:$2 sm:$0xff]
      %s3322 = scalar_lea.vmem [#allocation3], 113
      %v3323 = vld [vmem:[%s3322] ss:$2 sm:$0xff]
      %v3324 = vmax.f32 %v3293, %v3309
      %v3325 = vmax.f32 %v3295, %v3311
      %v3326 = vmax.f32 %v3297, %v3313
      %v3327 = vmax.f32 %v3299, %v3315
      %v3328 = vmax.f32 %v3301, %v3317
      %v3329 = vmax.f32 %v3303, %v3319
      %v3330 = vmax.f32 %v3305, %v3321
      %v3331 = vmax.f32 %v3307, %v3323
      %3332 = vst [vmem:[%s219] sm:$0xff] %v3324
      %3333 = vst [vmem:[%s219 + $0x8] sm:$0xff] %v3325
      %3334 = vst [vmem:[%s219 + $0x10] sm:$0xff] %v3326
      %3335 = vst [vmem:[%s219 + $0x18] sm:$0xff] %v3327
      %3336 = vst [vmem:[%s219 + $0x20] sm:$0xff] %v3328
      %3337 = vst [vmem:[%s219 + $0x28] sm:$0xff] %v3329
      %3338 = vst [vmem:[%s219 + $0x30] sm:$0xff] %v3330
      %3339 = vst [vmem:[%s219 + $0x38] sm:$0xff] %v3331
      %s3340 = smul.u32 8, %s20
      %p3341 = scmp.lt.s32.totalorder %s19, 1
      %s3342 = scalar_select %p3341, %s19, 1
      %p3343 = scmp.lt.s32.totalorder %s3340, 7
      %s3344 = scalar_select %p3343, %s3340, 7
      %s3345 = smul.addr %s3342, 8
      %s3346 = sadd.s32 %s3344, %s3345
      %s3347 = smul.addr %s3346, 8
      %s3348 = scalar_lea.vmem %s4, %s3347
      // Predicated region
      $region37: #{conv_block_forward.3} parent=35 // pred_check
        %p3349 = pneg %p136
      $region38: #{conv_block_forward.3} parent=35 // pred_check_branch
        %3351 = sbr.rel (%p3349) target = $region40
      $region39: #{conv_block_forward.3} parent=35 // pred_region
        %s3352 = smul.u32 8, %s20
      $region40: #{conv_block_forward.3} parent=35 // pred_fallthru
        _
    $region36: #{conv_block_forward.3} parent=5 // pred_fallthru
      _
    %p3353 = scmp.le.s32.totalorder 2, %s10
    // Predicated region
    $region41: #{conv_block_forward.3} parent=5 // pred_check
      %p3354 = pneg %p3353
    $region42: #{conv_block_forward.3} parent=5 // pred_check_branch
      %3356 = sbr.rel (%p3354) target = $region44
    $region43: #{conv_block_forward.3} parent=5 // pred_region
      %s3357 = ssub.s32 %s10, 2
      // Predicated region
      $region45: #{conv_block_forward.3} parent=43 // pred_check
        %p3358 = pneg %p142
      $region46: #{conv_block_forward.3} parent=43 // pred_check_branch
        %3360 = sbr.rel (%p3358) target = $region48
      $region47: #{conv_block_forward.3} parent=43 // pred_region
        %s3361 = smul.u32 8, %s22
        %p3362 = scmp.lt.s32.totalorder %s21, 1
        %s3363 = scalar_select %p3362, %s21, 1
        %p3364 = scmp.lt.s32.totalorder %s3361, 7
        %s3365 = scalar_select %p3364, %s3361, 7
        %s3366 = smul.addr %s3363, 8
        %s3367 = sadd.s32 %s3365, %s3366
        %s3368 = smul.addr %s3367, 8
        %s3369 = scalar_lea.vmem %s4, %s3368
      $region48: #{conv_block_forward.3} parent=43 // pred_fallthru
        _
    $region44: #{conv_block_forward.3} parent=5 // pred_fallthru
      _
  $region6: #{conv_block_forward.3} parent=0 // loop_footer
    %s14 = sadd.s32 1, %s10
  $region7: #{conv_block_forward.3} parent=0 // loop_footer_branch
    %9 = sbr.rel target = $region3
  $region8: #{conv_block_forward.3} parent=0 // loop_exit
    _

</llo_original>
